<compile_context>
chip_gen: v5e
topology: v5e:2x2
jax: 0.10.0
libtpu: 0.0.40
codegen_flags: <defaults>
</compile_context>

<pallas_src>
import jax
import jax.numpy as jnp
from jax.experimental import pallas as pl
from jax.experimental.pallas import tpu as pltpu


# ----------------------------------------------------------------------------
# Static model geometry (from the module + 16x16x12 input implied by fc1).
# ----------------------------------------------------------------------------
H_IN, W_IN, C_IN = 16, 16, 12
H1, W1 = 14, 14          # conv1 valid output
HP1, WP1 = 7, 7          # after 2x2 max-pool
H2, W2 = 5, 5            # conv2 valid output
HP2, WP2 = 2, 2          # after 2x2 max-pool (floor mode drops row/col 4)
C1, C2 = 64, 156
K1 = 9 * C_IN            # 108
K1_PAD = 128             # lane-dense K for the conv1 matmul (zero-padded)
K2 = 9 * C1              # 576
F1, F2 = 16, 2           # fc1 / fc2 output features
N_HW2 = HP2 * WP2        # 4 pooled spatial positions feeding fc1
K_FC1 = N_HW2 * C2       # 624 = fc1 in_features


# ----------------------------------------------------------------------------
# Fused kernel: conv1 + pool + conv2 + pool + fc1 + fc2 for one batch element.
# ----------------------------------------------------------------------------
def _cnn_s_fused_kernel(p1_ref, w1_ref, bn1_ref,
                        w2_ref, bn2_ref,
                        fc1w_ref, fc1b_ref, fc2w_ref, fc2b_ref,
                        out_ref, feat_ref):
    # ---- conv1 block: one im2col matmul (196,128)@(128,64) + bias + ReLU + BN ----
    a1 = jnp.dot(p1_ref[0], w1_ref[...],
                 preferred_element_type=jnp.float32)            # (196, 64) f32
    a1 = jnp.maximum(a1 + bn1_ref[0:1, :], 0.0)                 # bias + ReLU
    a1 = a1 * bn1_ref[1:2, :] + bn1_ref[2:3, :]                 # folded BatchNorm
    # 2x2 max-pool: rows are (y*14 + x) -> (7,2,7,2,64) -> max over the 2s.
    a1 = a1.reshape(HP1, 2, WP1, 2, C1)
    a1 = jnp.max(jnp.max(a1, axis=3), axis=1)                   # (7, 7, 64)
    a1 = a1.astype(jnp.bfloat16)

    # ---- conv2 block: in-VMEM im2col, single (25,576)@(576,156) matmul ----
    p2 = jnp.concatenate(
        [a1[dy:dy + H2, dx:dx + W2, :] for dy in range(3) for dx in range(3)],
        axis=-1)                                                # (5, 5, 576)
    p2 = p2.reshape(H2 * W2, K2)                                # (25, 576) bf16
    a2 = jnp.dot(p2, w2_ref[...],
                 preferred_element_type=jnp.float32)            # (25, 156) f32
    a2 = jnp.maximum(a2 + bn2_ref[0:1, :], 0.0)                 # bias + ReLU
    a2 = a2 * bn2_ref[1:2, :] + bn2_ref[2:3, :]                 # folded BatchNorm
    # 2x2 max-pool, floor mode: (5,5) -> use rows/cols 0..3 -> (2,2).
    a2 = a2.reshape(H2, W2, C2)[:2 * HP2, :2 * WP2, :]          # (4, 4, 156)
    a2 = a2.reshape(HP2, 2, WP2, 2, C2)
    a2 = jnp.max(jnp.max(a2, axis=3), axis=1)                   # (2, 2, 156)
    a2 = a2.reshape(N_HW2, C2)                                  # (4, 156) f32

    # ---- fc1: flatten the 4 pooled rows along the lane dim -> one matmul.
    # fc1 weights were pre-permuted (torch CHW row order -> our HWC order), so the
    # NCHW flatten of the PyTorch module is absorbed into the weight layout.
    v = jnp.concatenate([a2[i:i + 1, :] for i in range(N_HW2)],
                        axis=-1).astype(jnp.bfloat16)           # (1, 624) bf16
    feat = jnp.dot(v, fc1w_ref[...],
                   preferred_element_type=jnp.float32) + fc1b_ref[...]   # (1, 16)

    # ---- fc2 ----
    out = jnp.dot(feat, fc2w_ref[...],
                  preferred_element_type=jnp.float32) + fc2b_ref[...]    # (1, 2)

    out_ref[0] = out
    feat_ref[0] = feat
    # nn.Dropout2d(p=0.5) on the fc1 features is identity in inference mode.


# ----------------------------------------------------------------------------
# Wrapper: NCHW -> NHWC, conv1 im2col (lane-dense bf16), one fused pallas_call.
# ----------------------------------------------------------------------------
def cnn_s_forward(x_nchw, p):
    B = x_nchw.shape[0]
    x = jnp.transpose(x_nchw.astype(jnp.float32), (0, 2, 3, 1))         # (B,16,16,12)
    # im2col for the valid 3x3 conv1: tap order (dy, dx) outer, channel inner.
    patches = jnp.concatenate(
        [x[:, dy:dy + H1, dx:dx + W1, :] for dy in range(3) for dx in range(3)],
        axis=-1)                                                        # (B,14,14,108)
    patches = patches.reshape(B, H1 * W1, K1)
    patches = jnp.pad(patches, ((0, 0), (0, 0), (0, K1_PAD - K1)))
    patches = patches.astype(jnp.bfloat16)                              # (B,196,128)

    out3, feat3 = pl.pallas_call(
        _cnn_s_fused_kernel,
        out_shape=(jax.ShapeDtypeStruct((B, 1, F2), jnp.float32),
                   jax.ShapeDtypeStruct((B, 1, F1), jnp.float32)),
        grid=(B,),
        in_specs=[
            pl.BlockSpec((1, H1 * W1, K1_PAD), lambda b: (b, 0, 0)),    # conv1 patches
            pl.BlockSpec((K1_PAD, C1), lambda b: (0, 0)),               # w1
            pl.BlockSpec((3, C1), lambda b: (0, 0)),                    # bias|scale|shift 1
            pl.BlockSpec((K2, C2), lambda b: (0, 0)),                   # w2
            pl.BlockSpec((3, C2), lambda b: (0, 0)),                    # bias|scale|shift 2
            pl.BlockSpec((K_FC1, F1), lambda b: (0, 0)),                # fc1 w (hw*c, o)
            pl.BlockSpec((1, F1), lambda b: (0, 0)),                    # fc1 b
            pl.BlockSpec((F1, F2), lambda b: (0, 0)),                   # fc2 w
            pl.BlockSpec((1, F2), lambda b: (0, 0)),                    # fc2 b
        ],
        out_specs=(
            pl.BlockSpec((1, 1, F2), lambda b: (b, 0, 0)),
            pl.BlockSpec((1, 1, F1), lambda b: (b, 0, 0)),
        ),
        compiler_params=pltpu.CompilerParams(
            dimension_semantics=("parallel",)),
    )(patches, p["w1"], p["bn1"], p["w2"], p["bn2"],
      p["fc1w"], p["fc1b"], p["fc2w"], p["fc2b"])

    return out3[:, 0, :], feat3[:, 0, :]


# ----------------------------------------------------------------------------
# Parameter construction (deterministic, synthetic).
# ----------------------------------------------------------------------------
def _bn_fold(key, c, eps=1e-5):
    k1, k2, k3, k4 = jax.random.split(key, 4)
    gamma = 1.0 + 0.1 * jax.random.normal(k1, (c,), jnp.float32)
    beta = 0.1 * jax.random.normal(k2, (c,), jnp.float32)
    mean = 0.1 * jax.random.normal(k3, (c,), jnp.float32)
    var = 1.0 + 0.1 * jax.random.uniform(k4, (c,), jnp.float32)
    scale = gamma / jnp.sqrt(var + eps)
    shift = beta - mean * scale
    return scale, shift


def init_params(key):
    ks = jax.random.split(key, 9)
    p = {}

    def conv_w(k, cin, cout):
        # Synthetic weights generated directly in HWIO order; real torch weights
        # (cout, cin, 3, 3) would need .transpose(2, 3, 1, 0) before reshape.
        std = 1.0 / jnp.sqrt(9.0 * cin)
        return std * jax.random.normal(k, (3, 3, cin, cout), jnp.float32)

    def lin_w(k, din, dout):
        std = 1.0 / jnp.sqrt(float(din))
        return std * jax.random.normal(k, (din, dout), jnp.float32)

    # conv1: Conv2d(12 -> 64, k=3, valid); K zero-padded 108 -> 128 (lane-dense).
    w1 = conv_w(ks[0], C_IN, C1).reshape(K1, C1)
    p["w1"] = jnp.pad(w1, ((0, K1_PAD - K1), (0, 0))).astype(jnp.bfloat16)
    b1 = 0.01 * jax.random.normal(ks[1], (C1,), jnp.float32)
    s1, t1 = _bn_fold(ks[2], C1)
    p["bn1"] = jnp.stack([b1, s1, t1], axis=0)                   # (3, 64)

    # conv2: Conv2d(64 -> 156, k=3, valid)
    p["w2"] = conv_w(ks[3], C1, C2).reshape(K2, C2).astype(jnp.bfloat16)
    b2 = 0.01 * jax.random.normal(ks[4], (C2,), jnp.float32)
    s2, t2 = _bn_fold(ks[5], C2)
    p["bn2"] = jnp.stack([b2, s2, t2], axis=0)                   # (3, 156)

    # fc1: Linear(156*2*2 -> 16).  Torch flattens NCHW, i.e. input row order is
    # (c*4 + hw).  Pre-permute the rows to the kernel's (hw*156 + c) order so no
    # activation transpose is needed; exactly equivalent to torch view(B,-1)@W.T.
    fc1_t = lin_w(ks[6], C2 * N_HW2, F1)                         # rows in (c*4 + hw) order
    fc1_perm = jnp.transpose(fc1_t.reshape(C2, N_HW2, F1), (1, 0, 2)).reshape(K_FC1, F1)
    p["fc1w"] = fc1_perm.astype(jnp.bfloat16)                    # (624, 16)
    p["fc1b"] = (0.01 * jax.random.normal(ks[7], (F1,), jnp.float32)).reshape(1, F1)

    # fc2: Linear(16 -> 2)
    p["fc2w"] = lin_w(ks[8], F1, F2)
    p["fc2b"] = jnp.zeros((1, F2), jnp.float32)
    return p


if __name__ == "__main__":
    key = jax.random.PRNGKey(0)
    k_params, k_x = jax.random.split(key)
    params = init_params(k_params)

    # Input: B=2, 12 channels, 16x16 spatial (NCHW, as the PyTorch module expects).
    x = jax.random.normal(k_x, (2, C_IN, H_IN, W_IN), jnp.float32)

    out, feat = jax.jit(cnn_s_forward)(x, params)
    jax.block_until_ready((out, feat))

    assert out.shape == (2, F2) and out.dtype == jnp.float32
    assert feat.shape == (2, F1) and feat.dtype == jnp.float32
    assert bool(jnp.all(jnp.isfinite(out))) and bool(jnp.all(jnp.isfinite(feat)))
    print("KERNEL_OK")
</pallas_src>

<mosaic_0001>
module attributes {stable_mosaic.version = 11 : i64} {
  func.func @_cnn_s_fused_kernel(%arg0: i32, %arg1: memref<1x196x128xbf16, #tpu.memory_space<vmem>>, %arg2: memref<128x64xbf16, #tpu.memory_space<vmem>>, %arg3: memref<3x64xf32, #tpu.memory_space<vmem>>, %arg4: memref<576x156xbf16, #tpu.memory_space<vmem>>, %arg5: memref<3x156xf32, #tpu.memory_space<vmem>>, %arg6: memref<624x16xbf16, #tpu.memory_space<vmem>>, %arg7: memref<1x16xf32, #tpu.memory_space<vmem>>, %arg8: memref<16x2xf32, #tpu.memory_space<vmem>>, %arg9: memref<1x2xf32, #tpu.memory_space<vmem>>, %arg10: memref<1x1x2xf32, #tpu.memory_space<vmem>>, %arg11: memref<1x1x16xf32, #tpu.memory_space<vmem>>) attributes {dimension_semantics = [#tpu.dimension_semantics<parallel>], iteration_bounds = array<i64: 2>, scalar_prefetch = 0 : i64, scratch_operands = 0 : i64, tpu.core_type = #tpu.core_type<tc>, window_params = [{transform_indices = @transform_0, window_bounds = array<i64: 1, 196, 128>}, {pipeline_mode = #tpu.pipeline_mode<synchronous>, transform_indices = @transform_1, window_bounds = array<i64: 128, 64>}, {pipeline_mode = #tpu.pipeline_mode<synchronous>, transform_indices = @transform_2, window_bounds = array<i64: 3, 64>}, {pipeline_mode = #tpu.pipeline_mode<synchronous>, transform_indices = @transform_3, window_bounds = array<i64: 576, 156>}, {pipeline_mode = #tpu.pipeline_mode<synchronous>, transform_indices = @transform_4, window_bounds = array<i64: 3, 156>}, {pipeline_mode = #tpu.pipeline_mode<synchronous>, transform_indices = @transform_5, window_bounds = array<i64: 624, 16>}, {pipeline_mode = #tpu.pipeline_mode<synchronous>, transform_indices = @transform_6, window_bounds = array<i64: 1, 16>}, {pipeline_mode = #tpu.pipeline_mode<synchronous>, transform_indices = @transform_7, window_bounds = array<i64: 16, 2>}, {pipeline_mode = #tpu.pipeline_mode<synchronous>, transform_indices = @transform_8, window_bounds = array<i64: 1, 2>}, {transform_indices = @transform_9, window_bounds = array<i64: 1, 1, 2>}, {transform_indices = @transform_10, window_bounds = array<i64: 1, 1, 16>}]} {
    %c0 = arith.constant 0 : index
    %c0_0 = arith.constant 0 : index
    %c0_1 = arith.constant 0 : index
    %0 = vector.load %arg1[%c0, %c0_0, %c0_1] : memref<1x196x128xbf16, #tpu.memory_space<vmem>>, vector<1x196x128xbf16>
    %1 = vector.shape_cast %0 : vector<1x196x128xbf16> to vector<196x128xbf16>
    %c0_2 = arith.constant 0 : index
    %c0_3 = arith.constant 0 : index
    %2 = vector.load %arg2[%c0_2, %c0_3] : memref<128x64xbf16, #tpu.memory_space<vmem>>, vector<128x64xbf16>
    %cst = arith.constant dense<0.000000e+00> : vector<196x64xf32>
    %3 = tpu.matmul %1, %2, %cst {dimension_numbers = #tpu.dot_dimension_numbers<[1], [0], [0], [1], [0, 0, 1, 1], [], []>} : vector<196x128xbf16>, vector<128x64xbf16>, vector<196x64xf32> -> vector<196x64xf32>
    %c0_4 = arith.constant 0 : index
    %c0_5 = arith.constant 0 : index
    %4 = vector.load %arg3[%c0_4, %c0_5] : memref<3x64xf32, #tpu.memory_space<vmem>>, vector<1x64xf32>
    %5 = vector.broadcast %4 : vector<1x64xf32> to vector<196x64xf32>
    %6 = arith.addf %3, %5 : vector<196x64xf32>
    %cst_6 = arith.constant 0.000000e+00 : f32
    %7 = vector.broadcast %cst_6 : f32 to vector<196x64xf32>
    %8 = arith.maximumf %6, %7 : vector<196x64xf32>
    %c1 = arith.constant 1 : index
    %c0_7 = arith.constant 0 : index
    %9 = vector.load %arg3[%c1, %c0_7] : memref<3x64xf32, #tpu.memory_space<vmem>>, vector<1x64xf32>
    %10 = vector.broadcast %9 : vector<1x64xf32> to vector<196x64xf32>
    %11 = arith.mulf %8, %10 : vector<196x64xf32>
    %c2 = arith.constant 2 : index
    %c0_8 = arith.constant 0 : index
    %12 = vector.load %arg3[%c2, %c0_8] : memref<3x64xf32, #tpu.memory_space<vmem>>, vector<1x64xf32>
    %13 = vector.broadcast %12 : vector<1x64xf32> to vector<196x64xf32>
    %14 = arith.addf %11, %13 : vector<196x64xf32>
    %15 = vector.shape_cast %14 : vector<196x64xf32> to vector<7x2x7x2x64xf32>
    %cst_9 = arith.constant dense<0xFF800000> : vector<7x2x7x64xf32>
    %16 = vector.multi_reduction <maximumf>, %15, %cst_9 [3] : vector<7x2x7x2x64xf32> to vector<7x2x7x64xf32>
    %cst_10 = arith.constant dense<0xFF800000> : vector<7x7x64xf32>
    %17 = vector.multi_reduction <maximumf>, %16, %cst_10 [1] : vector<7x2x7x64xf32> to vector<7x7x64xf32>
    %18 = arith.truncf %17 : vector<7x7x64xf32> to vector<7x7x64xbf16>
    %19 = vector.extract_strided_slice %18 {offsets = [0, 0, 0], sizes = [5, 5, 64], strides = [1, 1, 1]} : vector<7x7x64xbf16> to vector<5x5x64xbf16>
    %20 = vector.extract_strided_slice %18 {offsets = [0, 1, 0], sizes = [5, 5, 64], strides = [1, 1, 1]} : vector<7x7x64xbf16> to vector<5x5x64xbf16>
    %21 = vector.extract_strided_slice %18 {offsets = [0, 2, 0], sizes = [5, 5, 64], strides = [1, 1, 1]} : vector<7x7x64xbf16> to vector<5x5x64xbf16>
    %22 = vector.extract_strided_slice %18 {offsets = [1, 0, 0], sizes = [5, 5, 64], strides = [1, 1, 1]} : vector<7x7x64xbf16> to vector<5x5x64xbf16>
    %23 = vector.extract_strided_slice %18 {offsets = [1, 1, 0], sizes = [5, 5, 64], strides = [1, 1, 1]} : vector<7x7x64xbf16> to vector<5x5x64xbf16>
    %24 = vector.extract_strided_slice %18 {offsets = [1, 2, 0], sizes = [5, 5, 64], strides = [1, 1, 1]} : vector<7x7x64xbf16> to vector<5x5x64xbf16>
    %25 = vector.extract_strided_slice %18 {offsets = [2, 0, 0], sizes = [5, 5, 64], strides = [1, 1, 1]} : vector<7x7x64xbf16> to vector<5x5x64xbf16>
    %26 = vector.extract_strided_slice %18 {offsets = [2, 1, 0], sizes = [5, 5, 64], strides = [1, 1, 1]} : vector<7x7x64xbf16> to vector<5x5x64xbf16>
    %27 = vector.extract_strided_slice %18 {offsets = [2, 2, 0], sizes = [5, 5, 64], strides = [1, 1, 1]} : vector<7x7x64xbf16> to vector<5x5x64xbf16>
    %28 = tpu.concatenate %19, %20, %21, %22, %23, %24, %25, %26, %27 in 2 : vector<5x5x64xbf16>, vector<5x5x64xbf16>, vector<5x5x64xbf16>, vector<5x5x64xbf16>, vector<5x5x64xbf16>, vector<5x5x64xbf16>, vector<5x5x64xbf16>, vector<5x5x64xbf16>, vector<5x5x64xbf16> -> vector<5x5x576xbf16>
    %29 = vector.shape_cast %28 : vector<5x5x576xbf16> to vector<25x576xbf16>
    %c0_11 = arith.constant 0 : index
    %c0_12 = arith.constant 0 : index
    %30 = vector.load %arg4[%c0_11, %c0_12] : memref<576x156xbf16, #tpu.memory_space<vmem>>, vector<576x156xbf16>
    %cst_13 = arith.constant dense<0.000000e+00> : vector<25x156xf32>
    %31 = tpu.matmul %29, %30, %cst_13 {dimension_numbers = #tpu.dot_dimension_numbers<[1], [0], [0], [1], [0, 0, 1, 1], [], []>} : vector<25x576xbf16>, vector<576x156xbf16>, vector<25x156xf32> -> vector<25x156xf32>
    %c0_14 = arith.constant 0 : index
    %c0_15 = arith.constant 0 : index
    %32 = vector.load %arg5[%c0_14, %c0_15] : memref<3x156xf32, #tpu.memory_space<vmem>>, vector<1x156xf32>
    %33 = vector.broadcast %32 : vector<1x156xf32> to vector<25x156xf32>
    %34 = arith.addf %31, %33 : vector<25x156xf32>
    %cst_16 = arith.constant 0.000000e+00 : f32
    %35 = vector.broadcast %cst_16 : f32 to vector<25x156xf32>
    %36 = arith.maximumf %34, %35 : vector<25x156xf32>
    %c1_17 = arith.constant 1 : index
    %c0_18 = arith.constant 0 : index
    %37 = vector.load %arg5[%c1_17, %c0_18] : memref<3x156xf32, #tpu.memory_space<vmem>>, vector<1x156xf32>
    %38 = vector.broadcast %37 : vector<1x156xf32> to vector<25x156xf32>
    %39 = arith.mulf %36, %38 : vector<25x156xf32>
    %c2_19 = arith.constant 2 : index
    %c0_20 = arith.constant 0 : index
    %40 = vector.load %arg5[%c2_19, %c0_20] : memref<3x156xf32, #tpu.memory_space<vmem>>, vector<1x156xf32>
    %41 = vector.broadcast %40 : vector<1x156xf32> to vector<25x156xf32>
    %42 = arith.addf %39, %41 : vector<25x156xf32>
    %43 = vector.shape_cast %42 : vector<25x156xf32> to vector<5x5x156xf32>
    %44 = vector.extract_strided_slice %43 {offsets = [0, 0, 0], sizes = [4, 4, 156], strides = [1, 1, 1]} : vector<5x5x156xf32> to vector<4x4x156xf32>
    %45 = vector.shape_cast %44 : vector<4x4x156xf32> to vector<2x2x2x2x156xf32>
    %cst_21 = arith.constant dense<0xFF800000> : vector<2x2x2x156xf32>
    %46 = vector.multi_reduction <maximumf>, %45, %cst_21 [3] : vector<2x2x2x2x156xf32> to vector<2x2x2x156xf32>
    %cst_22 = arith.constant dense<0xFF800000> : vector<2x2x156xf32>
    %47 = vector.multi_reduction <maximumf>, %46, %cst_22 [1] : vector<2x2x2x156xf32> to vector<2x2x156xf32>
    %48 = vector.shape_cast %47 : vector<2x2x156xf32> to vector<4x156xf32>
    %49 = vector.extract_strided_slice %48 {offsets = [0, 0], sizes = [1, 156], strides = [1, 1]} : vector<4x156xf32> to vector<1x156xf32>
    %50 = vector.extract_strided_slice %48 {offsets = [1, 0], sizes = [1, 156], strides = [1, 1]} : vector<4x156xf32> to vector<1x156xf32>
    %51 = vector.extract_strided_slice %48 {offsets = [2, 0], sizes = [1, 156], strides = [1, 1]} : vector<4x156xf32> to vector<1x156xf32>
    %52 = vector.extract_strided_slice %48 {offsets = [3, 0], sizes = [1, 156], strides = [1, 1]} : vector<4x156xf32> to vector<1x156xf32>
    %53 = tpu.concatenate %49, %50, %51, %52 in 1 : vector<1x156xf32>, vector<1x156xf32>, vector<1x156xf32>, vector<1x156xf32> -> vector<1x624xf32>
    %54 = arith.truncf %53 : vector<1x624xf32> to vector<1x624xbf16>
    %c0_23 = arith.constant 0 : index
    %c0_24 = arith.constant 0 : index
    %55 = vector.load %arg6[%c0_23, %c0_24] : memref<624x16xbf16, #tpu.memory_space<vmem>>, vector<624x16xbf16>
    %cst_25 = arith.constant dense<0.000000e+00> : vector<1x16xf32>
    %56 = tpu.matmul %54, %55, %cst_25 {dimension_numbers = #tpu.dot_dimension_numbers<[1], [0], [0], [1], [0, 0, 1, 1], [], []>} : vector<1x624xbf16>, vector<624x16xbf16>, vector<1x16xf32> -> vector<1x16xf32>
    %c0_26 = arith.constant 0 : index
    %c0_27 = arith.constant 0 : index
    %57 = vector.load %arg7[%c0_26, %c0_27] : memref<1x16xf32, #tpu.memory_space<vmem>>, vector<1x16xf32>
    %58 = arith.addf %56, %57 : vector<1x16xf32>
    %c0_28 = arith.constant 0 : index
    %c0_29 = arith.constant 0 : index
    %59 = vector.load %arg8[%c0_28, %c0_29] : memref<16x2xf32, #tpu.memory_space<vmem>>, vector<16x2xf32>
    %cst_30 = arith.constant dense<0.000000e+00> : vector<1x2xf32>
    %60 = tpu.matmul %58, %59, %cst_30 {dimension_numbers = #tpu.dot_dimension_numbers<[1], [0], [0], [1], [0, 0, 1, 1], [], []>} : vector<1x16xf32>, vector<16x2xf32>, vector<1x2xf32> -> vector<1x2xf32>
    %c0_31 = arith.constant 0 : index
    %c0_32 = arith.constant 0 : index
    %61 = vector.load %arg9[%c0_31, %c0_32] : memref<1x2xf32, #tpu.memory_space<vmem>>, vector<1x2xf32>
    %62 = arith.addf %60, %61 : vector<1x2xf32>
    %c0_33 = arith.constant 0 : index
    %c0_34 = arith.constant 0 : index
    %c0_35 = arith.constant 0 : index
    %63 = vector.load %arg10[%c0_33, %c0_34, %c0_35] : memref<1x1x2xf32, #tpu.memory_space<vmem>>, vector<1x1x2xf32>
    %64 = vector.shape_cast %63 : vector<1x1x2xf32> to vector<1x2xf32>
    %65 = vector.shape_cast %62 : vector<1x2xf32> to vector<1x1x2xf32>
    tpu.vector_store %arg10[%c0_33, %c0_34, %c0_35], %65 {strides = array<i32>} : memref<1x1x2xf32, #tpu.memory_space<vmem>>, vector<1x1x2xf32>,
    %c0_36 = arith.constant 0 : index
    %c0_37 = arith.constant 0 : index
    %c0_38 = arith.constant 0 : index
    %66 = vector.load %arg11[%c0_36, %c0_37, %c0_38] : memref<1x1x16xf32, #tpu.memory_space<vmem>>, vector<1x1x16xf32>
    %67 = vector.shape_cast %66 : vector<1x1x16xf32> to vector<1x16xf32>
    %68 = vector.shape_cast %58 : vector<1x16xf32> to vector<1x1x16xf32>
    tpu.vector_store %arg11[%c0_36, %c0_37, %c0_38], %68 {strides = array<i32>} : memref<1x1x16xf32, #tpu.memory_space<vmem>>, vector<1x1x16xf32>,
    return
  }
  func.func @transform_0(%arg0: i32) -> (i32, i32, i32) {
    %c0_i32 = arith.constant 0 : i32
    %c0_i32_0 = arith.constant 0 : i32
    %c0_i32_1 = arith.constant 0 : i32
    return %arg0, %c0_i32, %c0_i32_0 : i32, i32, i32
  }
  func.func @transform_1(%arg0: i32) -> (i32, i32) {
    %c0_i32 = arith.constant 0 : i32
    %c0_i32_0 = arith.constant 0 : i32
    %c0_i32_1 = arith.constant 0 : i32
    return %c0_i32, %c0_i32_0 : i32, i32
  }
  func.func @transform_2(%arg0: i32) -> (i32, i32) {
    %c0_i32 = arith.constant 0 : i32
    %c0_i32_0 = arith.constant 0 : i32
    %c0_i32_1 = arith.constant 0 : i32
    return %c0_i32, %c0_i32_0 : i32, i32
  }
  func.func @transform_3(%arg0: i32) -> (i32, i32) {
    %c0_i32 = arith.constant 0 : i32
    %c0_i32_0 = arith.constant 0 : i32
    %c0_i32_1 = arith.constant 0 : i32
    return %c0_i32, %c0_i32_0 : i32, i32
  }
  func.func @transform_4(%arg0: i32) -> (i32, i32) {
    %c0_i32 = arith.constant 0 : i32
    %c0_i32_0 = arith.constant 0 : i32
    %c0_i32_1 = arith.constant 0 : i32
    return %c0_i32, %c0_i32_0 : i32, i32
  }
  func.func @transform_5(%arg0: i32) -> (i32, i32) {
    %c0_i32 = arith.constant 0 : i32
    %c0_i32_0 = arith.constant 0 : i32
    %c0_i32_1 = arith.constant 0 : i32
    return %c0_i32, %c0_i32_0 : i32, i32
  }
  func.func @transform_6(%arg0: i32) -> (i32, i32) {
    %c0_i32 = arith.constant 0 : i32
    %c0_i32_0 = arith.constant 0 : i32
    %c0_i32_1 = arith.constant 0 : i32
    return %c0_i32, %c0_i32_0 : i32, i32
  }
  func.func @transform_7(%arg0: i32) -> (i32, i32) {
    %c0_i32 = arith.constant 0 : i32
    %c0_i32_0 = arith.constant 0 : i32
    %c0_i32_1 = arith.constant 0 : i32
    return %c0_i32, %c0_i32_0 : i32, i32
  }
  func.func @transform_8(%arg0: i32) -> (i32, i32) {
    %c0_i32 = arith.constant 0 : i32
    %c0_i32_0 = arith.constant 0 : i32
    %c0_i32_1 = arith.constant 0 : i32
    return %c0_i32, %c0_i32_0 : i32, i32
  }
  func.func @transform_9(%arg0: i32) -> (i32, i32, i32) {
    %c0_i32 = arith.constant 0 : i32
    %c0_i32_0 = arith.constant 0 : i32
    %c0_i32_1 = arith.constant 0 : i32
    return %arg0, %c0_i32, %c0_i32_0 : i32, i32, i32
  }
  func.func @transform_10(%arg0: i32) -> (i32, i32, i32) {
    %c0_i32 = arith.constant 0 : i32
    %c0_i32_0 = arith.constant 0 : i32
    %c0_i32_1 = arith.constant 0 : i32
    return %arg0, %c0_i32, %c0_i32_0 : i32, i32, i32
  }
}

</mosaic_0001>

<llo_original>
// kernel: cnn_s_forward.1
$region0: #{cnn_s_forward.1}
  #allocation0 [shape = 'u32[]', space=smem, size = 0x4, offset = 0x4, fixed_abs, tag = 'smem constant byte address 0x4 - core index']
  #allocation1 [shape = 'u32[72,128]{1,0:T(1,128)}', space=vmem, size = 0x9000, scoped, tag = 'internal scratch']
  %s0 = inlined_call_operand.vmem [shape: bf16[2,196,128], index: 0, kind: input, shape index: {}]
  %s1 = inlined_call_operand.vmem [shape: bf16[128,64], index: 1, kind: input, shape index: {}]
  %s2 = inlined_call_operand.vmem [shape: f32[3,64], index: 2, kind: input, shape index: {}]
  %s3 = inlined_call_operand.vmem [shape: bf16[576,156], index: 3, kind: input, shape index: {}]
  %s4 = inlined_call_operand.vmem [shape: f32[3,156], index: 4, kind: input, shape index: {}]
  %s5 = inlined_call_operand.vmem [shape: bf16[624,16], index: 5, kind: input, shape index: {}]
  %s6 = inlined_call_operand.vmem [shape: f32[1,16], index: 6, kind: input, shape index: {}]
  %s7 = inlined_call_operand.vmem [shape: f32[16,2], index: 7, kind: input, shape index: {}]
  %s8 = inlined_call_operand.vmem [shape: f32[1,2], index: 8, kind: input, shape index: {}]
  %s9 = inlined_call_operand.hbm [shape: f32[2,1,2], index: 9, kind: output, shape index: {0}]
  %s10 = inlined_call_operand.hbm [shape: f32[2,1,16], index: 10, kind: output, shape index: {1}]
  %11 = xla_tuple %s9, %s10
  %s12 = sld [smem:[#allocation0]]
  $region77: #{cnn_s_forward.1} parent=0
    _
  %s14 = ssub.s32 1, %s12
  %s15 = scalar_select 0, %s14, %s12
  $region1: #{cnn_s_forward.1} parent=0
    #allocation2 [shape = 'u8[1024]{0}', space=vmem, size = 0x400, scoped, tag = 'output window, operand 0']
    #allocation3 [shape = 's32[2]{0}', space=sflag, size = 0x8, scoped, tag = 'scoped memory for cnn_s_forward.1']
    #allocation4 [shape = 'u8[1024]{0}', space=vmem, size = 0x400, scoped, tag = 'output window, operand 1']
    #allocation5 [shape = 's32[2]{0}', space=sflag, size = 0x8, scoped, tag = 'scoped memory for cnn_s_forward.1']
    %16 = vsyncpa [#allocation3], 0
    %s17 = scalar_lea.sflag [#allocation3], 1
    %18 = vsyncpa %s17, 0
    %19 = vsyncpa [#allocation5], 0
    %s20 = scalar_lea.sflag [#allocation5], 1
    %21 = vsyncpa %s20, 0
    loop: start=0, step=1, limit=4
    $region2: #{cnn_s_forward.1} parent=1 // loop_pre_header
      _
    $region3: #{cnn_s_forward.1} parent=1 // loop_header
      %s23 = sphi 0, %s27
      %p24 = scmp.ge.s32.totalorder %s23, 4
      %s33 = sphi 0, %s35
      %s36 = sphi 0, %s33
      %s37 = sphi 0, %s36
      %s53 = sphi 0, %s37
      %s57 = sphi 0, %s57
      %s59 = sphi 0, %s57
      %s60 = sphi 0, %s59
      %s74 = sphi 0, %s60
      %s78 = sphi 0, %s78
      %s80 = sphi 0, %s78
      %s81 = sphi 0, %s80
      %s95 = sphi 0, %s81
      %s99 = sphi 0, %s99
      %s101 = sphi 0, %s99
      %s102 = sphi 0, %s101
      %s116 = sphi 0, %s102
      %s120 = sphi 0, %s120
      %s122 = sphi 0, %s120
      %s123 = sphi 0, %s122
      %s137 = sphi 0, %s123
      %s141 = sphi 0, %s141
      %s143 = sphi 0, %s141
      %s144 = sphi 0, %s143
      %s158 = sphi 0, %s144
      %s162 = sphi 0, %s162
      %s164 = sphi 0, %s162
      %s165 = sphi 0, %s164
      %s179 = sphi 0, %s165
      %s183 = sphi 0, %s183
      %s185 = sphi 0, %s183
      %s186 = sphi 0, %s185
      %s200 = sphi 0, %s186
      %s204 = sphi 0, %s204
      %s206 = sphi 0, %s204
      %s207 = sphi 0, %s206
      %s221 = sphi 0, %s207
      %s227 = sphi 0, %s229
      %s230 = sphi 0, %s227
      %s231 = sphi 0, %s230
      %s247 = sphi 0, %s231
      %s253 = sphi 0, %s255
      %s256 = sphi 0, %s253
      %s257 = sphi 0, %s256
      %s273 = sphi 0, %s257
    $region4: #{cnn_s_forward.1} parent=1 // loop_header_branch
      %26 = sbr.rel (%p24) target = $region8
    $region5: #{cnn_s_forward.1} parent=1 // loop_body
      %s28 = ssub.s32 %s23, 1
      %s29 = ssub.s32 %s23, 2
      %s30 = sadd.s32 %s23, 1
      %s31 = ssub.s32 %s23, %s30
      %p32 = scmp.eq.s32.totalorder %s31, 0
      %s34 = sadd.s32 %s33, 1
      %s35 = scalar_select %p32, %s33, %s34
      %p38 = pneg %p32
      %p39 = scmp.eq.s32.totalorder %s23, 1
      %p40 = por %p38, %p39
      %p41 = scmp.ne.s32.totalorder %s33, %s36
      %p42 = scmp.eq.s32.totalorder %s23, 0
      %p43 = por %p41, %p42
      %p44 = scmp.ne.s32.totalorder %s33, %s36
      %p45 = scmp.eq.s32.totalorder %s28, 1
      %p46 = por %p44, %p45
      %p47 = scmp.ne.s32.totalorder %s36, %s37
      %p48 = scmp.eq.s32.totalorder %s28, 0
      %p49 = por %p47, %p48
      %p50 = scmp.ne.s32.totalorder %s36, %s37
      %p51 = scmp.eq.s32.totalorder %s29, 1
      %p52 = por %p50, %p51
      %p54 = scmp.ne.s32.totalorder %s37, %s53
      %p55 = scmp.eq.s32.totalorder %s29, 0
      %p56 = por %p54, %p55
      %s58 = sadd.s32 %s57, 1
      %p61 = scmp.eq.s32.totalorder %s23, 1
      %p62 = scmp.ne.s32.totalorder %s57, %s59
      %p63 = scmp.eq.s32.totalorder %s23, 0
      %p64 = por %p62, %p63
      %p65 = scmp.ne.s32.totalorder %s57, %s59
      %p66 = scmp.eq.s32.totalorder %s28, 1
      %p67 = por %p65, %p66
      %p68 = scmp.ne.s32.totalorder %s59, %s60
      %p69 = scmp.eq.s32.totalorder %s28, 0
      %p70 = por %p68, %p69
      %p71 = scmp.ne.s32.totalorder %s59, %s60
      %p72 = scmp.eq.s32.totalorder %s29, 1
      %p73 = por %p71, %p72
      %p75 = scmp.ne.s32.totalorder %s60, %s74
      %p76 = scmp.eq.s32.totalorder %s29, 0
      %p77 = por %p75, %p76
      %s79 = sadd.s32 %s78, 1
      %p82 = scmp.eq.s32.totalorder %s23, 1
      %p83 = scmp.ne.s32.totalorder %s78, %s80
      %p84 = scmp.eq.s32.totalorder %s23, 0
      %p85 = por %p83, %p84
      %p86 = scmp.ne.s32.totalorder %s78, %s80
      %p87 = scmp.eq.s32.totalorder %s28, 1
      %p88 = por %p86, %p87
      %p89 = scmp.ne.s32.totalorder %s80, %s81
      %p90 = scmp.eq.s32.totalorder %s28, 0
      %p91 = por %p89, %p90
      %p92 = scmp.ne.s32.totalorder %s80, %s81
      %p93 = scmp.eq.s32.totalorder %s29, 1
      %p94 = por %p92, %p93
      %p96 = scmp.ne.s32.totalorder %s81, %s95
      %p97 = scmp.eq.s32.totalorder %s29, 0
      %p98 = por %p96, %p97
      %s100 = sadd.s32 %s99, 1
      %p103 = scmp.eq.s32.totalorder %s23, 1
      %p104 = scmp.ne.s32.totalorder %s99, %s101
      %p105 = scmp.eq.s32.totalorder %s23, 0
      %p106 = por %p104, %p105
      %p107 = scmp.ne.s32.totalorder %s99, %s101
      %p108 = scmp.eq.s32.totalorder %s28, 1
      %p109 = por %p107, %p108
      %p110 = scmp.ne.s32.totalorder %s101, %s102
      %p111 = scmp.eq.s32.totalorder %s28, 0
      %p112 = por %p110, %p111
      %p113 = scmp.ne.s32.totalorder %s101, %s102
      %p114 = scmp.eq.s32.totalorder %s29, 1
      %p115 = por %p113, %p114
      %p117 = scmp.ne.s32.totalorder %s102, %s116
      %p118 = scmp.eq.s32.totalorder %s29, 0
      %p119 = por %p117, %p118
      %s121 = sadd.s32 %s120, 1
      %p124 = scmp.eq.s32.totalorder %s23, 1
      %p125 = scmp.ne.s32.totalorder %s120, %s122
      %p126 = scmp.eq.s32.totalorder %s23, 0
      %p127 = por %p125, %p126
      %p128 = scmp.ne.s32.totalorder %s120, %s122
      %p129 = scmp.eq.s32.totalorder %s28, 1
      %p130 = por %p128, %p129
      %p131 = scmp.ne.s32.totalorder %s122, %s123
      %p132 = scmp.eq.s32.totalorder %s28, 0
      %p133 = por %p131, %p132
      %p134 = scmp.ne.s32.totalorder %s122, %s123
      %p135 = scmp.eq.s32.totalorder %s29, 1
      %p136 = por %p134, %p135
      %p138 = scmp.ne.s32.totalorder %s123, %s137
      %p139 = scmp.eq.s32.totalorder %s29, 0
      %p140 = por %p138, %p139
      %s142 = sadd.s32 %s141, 1
      %p145 = scmp.eq.s32.totalorder %s23, 1
      %p146 = scmp.ne.s32.totalorder %s141, %s143
      %p147 = scmp.eq.s32.totalorder %s23, 0
      %p148 = por %p146, %p147
      %p149 = scmp.ne.s32.totalorder %s141, %s143
      %p150 = scmp.eq.s32.totalorder %s28, 1
      %p151 = por %p149, %p150
      %p152 = scmp.ne.s32.totalorder %s143, %s144
      %p153 = scmp.eq.s32.totalorder %s28, 0
      %p154 = por %p152, %p153
      %p155 = scmp.ne.s32.totalorder %s143, %s144
      %p156 = scmp.eq.s32.totalorder %s29, 1
      %p157 = por %p155, %p156
      %p159 = scmp.ne.s32.totalorder %s144, %s158
      %p160 = scmp.eq.s32.totalorder %s29, 0
      %p161 = por %p159, %p160
      %s163 = sadd.s32 %s162, 1
      %p166 = scmp.eq.s32.totalorder %s23, 1
      %p167 = scmp.ne.s32.totalorder %s162, %s164
      %p168 = scmp.eq.s32.totalorder %s23, 0
      %p169 = por %p167, %p168
      %p170 = scmp.ne.s32.totalorder %s162, %s164
      %p171 = scmp.eq.s32.totalorder %s28, 1
      %p172 = por %p170, %p171
      %p173 = scmp.ne.s32.totalorder %s164, %s165
      %p174 = scmp.eq.s32.totalorder %s28, 0
      %p175 = por %p173, %p174
      %p176 = scmp.ne.s32.totalorder %s164, %s165
      %p177 = scmp.eq.s32.totalorder %s29, 1
      %p178 = por %p176, %p177
      %p180 = scmp.ne.s32.totalorder %s165, %s179
      %p181 = scmp.eq.s32.totalorder %s29, 0
      %p182 = por %p180, %p181
      %s184 = sadd.s32 %s183, 1
      %p187 = scmp.eq.s32.totalorder %s23, 1
      %p188 = scmp.ne.s32.totalorder %s183, %s185
      %p189 = scmp.eq.s32.totalorder %s23, 0
      %p190 = por %p188, %p189
      %p191 = scmp.ne.s32.totalorder %s183, %s185
      %p192 = scmp.eq.s32.totalorder %s28, 1
      %p193 = por %p191, %p192
      %p194 = scmp.ne.s32.totalorder %s185, %s186
      %p195 = scmp.eq.s32.totalorder %s28, 0
      %p196 = por %p194, %p195
      %p197 = scmp.ne.s32.totalorder %s185, %s186
      %p198 = scmp.eq.s32.totalorder %s29, 1
      %p199 = por %p197, %p198
      %p201 = scmp.ne.s32.totalorder %s186, %s200
      %p202 = scmp.eq.s32.totalorder %s29, 0
      %p203 = por %p201, %p202
      %s205 = sadd.s32 %s204, 1
      %p208 = scmp.eq.s32.totalorder %s23, 1
      %p209 = scmp.ne.s32.totalorder %s204, %s206
      %p210 = scmp.eq.s32.totalorder %s23, 0
      %p211 = por %p209, %p210
      %p212 = scmp.ne.s32.totalorder %s204, %s206
      %p213 = scmp.eq.s32.totalorder %s28, 1
      %p214 = por %p212, %p213
      %p215 = scmp.ne.s32.totalorder %s206, %s207
      %p216 = scmp.eq.s32.totalorder %s28, 0
      %p217 = por %p215, %p216
      %p218 = scmp.ne.s32.totalorder %s206, %s207
      %p219 = scmp.eq.s32.totalorder %s29, 1
      %p220 = por %p218, %p219
      %p222 = scmp.ne.s32.totalorder %s207, %s221
      %p223 = scmp.eq.s32.totalorder %s29, 0
      %p224 = por %p222, %p223
      %s225 = ssub.s32 %s23, %s30
      %p226 = scmp.eq.s32.totalorder %s225, 0
      %s228 = sadd.s32 %s227, 1
      %s229 = scalar_select %p226, %s227, %s228
      %p232 = pneg %p226
      %p233 = scmp.eq.s32.totalorder %s23, 1
      %p234 = por %p232, %p233
      %p235 = scmp.ne.s32.totalorder %s227, %s230
      %p236 = scmp.eq.s32.totalorder %s23, 0
      %p237 = por %p235, %p236
      %p238 = scmp.ne.s32.totalorder %s227, %s230
      %p239 = scmp.eq.s32.totalorder %s28, 1
      %p240 = por %p238, %p239
      %p241 = scmp.ne.s32.totalorder %s230, %s231
      %p242 = scmp.eq.s32.totalorder %s28, 0
      %p243 = por %p241, %p242
      %p244 = scmp.ne.s32.totalorder %s230, %s231
      %p245 = scmp.eq.s32.totalorder %s29, 1
      %p246 = por %p244, %p245
      %p248 = scmp.ne.s32.totalorder %s231, %s247
      %p249 = scmp.eq.s32.totalorder %s29, 0
      %p250 = por %p248, %p249
      %s251 = ssub.s32 %s23, %s30
      %p252 = scmp.eq.s32.totalorder %s251, 0
      %s254 = sadd.s32 %s253, 1
      %s255 = scalar_select %p252, %s253, %s254
      %p258 = pneg %p252
      %p259 = scmp.eq.s32.totalorder %s23, 1
      %p260 = por %p258, %p259
      %p261 = scmp.ne.s32.totalorder %s253, %s256
      %p262 = scmp.eq.s32.totalorder %s23, 0
      %p263 = por %p261, %p262
      %p264 = scmp.ne.s32.totalorder %s253, %s256
      %p265 = scmp.eq.s32.totalorder %s28, 1
      %p266 = por %p264, %p265
      %p267 = scmp.ne.s32.totalorder %s256, %s257
      %p268 = scmp.eq.s32.totalorder %s28, 0
      %p269 = por %p267, %p268
      %p270 = scmp.ne.s32.totalorder %s256, %s257
      %p271 = scmp.eq.s32.totalorder %s29, 1
      %p272 = por %p270, %p271
      %p274 = scmp.ne.s32.totalorder %s257, %s273
      %p275 = scmp.eq.s32.totalorder %s29, 0
      %p276 = por %p274, %p275
      %p277 = scmp.le.s32.totalorder 1, %s23
      %p278 = scmp.lt.s32.totalorder %s23, 3
      %p279 = pnand %p277, %p278
      %p280 = pneg %p279
      // Predicated region
      $region9: #{cnn_s_forward.1} parent=5 // pred_check
        _
      $region10: #{cnn_s_forward.1} parent=5 // pred_check_branch
        %282 = sbr.rel (%p279) target = $region12
      $region11: #{cnn_s_forward.1} parent=5 // pred_region
        %s283 = ssub.s32 %s23, 1
        // Predicated region
        $region13: #{cnn_s_forward.1} parent=11 // pred_check
          %p284 = pneg %p70
        $region14: #{cnn_s_forward.1} parent=11 // pred_check_branch
          %286 = sbr.rel (%p284) target = $region16
        $region15: #{cnn_s_forward.1} parent=11 // pred_region
          _
        $region16: #{cnn_s_forward.1} parent=11 // pred_fallthru
          _
        // Predicated region
        $region17: #{cnn_s_forward.1} parent=11 // pred_check
          %p287 = pneg %p91
        $region18: #{cnn_s_forward.1} parent=11 // pred_check_branch
          %289 = sbr.rel (%p287) target = $region20
        $region19: #{cnn_s_forward.1} parent=11 // pred_region
          _
        $region20: #{cnn_s_forward.1} parent=11 // pred_fallthru
          _
        // Predicated region
        $region21: #{cnn_s_forward.1} parent=11 // pred_check
          %p290 = pneg %p112
        $region22: #{cnn_s_forward.1} parent=11 // pred_check_branch
          %292 = sbr.rel (%p290) target = $region24
        $region23: #{cnn_s_forward.1} parent=11 // pred_region
          _
        $region24: #{cnn_s_forward.1} parent=11 // pred_fallthru
          _
        // Predicated region
        $region25: #{cnn_s_forward.1} parent=11 // pred_check
          %p293 = pneg %p133
        $region26: #{cnn_s_forward.1} parent=11 // pred_check_branch
          %295 = sbr.rel (%p293) target = $region28
        $region27: #{cnn_s_forward.1} parent=11 // pred_region
          _
        $region28: #{cnn_s_forward.1} parent=11 // pred_fallthru
          _
        // Predicated region
        $region29: #{cnn_s_forward.1} parent=11 // pred_check
          %p296 = pneg %p154
        $region30: #{cnn_s_forward.1} parent=11 // pred_check_branch
          %298 = sbr.rel (%p296) target = $region32
        $region31: #{cnn_s_forward.1} parent=11 // pred_region
          _
        $region32: #{cnn_s_forward.1} parent=11 // pred_fallthru
          _
        // Predicated region
        $region33: #{cnn_s_forward.1} parent=11 // pred_check
          %p299 = pneg %p175
        $region34: #{cnn_s_forward.1} parent=11 // pred_check_branch
          %301 = sbr.rel (%p299) target = $region36
        $region35: #{cnn_s_forward.1} parent=11 // pred_region
          _
        $region36: #{cnn_s_forward.1} parent=11 // pred_fallthru
          _
        // Predicated region
        $region37: #{cnn_s_forward.1} parent=11 // pred_check
          %p302 = pneg %p196
        $region38: #{cnn_s_forward.1} parent=11 // pred_check_branch
          %304 = sbr.rel (%p302) target = $region40
        $region39: #{cnn_s_forward.1} parent=11 // pred_region
          _
        $region40: #{cnn_s_forward.1} parent=11 // pred_fallthru
          _
        // Predicated region
        $region41: #{cnn_s_forward.1} parent=11 // pred_check
          %p305 = pneg %p217
        $region42: #{cnn_s_forward.1} parent=11 // pred_check_branch
          %307 = sbr.rel (%p305) target = $region44
        $region43: #{cnn_s_forward.1} parent=11 // pred_region
          _
        $region44: #{cnn_s_forward.1} parent=11 // pred_fallthru
          _
      $region12: #{cnn_s_forward.1} parent=5 // pred_fallthru
        _
      %p308 = scmp.lt.s32.totalorder %s23, 2
      // Predicated region
      $region45: #{cnn_s_forward.1} parent=5 // pred_check
        %p309 = pneg %p308
      $region46: #{cnn_s_forward.1} parent=5 // pred_check_branch
        %311 = sbr.rel (%p309) target = $region48
      $region47: #{cnn_s_forward.1} parent=5 // pred_region
        // Predicated region
        $region49: #{cnn_s_forward.1} parent=47 // pred_check
          %p312 = pneg %p43
        $region50: #{cnn_s_forward.1} parent=47 // pred_check_branch
          %314 = sbr.rel (%p312) target = $region52
        $region51: #{cnn_s_forward.1} parent=47 // pred_region
          %p315 = scmp.lt.s32.totalorder %s23, 1
          %s316 = scalar_select %p315, %s23, 1
          %s317 = smul.addr %s316, 25
          %s318 = smul.addr %s317, 4
          %s319 = scalar_lea.vmem %s0, %s318
        $region52: #{cnn_s_forward.1} parent=47 // pred_fallthru
          _
      $region48: #{cnn_s_forward.1} parent=5 // pred_fallthru
        _
      %p320 = scmp.le.s32.totalorder 1, %s23
      %p321 = scmp.lt.s32.totalorder %s23, 3
      %p322 = pnand %p320, %p321
      %p323 = pneg %p322
      // Predicated region
      $region53: #{cnn_s_forward.1} parent=5 // pred_check
        _
      $region54: #{cnn_s_forward.1} parent=5 // pred_check_branch
        %325 = sbr.rel (%p322) target = $region56
      $region55: #{cnn_s_forward.1} parent=5 // pred_region
        %s326 = ssub.s32 %s23, 1
        %p327 = scmp.lt.s32.totalorder %s28, 1
        %s328 = scalar_select %p327, %s28, 1
        %s329 = smul.addr %s328, 25
        %s330 = smul.addr %s329, 4
        %s331 = scalar_lea.vmem %s0, %s330
        %p332 = pneg %p49
        %p333 = pneg %p46
        %p334 = pneg %p70
        %p335 = pneg %p67
        %p336 = pneg %p91
        %p337 = pneg %p88
        %p338 = pneg %p112
        %p339 = pneg %p109
        %p340 = pneg %p133
        %p341 = pneg %p130
        %p342 = pneg %p154
        %p343 = pneg %p151
        %p344 = pneg %p175
        %p345 = pneg %p172
        %p346 = pneg %p196
        %p347 = pneg %p193
        %p348 = pneg %p217
        %p349 = pneg %p214
        %p350 = pneg %p243
        %p351 = pneg %p240
        %s352 = sand.u32 %s230, 1
        %s353 = scalar_lea.sflag [#allocation3], %s352
        %s354 = sand.u32 %s230, 1
        %s355 = scalar_lea.vmem [#allocation2], %s354
        %p356 = pneg %p269
        %p357 = pneg %p266
        %s358 = sand.u32 %s256, 1
        %s359 = scalar_lea.sflag [#allocation5], %s358
        %s360 = sand.u32 %s256, 1
        %s361 = scalar_lea.vmem [#allocation4], %s360
        %p362 = scmp.lt.s32.totalorder %s28, 1
        %s363 = scalar_select %p362, %s28, 1
        %s364 = smul.addr %s363, 25
        %s365 = smul.addr %s364, 4
        %s366 = scalar_lea.vmem %s0, %s365
        %v368 = vld [vmem:[%s366] sm:$0xf]
        %v369 = vld [vmem:[%s366 + $0x4] sm:$0xf]
        %v370 = vld [vmem:[%s366 + $0x8] sm:$0xf]
        %v371 = vld [vmem:[%s366 + $0xc] sm:$0xf]
        %v372 = vld [vmem:[%s366 + $0x10] sm:$0xf]
        %v373 = vld [vmem:[%s366 + $0x14] sm:$0xf]
        %v374 = vld [vmem:[%s366 + $0x18] sm:$0xf]
        %v375 = vld [vmem:[%s366 + $0x1c] sm:$0xf]
        %v376 = vld [vmem:[%s366 + $0x20] sm:$0xf]
        %v377 = vld [vmem:[%s366 + $0x24] sm:$0xf]
        %v378 = vld [vmem:[%s366 + $0x28] sm:$0xf]
        %v379 = vld [vmem:[%s366 + $0x2c] sm:$0xf]
        %v380 = vld [vmem:[%s366 + $0x30] sm:$0xf]
        %v381 = vld [vmem:[%s366 + $0x34] sm:$0xf]
        %v382 = vld [vmem:[%s366 + $0x38] sm:$0xf]
        %v383 = vld [vmem:[%s366 + $0x3c] sm:$0xf]
        %v384 = vld [vmem:[%s366 + $0x40] sm:$0xf]
        %v385 = vld [vmem:[%s366 + $0x44] sm:$0xf]
        %v386 = vld [vmem:[%s366 + $0x48] sm:$0xf]
        %v387 = vld [vmem:[%s366 + $0x4c] sm:$0xf]
        %v388 = vld [vmem:[%s366 + $0x50] sm:$0xf]
        %v389 = vld [vmem:[%s366 + $0x54] sm:$0xf]
        %v390 = vld [vmem:[%s366 + $0x58] sm:$0xf]
        %v391 = vld [vmem:[%s366 + $0x5c] sm:$0xf]
        %v392 = vld [vmem:[%s366 + $0x60] sm:$0x3]
        %v393 = vld [vmem:[%s1] sm:$0xf]
        %v394 = vld [vmem:[%s1 + $0x4] sm:$0xf]
        %v395 = vld [vmem:[%s1 + $0x8] sm:$0xf]
        %v396 = vld [vmem:[%s1 + $0xc] sm:$0xf]
        %v397 = vld [vmem:[%s1 + $0x10] sm:$0xf]
        %v398 = vld [vmem:[%s1 + $0x14] sm:$0xf]
        %v399 = vld [vmem:[%s1 + $0x18] sm:$0xf]
        %v400 = vld [vmem:[%s1 + $0x1c] sm:$0xf]
        %v401 = vld [vmem:[%s1 + $0x20] sm:$0xf]
        %v402 = vld [vmem:[%s1 + $0x24] sm:$0xf]
        %v403 = vld [vmem:[%s1 + $0x28] sm:$0xf]
        %v404 = vld [vmem:[%s1 + $0x2c] sm:$0xf]
        %v405 = vld [vmem:[%s1 + $0x30] sm:$0xf]
        %v406 = vld [vmem:[%s1 + $0x34] sm:$0xf]
        %v407 = vld [vmem:[%s1 + $0x38] sm:$0xf]
        %v408 = vld [vmem:[%s1 + $0x3c] sm:$0xf]
        %v409 = vld [vmem:[%s2] sm:$0x1]
        %v410 = vperm.slane %v409, 0
        %v436 = vunpack.c.l.b16 %v368
        %v437 = vunpack.c.l.b16 %v369
        %v438 = vunpack.c.l.b16 %v370
        %v439 = vunpack.c.l.b16 %v371
        %v440 = vunpack.c.l.b16 %v372
        %v441 = vunpack.c.l.b16 %v373
        %v442 = vunpack.c.l.b16 %v374
        %v443 = vunpack.c.l.b16 %v375
        %v444 = vunpack.c.l.b16 %v376
        %v445 = vunpack.c.l.b16 %v377
        %v446 = vunpack.c.l.b16 %v378
        %v447 = vunpack.c.l.b16 %v379
        %v448 = vunpack.c.l.b16 %v380
        %v449 = vunpack.c.l.b16 %v381
        %v450 = vunpack.c.l.b16 %v382
        %v451 = vunpack.c.l.b16 %v383
        %v452 = vunpack.c.l.b16 %v384
        %v453 = vunpack.c.l.b16 %v385
        %v454 = vunpack.c.l.b16 %v386
        %v455 = vunpack.c.l.b16 %v387
        %v456 = vunpack.c.l.b16 %v388
        %v457 = vunpack.c.l.b16 %v389
        %v458 = vunpack.c.l.b16 %v390
        %v459 = vunpack.c.l.b16 %v391
        %v460 = vunpack.c.l.b16 %v392
        %v461 = vpack.c.b16 %v437, %v436
        %v462 = vpack.c.b16 %v439, %v438
        %v463 = vpack.c.b16 %v441, %v440
        %v464 = vpack.c.b16 %v443, %v442
        %v465 = vpack.c.b16 %v445, %v444
        %v466 = vpack.c.b16 %v447, %v446
        %v467 = vpack.c.b16 %v449, %v448
        %v468 = vpack.c.b16 %v451, %v450
        %v469 = vpack.c.b16 %v453, %v452
        %v470 = vpack.c.b16 %v455, %v454
        %v471 = vpack.c.b16 %v457, %v456
        %v472 = vpack.c.b16 %v459, %v458
        %v473 = vpack.c.b16 %v460, %v460
        %v503 = vunpack.c.l.b16 %v393
        %v504 = vunpack.c.l.b16 %v394
        %v505 = vunpack.c.l.b16 %v395
        %v506 = vunpack.c.l.b16 %v396
        %v507 = vunpack.c.l.b16 %v397
        %v508 = vunpack.c.l.b16 %v398
        %v509 = vunpack.c.l.b16 %v399
        %v510 = vunpack.c.l.b16 %v400
        %v511 = vunpack.c.l.b16 %v401
        %v512 = vunpack.c.l.b16 %v402
        %v513 = vunpack.c.l.b16 %v403
        %v514 = vunpack.c.l.b16 %v404
        %v515 = vunpack.c.l.b16 %v405
        %v516 = vunpack.c.l.b16 %v406
        %v517 = vunpack.c.l.b16 %v407
        %v518 = vunpack.c.l.b16 %v408
        %v519 = vpack.c.b16 %v504, %v503
        %v520 = vpack.c.b16 %v506, %v505
        %v521 = vpack.c.b16 %v508, %v507
        %v522 = vpack.c.b16 %v510, %v509
        %v523 = vpack.c.b16 %v512, %v511
        %v524 = vpack.c.b16 %v514, %v513
        %v525 = vpack.c.b16 %v516, %v515
        %v526 = vpack.c.b16 %v518, %v517
        %535 = vmatpush.bf16.msra.mxu0 %v526
        %536 = vmatpush.bf16.msra.mxu0 %v525
        %537 = vmatpush.bf16.msra.mxu0 %v524
        %538 = vmatpush.bf16.msra.mxu0 %v523
        %539 = vmatpush.bf16.msra.mxu0 %v522
        %540 = vmatpush.bf16.msra.mxu0 %v521
        %541 = vmatpush.bf16.msra.mxu0 %v520
        %542 = vmatpush.bf16.msra.mxu0 %v519
        %543 = vmatmul.bf16.gmra.mxu0 %v461
        %v544 = vpop.f32.mrf.mxu0
        %v545 = vadd.f32 %v410, %v544
        %v546 = vpop.f32.mrf.mxu0
        %v547 = vadd.f32 %v410, %v546
        %548 = vmatmul.bf16.gmra.mxu0 %v462
        %v549 = vpop.f32.mrf.mxu0
        %v550 = vadd.f32 %v410, %v549
        %v551 = vpop.f32.mrf.mxu0
        %v552 = vadd.f32 %v410, %v551
        %553 = vmatmul.bf16.gmra.mxu0 %v463
        %v554 = vpop.f32.mrf.mxu0
        %v555 = vadd.f32 %v410, %v554
        %v556 = vpop.f32.mrf.mxu0
        %v557 = vadd.f32 %v410, %v556
        %558 = vmatmul.bf16.gmra.mxu0 %v464
        %v559 = vpop.f32.mrf.mxu0
        %v560 = vadd.f32 %v410, %v559
        %v561 = vpop.f32.mrf.mxu0
        %v562 = vadd.f32 %v410, %v561
        %563 = vmatmul.bf16.gmra.mxu0 %v465
        %v564 = vpop.f32.mrf.mxu0
        %v565 = vadd.f32 %v410, %v564
        %v566 = vpop.f32.mrf.mxu0
        %v567 = vadd.f32 %v410, %v566
        %568 = vmatmul.bf16.gmra.mxu0 %v466
        %v569 = vpop.f32.mrf.mxu0
        %v570 = vadd.f32 %v410, %v569
        %v571 = vpop.f32.mrf.mxu0
        %v572 = vadd.f32 %v410, %v571
        %573 = vmatmul.bf16.gmra.mxu0 %v467
        %v574 = vpop.f32.mrf.mxu0
        %v575 = vadd.f32 %v410, %v574
        %v576 = vpop.f32.mrf.mxu0
        %v577 = vadd.f32 %v410, %v576
        %578 = vmatmul.bf16.gmra.mxu0 %v468
        %v579 = vpop.f32.mrf.mxu0
        %v580 = vadd.f32 %v410, %v579
        %v581 = vpop.f32.mrf.mxu0
        %v582 = vadd.f32 %v410, %v581
        %583 = vmatmul.bf16.gmra.mxu0 %v469
        %v584 = vpop.f32.mrf.mxu0
        %v585 = vadd.f32 %v410, %v584
        %v586 = vpop.f32.mrf.mxu0
        %v587 = vadd.f32 %v410, %v586
        %588 = vmatmul.bf16.gmra.mxu0 %v470
        %v589 = vpop.f32.mrf.mxu0
        %v590 = vadd.f32 %v410, %v589
        %v591 = vpop.f32.mrf.mxu0
        %v592 = vadd.f32 %v410, %v591
        %593 = vmatmul.bf16.gmra.mxu0 %v471
        %v594 = vpop.f32.mrf.mxu0
        %v595 = vadd.f32 %v410, %v594
        %v596 = vpop.f32.mrf.mxu0
        %v597 = vadd.f32 %v410, %v596
        %598 = vmatmul.bf16.gmra.mxu0 %v472
        %v599 = vpop.f32.mrf.mxu0
        %v600 = vadd.f32 %v410, %v599
        %v601 = vpop.f32.mrf.mxu0
        %v602 = vadd.f32 %v410, %v601
        %603 = vmatmul.bf16.gmra.mxu0 %v473
        %v604 = vpop.f32.mrf.mxu0
        %v605 = vadd.f32 %v410, %v604
        %v606 = vpop.f32.mrf.mxu0
        %607 = vdwg.mxu0
        %v608 = vmax.f32 %v545, 0.0
        %v609 = vmax.f32 %v547, 0.0
        %v610 = vmax.f32 %v550, 0.0
        %v611 = vmax.f32 %v552, 0.0
        %v612 = vmax.f32 %v555, 0.0
        %v613 = vmax.f32 %v557, 0.0
        %v614 = vmax.f32 %v560, 0.0
        %v615 = vmax.f32 %v562, 0.0
        %v616 = vmax.f32 %v565, 0.0
        %v617 = vmax.f32 %v567, 0.0
        %v618 = vmax.f32 %v570, 0.0
        %v619 = vmax.f32 %v572, 0.0
        %v620 = vmax.f32 %v575, 0.0
        %v621 = vmax.f32 %v577, 0.0
        %v622 = vmax.f32 %v580, 0.0
        %v623 = vmax.f32 %v582, 0.0
        %v624 = vmax.f32 %v585, 0.0
        %v625 = vmax.f32 %v587, 0.0
        %v626 = vmax.f32 %v590, 0.0
        %v627 = vmax.f32 %v592, 0.0
        %v628 = vmax.f32 %v595, 0.0
        %v629 = vmax.f32 %v597, 0.0
        %v630 = vmax.f32 %v600, 0.0
        %v631 = vmax.f32 %v602, 0.0
        %v632 = vmax.f32 %v605, 0.0
        %v633 = vld [vmem:[%s2 + $0x1] sm:$0x1]
        %v634 = vperm.slane %v633, 0
        %v635 = vmul.f32 %v608, %v634
        %v636 = vmul.f32 %v609, %v634
        %v637 = vmul.f32 %v610, %v634
        %v638 = vmul.f32 %v611, %v634
        %v639 = vmul.f32 %v612, %v634
        %v640 = vmul.f32 %v613, %v634
        %v641 = vmul.f32 %v614, %v634
        %v642 = vmul.f32 %v615, %v634
        %v643 = vmul.f32 %v616, %v634
        %v644 = vmul.f32 %v617, %v634
        %v645 = vmul.f32 %v618, %v634
        %v646 = vmul.f32 %v619, %v634
        %v647 = vmul.f32 %v620, %v634
        %v648 = vmul.f32 %v621, %v634
        %v649 = vmul.f32 %v622, %v634
        %v650 = vmul.f32 %v623, %v634
        %v651 = vmul.f32 %v624, %v634
        %v652 = vmul.f32 %v625, %v634
        %v653 = vmul.f32 %v626, %v634
        %v654 = vmul.f32 %v627, %v634
        %v655 = vmul.f32 %v628, %v634
        %v656 = vmul.f32 %v629, %v634
        %v657 = vmul.f32 %v630, %v634
        %v658 = vmul.f32 %v631, %v634
        %v659 = vmul.f32 %v632, %v634
        %v660 = vld [vmem:[%s2 + $0x2] sm:$0x1]
        %v661 = vperm.slane %v660, 0
        %v662 = vadd.f32 %v635, %v661
        %v663 = vadd.f32 %v636, %v661
        %v664 = vadd.f32 %v637, %v661
        %v665 = vadd.f32 %v638, %v661
        %v666 = vadd.f32 %v639, %v661
        %v667 = vadd.f32 %v640, %v661
        %v668 = vadd.f32 %v641, %v661
        %v669 = vadd.f32 %v642, %v661
        %v670 = vadd.f32 %v643, %v661
        %v671 = vadd.f32 %v644, %v661
        %v672 = vadd.f32 %v645, %v661
        %v673 = vadd.f32 %v646, %v661
        %v674 = vadd.f32 %v647, %v661
        %v675 = vadd.f32 %v648, %v661
        %v676 = vadd.f32 %v649, %v661
        %v677 = vadd.f32 %v650, %v661
        %v678 = vadd.f32 %v651, %v661
        %v679 = vadd.f32 %v652, %v661
        %v680 = vadd.f32 %v653, %v661
        %v681 = vadd.f32 %v654, %v661
        %v682 = vadd.f32 %v655, %v661
        %v683 = vadd.f32 %v656, %v661
        %v684 = vadd.f32 %v657, %v661
        %v685 = vadd.f32 %v658, %v661
        %v686 = vadd.f32 %v659, %v661
        %v712 = vrot.slane %v662, 2
        %v713 = vrot.slane %v662, 4
        %v714 = vrot.slane %v662, 6
        %v715 = vrot.slane %v663, 2
        %v716 = vrot.slane %v663, 4
        %v717 = vrot.slane %v663, 6
        %v718 = vrot.slane %v664, 2
        %v719 = vrot.slane %v664, 4
        %v720 = vrot.slane %v664, 6
        %v721 = vrot.slane %v665, 2
        %v722 = vrot.slane %v665, 4
        %v723 = vrot.slane %v665, 6
        %v724 = vrot.slane %v666, 2
        %v725 = vrot.slane %v666, 4
        %v726 = vrot.slane %v666, 6
        %v727 = vrot.slane %v667, 2
        %v728 = vrot.slane %v667, 4
        %v729 = vrot.slane %v667, 6
        %v730 = vrot.slane %v668, 2
        %v731 = vrot.slane %v668, 4
        %v732 = vrot.slane %v668, 6
        %v733 = vrot.slane %v669, 2
        %v734 = vrot.slane %v669, 4
        %v735 = vrot.slane %v669, 6
        %v736 = vrot.slane %v670, 2
        %v737 = vrot.slane %v670, 4
        %v738 = vrot.slane %v670, 6
        %v739 = vrot.slane %v671, 2
        %v740 = vrot.slane %v671, 4
        %v741 = vrot.slane %v671, 6
        %v742 = vrot.slane %v672, 2
        %v743 = vrot.slane %v672, 4
        %v744 = vrot.slane %v672, 6
        %v745 = vrot.slane %v673, 2
        %v746 = vrot.slane %v673, 4
        %v747 = vrot.slane %v673, 6
        %v748 = vrot.slane %v674, 2
        %v749 = vrot.slane %v674, 4
        %v750 = vrot.slane %v674, 6
        %v751 = vrot.slane %v675, 2
        %v752 = vrot.slane %v675, 4
        %v753 = vrot.slane %v675, 6
        %v754 = vrot.slane %v676, 2
        %v755 = vrot.slane %v676, 4
        %v756 = vrot.slane %v676, 6
        %v757 = vrot.slane %v677, 2
        %v758 = vrot.slane %v677, 4
        %v759 = vrot.slane %v677, 6
        %v760 = vrot.slane %v678, 2
        %v761 = vrot.slane %v678, 4
        %v762 = vrot.slane %v678, 6
        %v763 = vrot.slane %v679, 2
        %v764 = vrot.slane %v679, 4
        %v765 = vrot.slane %v679, 6
        %v766 = vrot.slane %v680, 2
        %v767 = vrot.slane %v680, 4
        %v768 = vrot.slane %v680, 6
        %v769 = vrot.slane %v681, 2
        %v770 = vrot.slane %v681, 4
        %v771 = vrot.slane %v681, 6
        %v772 = vrot.slane %v682, 2
        %v773 = vrot.slane %v682, 4
        %v774 = vrot.slane %v682, 6
        %v775 = vrot.slane %v683, 2
        %v776 = vrot.slane %v683, 4
        %v777 = vrot.slane %v683, 6
        %v778 = vrot.slane %v684, 2
        %v779 = vrot.slane %v684, 4
        %v780 = vrot.slane %v684, 6
        %v781 = vrot.slane %v685, 2
        %v782 = vrot.slane %v685, 4
        %v783 = vrot.slane %v685, 6
        %v784 = vrot.slane %v686, 2
        %vm858 = vcmask 517120
        %v859 = vsel %vm858, %v662, -inf
        %v860 = vrot.slane %v859, 4
        %v861 = vmax.f32 %v859, %v860
        %v862 = vrot.slane %v861, 2
        %v863 = vmax.f32 %v861, %v862
        %v864 = vrot.slane %v863, 1
        %v865 = vmax.f32 %v863, %v864
        %v866 = vsel %vm858, %v712, -inf
        %v867 = vrot.slane %v866, 4
        %v868 = vmax.f32 %v866, %v867
        %v869 = vrot.slane %v868, 2
        %v870 = vmax.f32 %v868, %v869
        %v871 = vrot.slane %v870, 1
        %v872 = vmax.f32 %v870, %v871
        %v873 = vsel %vm858, %v713, -inf
        %v874 = vrot.slane %v873, 4
        %v875 = vmax.f32 %v873, %v874
        %v876 = vrot.slane %v875, 2
        %v877 = vmax.f32 %v875, %v876
        %v878 = vrot.slane %v877, 1
        %v879 = vmax.f32 %v877, %v878
        %v880 = vsel %vm858, %v714, -inf
        %v881 = vrot.slane %v880, 4
        %v882 = vmax.f32 %v880, %v881
        %v883 = vrot.slane %v882, 2
        %v884 = vmax.f32 %v882, %v883
        %v885 = vrot.slane %v884, 1
        %v886 = vmax.f32 %v884, %v885
        %v887 = vsel %vm858, %v663, -inf
        %v888 = vrot.slane %v887, 4
        %v889 = vmax.f32 %v887, %v888
        %v890 = vrot.slane %v889, 2
        %v891 = vmax.f32 %v889, %v890
        %v892 = vrot.slane %v891, 1
        %v893 = vmax.f32 %v891, %v892
        %v894 = vsel %vm858, %v715, -inf
        %v895 = vrot.slane %v894, 4
        %v896 = vmax.f32 %v894, %v895
        %v897 = vrot.slane %v896, 2
        %v898 = vmax.f32 %v896, %v897
        %v899 = vrot.slane %v898, 1
        %v900 = vmax.f32 %v898, %v899
        %v901 = vsel %vm858, %v716, -inf
        %v902 = vrot.slane %v901, 4
        %v903 = vmax.f32 %v901, %v902
        %v904 = vrot.slane %v903, 2
        %v905 = vmax.f32 %v903, %v904
        %v906 = vrot.slane %v905, 1
        %v907 = vmax.f32 %v905, %v906
        %v908 = vsel %vm858, %v717, -inf
        %v909 = vrot.slane %v908, 4
        %v910 = vmax.f32 %v908, %v909
        %v911 = vrot.slane %v910, 2
        %v912 = vmax.f32 %v910, %v911
        %v913 = vrot.slane %v912, 1
        %v914 = vmax.f32 %v912, %v913
        %v915 = vsel %vm858, %v664, -inf
        %v916 = vrot.slane %v915, 4
        %v917 = vmax.f32 %v915, %v916
        %v918 = vrot.slane %v917, 2
        %v919 = vmax.f32 %v917, %v918
        %v920 = vrot.slane %v919, 1
        %v921 = vmax.f32 %v919, %v920
        %v922 = vsel %vm858, %v718, -inf
        %v923 = vrot.slane %v922, 4
        %v924 = vmax.f32 %v922, %v923
        %v925 = vrot.slane %v924, 2
        %v926 = vmax.f32 %v924, %v925
        %v927 = vrot.slane %v926, 1
        %v928 = vmax.f32 %v926, %v927
        %v929 = vsel %vm858, %v719, -inf
        %v930 = vrot.slane %v929, 4
        %v931 = vmax.f32 %v929, %v930
        %v932 = vrot.slane %v931, 2
        %v933 = vmax.f32 %v931, %v932
        %v934 = vrot.slane %v933, 1
        %v935 = vmax.f32 %v933, %v934
        %v936 = vsel %vm858, %v720, -inf
        %v937 = vrot.slane %v936, 4
        %v938 = vmax.f32 %v936, %v937
        %v939 = vrot.slane %v938, 2
        %v940 = vmax.f32 %v938, %v939
        %v941 = vrot.slane %v940, 1
        %v942 = vmax.f32 %v940, %v941
        %v943 = vsel %vm858, %v665, -inf
        %v944 = vrot.slane %v943, 4
        %v945 = vmax.f32 %v943, %v944
        %v946 = vrot.slane %v945, 2
        %v947 = vmax.f32 %v945, %v946
        %v948 = vrot.slane %v947, 1
        %v949 = vmax.f32 %v947, %v948
        %v950 = vsel %vm858, %v721, -inf
        %v951 = vrot.slane %v950, 4
        %v952 = vmax.f32 %v950, %v951
        %v953 = vrot.slane %v952, 2
        %v954 = vmax.f32 %v952, %v953
        %v955 = vrot.slane %v954, 1
        %v956 = vmax.f32 %v954, %v955
        %v957 = vsel %vm858, %v722, -inf
        %v958 = vrot.slane %v957, 4
        %v959 = vmax.f32 %v957, %v958
        %v960 = vrot.slane %v959, 2
        %v961 = vmax.f32 %v959, %v960
        %v962 = vrot.slane %v961, 1
        %v963 = vmax.f32 %v961, %v962
        %v964 = vsel %vm858, %v723, -inf
        %v965 = vrot.slane %v964, 4
        %v966 = vmax.f32 %v964, %v965
        %v967 = vrot.slane %v966, 2
        %v968 = vmax.f32 %v966, %v967
        %v969 = vrot.slane %v968, 1
        %v970 = vmax.f32 %v968, %v969
        %v971 = vsel %vm858, %v666, -inf
        %v972 = vrot.slane %v971, 4
        %v973 = vmax.f32 %v971, %v972
        %v974 = vrot.slane %v973, 2
        %v975 = vmax.f32 %v973, %v974
        %v976 = vrot.slane %v975, 1
        %v977 = vmax.f32 %v975, %v976
        %v978 = vsel %vm858, %v724, -inf
        %v979 = vrot.slane %v978, 4
        %v980 = vmax.f32 %v978, %v979
        %v981 = vrot.slane %v980, 2
        %v982 = vmax.f32 %v980, %v981
        %v983 = vrot.slane %v982, 1
        %v984 = vmax.f32 %v982, %v983
        %v985 = vsel %vm858, %v725, -inf
        %v986 = vrot.slane %v985, 4
        %v987 = vmax.f32 %v985, %v986
        %v988 = vrot.slane %v987, 2
        %v989 = vmax.f32 %v987, %v988
        %v990 = vrot.slane %v989, 1
        %v991 = vmax.f32 %v989, %v990
        %v992 = vsel %vm858, %v726, -inf
        %v993 = vrot.slane %v992, 4
        %v994 = vmax.f32 %v992, %v993
        %v995 = vrot.slane %v994, 2
        %v996 = vmax.f32 %v994, %v995
        %v997 = vrot.slane %v996, 1
        %v998 = vmax.f32 %v996, %v997
        %v999 = vsel %vm858, %v667, -inf
        %v1000 = vrot.slane %v999, 4
        %v1001 = vmax.f32 %v999, %v1000
        %v1002 = vrot.slane %v1001, 2
        %v1003 = vmax.f32 %v1001, %v1002
        %v1004 = vrot.slane %v1003, 1
        %v1005 = vmax.f32 %v1003, %v1004
        %v1006 = vsel %vm858, %v727, -inf
        %v1007 = vrot.slane %v1006, 4
        %v1008 = vmax.f32 %v1006, %v1007
        %v1009 = vrot.slane %v1008, 2
        %v1010 = vmax.f32 %v1008, %v1009
        %v1011 = vrot.slane %v1010, 1
        %v1012 = vmax.f32 %v1010, %v1011
        %v1013 = vsel %vm858, %v728, -inf
        %v1014 = vrot.slane %v1013, 4
        %v1015 = vmax.f32 %v1013, %v1014
        %v1016 = vrot.slane %v1015, 2
        %v1017 = vmax.f32 %v1015, %v1016
        %v1018 = vrot.slane %v1017, 1
        %v1019 = vmax.f32 %v1017, %v1018
        %v1020 = vsel %vm858, %v729, -inf
        %v1021 = vrot.slane %v1020, 4
        %v1022 = vmax.f32 %v1020, %v1021
        %v1023 = vrot.slane %v1022, 2
        %v1024 = vmax.f32 %v1022, %v1023
        %v1025 = vrot.slane %v1024, 1
        %v1026 = vmax.f32 %v1024, %v1025
        %v1027 = vsel %vm858, %v668, -inf
        %v1028 = vrot.slane %v1027, 4
        %v1029 = vmax.f32 %v1027, %v1028
        %v1030 = vrot.slane %v1029, 2
        %v1031 = vmax.f32 %v1029, %v1030
        %v1032 = vrot.slane %v1031, 1
        %v1033 = vmax.f32 %v1031, %v1032
        %v1034 = vsel %vm858, %v730, -inf
        %v1035 = vrot.slane %v1034, 4
        %v1036 = vmax.f32 %v1034, %v1035
        %v1037 = vrot.slane %v1036, 2
        %v1038 = vmax.f32 %v1036, %v1037
        %v1039 = vrot.slane %v1038, 1
        %v1040 = vmax.f32 %v1038, %v1039
        %v1041 = vsel %vm858, %v731, -inf
        %v1042 = vrot.slane %v1041, 4
        %v1043 = vmax.f32 %v1041, %v1042
        %v1044 = vrot.slane %v1043, 2
        %v1045 = vmax.f32 %v1043, %v1044
        %v1046 = vrot.slane %v1045, 1
        %v1047 = vmax.f32 %v1045, %v1046
        %v1048 = vsel %vm858, %v732, -inf
        %v1049 = vrot.slane %v1048, 4
        %v1050 = vmax.f32 %v1048, %v1049
        %v1051 = vrot.slane %v1050, 2
        %v1052 = vmax.f32 %v1050, %v1051
        %v1053 = vrot.slane %v1052, 1
        %v1054 = vmax.f32 %v1052, %v1053
        %v1055 = vsel %vm858, %v669, -inf
        %v1056 = vrot.slane %v1055, 4
        %v1057 = vmax.f32 %v1055, %v1056
        %v1058 = vrot.slane %v1057, 2
        %v1059 = vmax.f32 %v1057, %v1058
        %v1060 = vrot.slane %v1059, 1
        %v1061 = vmax.f32 %v1059, %v1060
        %v1062 = vsel %vm858, %v733, -inf
        %v1063 = vrot.slane %v1062, 4
        %v1064 = vmax.f32 %v1062, %v1063
        %v1065 = vrot.slane %v1064, 2
        %v1066 = vmax.f32 %v1064, %v1065
        %v1067 = vrot.slane %v1066, 1
        %v1068 = vmax.f32 %v1066, %v1067
        %v1069 = vsel %vm858, %v734, -inf
        %v1070 = vrot.slane %v1069, 4
        %v1071 = vmax.f32 %v1069, %v1070
        %v1072 = vrot.slane %v1071, 2
        %v1073 = vmax.f32 %v1071, %v1072
        %v1074 = vrot.slane %v1073, 1
        %v1075 = vmax.f32 %v1073, %v1074
        %v1076 = vsel %vm858, %v735, -inf
        %v1077 = vrot.slane %v1076, 4
        %v1078 = vmax.f32 %v1076, %v1077
        %v1079 = vrot.slane %v1078, 2
        %v1080 = vmax.f32 %v1078, %v1079
        %v1081 = vrot.slane %v1080, 1
        %v1082 = vmax.f32 %v1080, %v1081
        %v1083 = vsel %vm858, %v670, -inf
        %v1084 = vrot.slane %v1083, 4
        %v1085 = vmax.f32 %v1083, %v1084
        %v1086 = vrot.slane %v1085, 2
        %v1087 = vmax.f32 %v1085, %v1086
        %v1088 = vrot.slane %v1087, 1
        %v1089 = vmax.f32 %v1087, %v1088
        %v1090 = vsel %vm858, %v736, -inf
        %v1091 = vrot.slane %v1090, 4
        %v1092 = vmax.f32 %v1090, %v1091
        %v1093 = vrot.slane %v1092, 2
        %v1094 = vmax.f32 %v1092, %v1093
        %v1095 = vrot.slane %v1094, 1
        %v1096 = vmax.f32 %v1094, %v1095
        %v1097 = vsel %vm858, %v737, -inf
        %v1098 = vrot.slane %v1097, 4
        %v1099 = vmax.f32 %v1097, %v1098
        %v1100 = vrot.slane %v1099, 2
        %v1101 = vmax.f32 %v1099, %v1100
        %v1102 = vrot.slane %v1101, 1
        %v1103 = vmax.f32 %v1101, %v1102
        %v1104 = vsel %vm858, %v738, -inf
        %v1105 = vrot.slane %v1104, 4
        %v1106 = vmax.f32 %v1104, %v1105
        %v1107 = vrot.slane %v1106, 2
        %v1108 = vmax.f32 %v1106, %v1107
        %v1109 = vrot.slane %v1108, 1
        %v1110 = vmax.f32 %v1108, %v1109
        %v1111 = vsel %vm858, %v671, -inf
        %v1112 = vrot.slane %v1111, 4
        %v1113 = vmax.f32 %v1111, %v1112
        %v1114 = vrot.slane %v1113, 2
        %v1115 = vmax.f32 %v1113, %v1114
        %v1116 = vrot.slane %v1115, 1
        %v1117 = vmax.f32 %v1115, %v1116
        %v1118 = vsel %vm858, %v739, -inf
        %v1119 = vrot.slane %v1118, 4
        %v1120 = vmax.f32 %v1118, %v1119
        %v1121 = vrot.slane %v1120, 2
        %v1122 = vmax.f32 %v1120, %v1121
        %v1123 = vrot.slane %v1122, 1
        %v1124 = vmax.f32 %v1122, %v1123
        %v1125 = vsel %vm858, %v740, -inf
        %v1126 = vrot.slane %v1125, 4
        %v1127 = vmax.f32 %v1125, %v1126
        %v1128 = vrot.slane %v1127, 2
        %v1129 = vmax.f32 %v1127, %v1128
        %v1130 = vrot.slane %v1129, 1
        %v1131 = vmax.f32 %v1129, %v1130
        %v1132 = vsel %vm858, %v741, -inf
        %v1133 = vrot.slane %v1132, 4
        %v1134 = vmax.f32 %v1132, %v1133
        %v1135 = vrot.slane %v1134, 2
        %v1136 = vmax.f32 %v1134, %v1135
        %v1137 = vrot.slane %v1136, 1
        %v1138 = vmax.f32 %v1136, %v1137
        %v1139 = vsel %vm858, %v672, -inf
        %v1140 = vrot.slane %v1139, 4
        %v1141 = vmax.f32 %v1139, %v1140
        %v1142 = vrot.slane %v1141, 2
        %v1143 = vmax.f32 %v1141, %v1142
        %v1144 = vrot.slane %v1143, 1
        %v1145 = vmax.f32 %v1143, %v1144
        %v1146 = vsel %vm858, %v742, -inf
        %v1147 = vrot.slane %v1146, 4
        %v1148 = vmax.f32 %v1146, %v1147
        %v1149 = vrot.slane %v1148, 2
        %v1150 = vmax.f32 %v1148, %v1149
        %v1151 = vrot.slane %v1150, 1
        %v1152 = vmax.f32 %v1150, %v1151
        %v1153 = vsel %vm858, %v743, -inf
        %v1154 = vrot.slane %v1153, 4
        %v1155 = vmax.f32 %v1153, %v1154
        %v1156 = vrot.slane %v1155, 2
        %v1157 = vmax.f32 %v1155, %v1156
        %v1158 = vrot.slane %v1157, 1
        %v1159 = vmax.f32 %v1157, %v1158
        %v1160 = vsel %vm858, %v744, -inf
        %v1161 = vrot.slane %v1160, 4
        %v1162 = vmax.f32 %v1160, %v1161
        %v1163 = vrot.slane %v1162, 2
        %v1164 = vmax.f32 %v1162, %v1163
        %v1165 = vrot.slane %v1164, 1
        %v1166 = vmax.f32 %v1164, %v1165
        %v1167 = vsel %vm858, %v673, -inf
        %v1168 = vrot.slane %v1167, 4
        %v1169 = vmax.f32 %v1167, %v1168
        %v1170 = vrot.slane %v1169, 2
        %v1171 = vmax.f32 %v1169, %v1170
        %v1172 = vrot.slane %v1171, 1
        %v1173 = vmax.f32 %v1171, %v1172
        %v1174 = vsel %vm858, %v745, -inf
        %v1175 = vrot.slane %v1174, 4
        %v1176 = vmax.f32 %v1174, %v1175
        %v1177 = vrot.slane %v1176, 2
        %v1178 = vmax.f32 %v1176, %v1177
        %v1179 = vrot.slane %v1178, 1
        %v1180 = vmax.f32 %v1178, %v1179
        %v1181 = vsel %vm858, %v746, -inf
        %v1182 = vrot.slane %v1181, 4
        %v1183 = vmax.f32 %v1181, %v1182
        %v1184 = vrot.slane %v1183, 2
        %v1185 = vmax.f32 %v1183, %v1184
        %v1186 = vrot.slane %v1185, 1
        %v1187 = vmax.f32 %v1185, %v1186
        %v1188 = vsel %vm858, %v747, -inf
        %v1189 = vrot.slane %v1188, 4
        %v1190 = vmax.f32 %v1188, %v1189
        %v1191 = vrot.slane %v1190, 2
        %v1192 = vmax.f32 %v1190, %v1191
        %v1193 = vrot.slane %v1192, 1
        %v1194 = vmax.f32 %v1192, %v1193
        %v1195 = vsel %vm858, %v674, -inf
        %v1196 = vrot.slane %v1195, 4
        %v1197 = vmax.f32 %v1195, %v1196
        %v1198 = vrot.slane %v1197, 2
        %v1199 = vmax.f32 %v1197, %v1198
        %v1200 = vrot.slane %v1199, 1
        %v1201 = vmax.f32 %v1199, %v1200
        %v1202 = vsel %vm858, %v748, -inf
        %v1203 = vrot.slane %v1202, 4
        %v1204 = vmax.f32 %v1202, %v1203
        %v1205 = vrot.slane %v1204, 2
        %v1206 = vmax.f32 %v1204, %v1205
        %v1207 = vrot.slane %v1206, 1
        %v1208 = vmax.f32 %v1206, %v1207
        %v1209 = vsel %vm858, %v749, -inf
        %v1210 = vrot.slane %v1209, 4
        %v1211 = vmax.f32 %v1209, %v1210
        %v1212 = vrot.slane %v1211, 2
        %v1213 = vmax.f32 %v1211, %v1212
        %v1214 = vrot.slane %v1213, 1
        %v1215 = vmax.f32 %v1213, %v1214
        %v1216 = vsel %vm858, %v750, -inf
        %v1217 = vrot.slane %v1216, 4
        %v1218 = vmax.f32 %v1216, %v1217
        %v1219 = vrot.slane %v1218, 2
        %v1220 = vmax.f32 %v1218, %v1219
        %v1221 = vrot.slane %v1220, 1
        %v1222 = vmax.f32 %v1220, %v1221
        %v1223 = vsel %vm858, %v675, -inf
        %v1224 = vrot.slane %v1223, 4
        %v1225 = vmax.f32 %v1223, %v1224
        %v1226 = vrot.slane %v1225, 2
        %v1227 = vmax.f32 %v1225, %v1226
        %v1228 = vrot.slane %v1227, 1
        %v1229 = vmax.f32 %v1227, %v1228
        %v1230 = vsel %vm858, %v751, -inf
        %v1231 = vrot.slane %v1230, 4
        %v1232 = vmax.f32 %v1230, %v1231
        %v1233 = vrot.slane %v1232, 2
        %v1234 = vmax.f32 %v1232, %v1233
        %v1235 = vrot.slane %v1234, 1
        %v1236 = vmax.f32 %v1234, %v1235
        %v1237 = vsel %vm858, %v752, -inf
        %v1238 = vrot.slane %v1237, 4
        %v1239 = vmax.f32 %v1237, %v1238
        %v1240 = vrot.slane %v1239, 2
        %v1241 = vmax.f32 %v1239, %v1240
        %v1242 = vrot.slane %v1241, 1
        %v1243 = vmax.f32 %v1241, %v1242
        %v1244 = vsel %vm858, %v753, -inf
        %v1245 = vrot.slane %v1244, 4
        %v1246 = vmax.f32 %v1244, %v1245
        %v1247 = vrot.slane %v1246, 2
        %v1248 = vmax.f32 %v1246, %v1247
        %v1249 = vrot.slane %v1248, 1
        %v1250 = vmax.f32 %v1248, %v1249
        %v1251 = vsel %vm858, %v676, -inf
        %v1252 = vrot.slane %v1251, 4
        %v1253 = vmax.f32 %v1251, %v1252
        %v1254 = vrot.slane %v1253, 2
        %v1255 = vmax.f32 %v1253, %v1254
        %v1256 = vrot.slane %v1255, 1
        %v1257 = vmax.f32 %v1255, %v1256
        %v1258 = vsel %vm858, %v754, -inf
        %v1259 = vrot.slane %v1258, 4
        %v1260 = vmax.f32 %v1258, %v1259
        %v1261 = vrot.slane %v1260, 2
        %v1262 = vmax.f32 %v1260, %v1261
        %v1263 = vrot.slane %v1262, 1
        %v1264 = vmax.f32 %v1262, %v1263
        %v1265 = vsel %vm858, %v755, -inf
        %v1266 = vrot.slane %v1265, 4
        %v1267 = vmax.f32 %v1265, %v1266
        %v1268 = vrot.slane %v1267, 2
        %v1269 = vmax.f32 %v1267, %v1268
        %v1270 = vrot.slane %v1269, 1
        %v1271 = vmax.f32 %v1269, %v1270
        %v1272 = vsel %vm858, %v756, -inf
        %v1273 = vrot.slane %v1272, 4
        %v1274 = vmax.f32 %v1272, %v1273
        %v1275 = vrot.slane %v1274, 2
        %v1276 = vmax.f32 %v1274, %v1275
        %v1277 = vrot.slane %v1276, 1
        %v1278 = vmax.f32 %v1276, %v1277
        %v1279 = vsel %vm858, %v677, -inf
        %v1280 = vrot.slane %v1279, 4
        %v1281 = vmax.f32 %v1279, %v1280
        %v1282 = vrot.slane %v1281, 2
        %v1283 = vmax.f32 %v1281, %v1282
        %v1284 = vrot.slane %v1283, 1
        %v1285 = vmax.f32 %v1283, %v1284
        %v1286 = vsel %vm858, %v757, -inf
        %v1287 = vrot.slane %v1286, 4
        %v1288 = vmax.f32 %v1286, %v1287
        %v1289 = vrot.slane %v1288, 2
        %v1290 = vmax.f32 %v1288, %v1289
        %v1291 = vrot.slane %v1290, 1
        %v1292 = vmax.f32 %v1290, %v1291
        %v1293 = vsel %vm858, %v758, -inf
        %v1294 = vrot.slane %v1293, 4
        %v1295 = vmax.f32 %v1293, %v1294
        %v1296 = vrot.slane %v1295, 2
        %v1297 = vmax.f32 %v1295, %v1296
        %v1298 = vrot.slane %v1297, 1
        %v1299 = vmax.f32 %v1297, %v1298
        %v1300 = vsel %vm858, %v759, -inf
        %v1301 = vrot.slane %v1300, 4
        %v1302 = vmax.f32 %v1300, %v1301
        %v1303 = vrot.slane %v1302, 2
        %v1304 = vmax.f32 %v1302, %v1303
        %v1305 = vrot.slane %v1304, 1
        %v1306 = vmax.f32 %v1304, %v1305
        %v1307 = vsel %vm858, %v678, -inf
        %v1308 = vrot.slane %v1307, 4
        %v1309 = vmax.f32 %v1307, %v1308
        %v1310 = vrot.slane %v1309, 2
        %v1311 = vmax.f32 %v1309, %v1310
        %v1312 = vrot.slane %v1311, 1
        %v1313 = vmax.f32 %v1311, %v1312
        %v1314 = vsel %vm858, %v760, -inf
        %v1315 = vrot.slane %v1314, 4
        %v1316 = vmax.f32 %v1314, %v1315
        %v1317 = vrot.slane %v1316, 2
        %v1318 = vmax.f32 %v1316, %v1317
        %v1319 = vrot.slane %v1318, 1
        %v1320 = vmax.f32 %v1318, %v1319
        %v1321 = vsel %vm858, %v761, -inf
        %v1322 = vrot.slane %v1321, 4
        %v1323 = vmax.f32 %v1321, %v1322
        %v1324 = vrot.slane %v1323, 2
        %v1325 = vmax.f32 %v1323, %v1324
        %v1326 = vrot.slane %v1325, 1
        %v1327 = vmax.f32 %v1325, %v1326
        %v1328 = vsel %vm858, %v762, -inf
        %v1329 = vrot.slane %v1328, 4
        %v1330 = vmax.f32 %v1328, %v1329
        %v1331 = vrot.slane %v1330, 2
        %v1332 = vmax.f32 %v1330, %v1331
        %v1333 = vrot.slane %v1332, 1
        %v1334 = vmax.f32 %v1332, %v1333
        %v1335 = vsel %vm858, %v679, -inf
        %v1336 = vrot.slane %v1335, 4
        %v1337 = vmax.f32 %v1335, %v1336
        %v1338 = vrot.slane %v1337, 2
        %v1339 = vmax.f32 %v1337, %v1338
        %v1340 = vrot.slane %v1339, 1
        %v1341 = vmax.f32 %v1339, %v1340
        %v1342 = vsel %vm858, %v763, -inf
        %v1343 = vrot.slane %v1342, 4
        %v1344 = vmax.f32 %v1342, %v1343
        %v1345 = vrot.slane %v1344, 2
        %v1346 = vmax.f32 %v1344, %v1345
        %v1347 = vrot.slane %v1346, 1
        %v1348 = vmax.f32 %v1346, %v1347
        %v1349 = vsel %vm858, %v764, -inf
        %v1350 = vrot.slane %v1349, 4
        %v1351 = vmax.f32 %v1349, %v1350
        %v1352 = vrot.slane %v1351, 2
        %v1353 = vmax.f32 %v1351, %v1352
        %v1354 = vrot.slane %v1353, 1
        %v1355 = vmax.f32 %v1353, %v1354
        %v1356 = vsel %vm858, %v765, -inf
        %v1357 = vrot.slane %v1356, 4
        %v1358 = vmax.f32 %v1356, %v1357
        %v1359 = vrot.slane %v1358, 2
        %v1360 = vmax.f32 %v1358, %v1359
        %v1361 = vrot.slane %v1360, 1
        %v1362 = vmax.f32 %v1360, %v1361
        %v1363 = vsel %vm858, %v680, -inf
        %v1364 = vrot.slane %v1363, 4
        %v1365 = vmax.f32 %v1363, %v1364
        %v1366 = vrot.slane %v1365, 2
        %v1367 = vmax.f32 %v1365, %v1366
        %v1368 = vrot.slane %v1367, 1
        %v1369 = vmax.f32 %v1367, %v1368
        %v1370 = vsel %vm858, %v766, -inf
        %v1371 = vrot.slane %v1370, 4
        %v1372 = vmax.f32 %v1370, %v1371
        %v1373 = vrot.slane %v1372, 2
        %v1374 = vmax.f32 %v1372, %v1373
        %v1375 = vrot.slane %v1374, 1
        %v1376 = vmax.f32 %v1374, %v1375
        %v1377 = vsel %vm858, %v767, -inf
        %v1378 = vrot.slane %v1377, 4
        %v1379 = vmax.f32 %v1377, %v1378
        %v1380 = vrot.slane %v1379, 2
        %v1381 = vmax.f32 %v1379, %v1380
        %v1382 = vrot.slane %v1381, 1
        %v1383 = vmax.f32 %v1381, %v1382
        %v1384 = vsel %vm858, %v768, -inf
        %v1385 = vrot.slane %v1384, 4
        %v1386 = vmax.f32 %v1384, %v1385
        %v1387 = vrot.slane %v1386, 2
        %v1388 = vmax.f32 %v1386, %v1387
        %v1389 = vrot.slane %v1388, 1
        %v1390 = vmax.f32 %v1388, %v1389
        %v1391 = vsel %vm858, %v681, -inf
        %v1392 = vrot.slane %v1391, 4
        %v1393 = vmax.f32 %v1391, %v1392
        %v1394 = vrot.slane %v1393, 2
        %v1395 = vmax.f32 %v1393, %v1394
        %v1396 = vrot.slane %v1395, 1
        %v1397 = vmax.f32 %v1395, %v1396
        %v1398 = vsel %vm858, %v769, -inf
        %v1399 = vrot.slane %v1398, 4
        %v1400 = vmax.f32 %v1398, %v1399
        %v1401 = vrot.slane %v1400, 2
        %v1402 = vmax.f32 %v1400, %v1401
        %v1403 = vrot.slane %v1402, 1
        %v1404 = vmax.f32 %v1402, %v1403
        %v1405 = vsel %vm858, %v770, -inf
        %v1406 = vrot.slane %v1405, 4
        %v1407 = vmax.f32 %v1405, %v1406
        %v1408 = vrot.slane %v1407, 2
        %v1409 = vmax.f32 %v1407, %v1408
        %v1410 = vrot.slane %v1409, 1
        %v1411 = vmax.f32 %v1409, %v1410
        %v1412 = vsel %vm858, %v771, -inf
        %v1413 = vrot.slane %v1412, 4
        %v1414 = vmax.f32 %v1412, %v1413
        %v1415 = vrot.slane %v1414, 2
        %v1416 = vmax.f32 %v1414, %v1415
        %v1417 = vrot.slane %v1416, 1
        %v1418 = vmax.f32 %v1416, %v1417
        %v1419 = vsel %vm858, %v682, -inf
        %v1420 = vrot.slane %v1419, 4
        %v1421 = vmax.f32 %v1419, %v1420
        %v1422 = vrot.slane %v1421, 2
        %v1423 = vmax.f32 %v1421, %v1422
        %v1424 = vrot.slane %v1423, 1
        %v1425 = vmax.f32 %v1423, %v1424
        %v1426 = vsel %vm858, %v772, -inf
        %v1427 = vrot.slane %v1426, 4
        %v1428 = vmax.f32 %v1426, %v1427
        %v1429 = vrot.slane %v1428, 2
        %v1430 = vmax.f32 %v1428, %v1429
        %v1431 = vrot.slane %v1430, 1
        %v1432 = vmax.f32 %v1430, %v1431
        %v1433 = vsel %vm858, %v773, -inf
        %v1434 = vrot.slane %v1433, 4
        %v1435 = vmax.f32 %v1433, %v1434
        %v1436 = vrot.slane %v1435, 2
        %v1437 = vmax.f32 %v1435, %v1436
        %v1438 = vrot.slane %v1437, 1
        %v1439 = vmax.f32 %v1437, %v1438
        %v1440 = vsel %vm858, %v774, -inf
        %v1441 = vrot.slane %v1440, 4
        %v1442 = vmax.f32 %v1440, %v1441
        %v1443 = vrot.slane %v1442, 2
        %v1444 = vmax.f32 %v1442, %v1443
        %v1445 = vrot.slane %v1444, 1
        %v1446 = vmax.f32 %v1444, %v1445
        %v1447 = vsel %vm858, %v683, -inf
        %v1448 = vrot.slane %v1447, 4
        %v1449 = vmax.f32 %v1447, %v1448
        %v1450 = vrot.slane %v1449, 2
        %v1451 = vmax.f32 %v1449, %v1450
        %v1452 = vrot.slane %v1451, 1
        %v1453 = vmax.f32 %v1451, %v1452
        %v1454 = vsel %vm858, %v775, -inf
        %v1455 = vrot.slane %v1454, 4
        %v1456 = vmax.f32 %v1454, %v1455
        %v1457 = vrot.slane %v1456, 2
        %v1458 = vmax.f32 %v1456, %v1457
        %v1459 = vrot.slane %v1458, 1
        %v1460 = vmax.f32 %v1458, %v1459
        %v1461 = vsel %vm858, %v776, -inf
        %v1462 = vrot.slane %v1461, 4
        %v1463 = vmax.f32 %v1461, %v1462
        %v1464 = vrot.slane %v1463, 2
        %v1465 = vmax.f32 %v1463, %v1464
        %v1466 = vrot.slane %v1465, 1
        %v1467 = vmax.f32 %v1465, %v1466
        %v1468 = vsel %vm858, %v777, -inf
        %v1469 = vrot.slane %v1468, 4
        %v1470 = vmax.f32 %v1468, %v1469
        %v1471 = vrot.slane %v1470, 2
        %v1472 = vmax.f32 %v1470, %v1471
        %v1473 = vrot.slane %v1472, 1
        %v1474 = vmax.f32 %v1472, %v1473
        %v1475 = vsel %vm858, %v684, -inf
        %v1476 = vrot.slane %v1475, 4
        %v1477 = vmax.f32 %v1475, %v1476
        %v1478 = vrot.slane %v1477, 2
        %v1479 = vmax.f32 %v1477, %v1478
        %v1480 = vrot.slane %v1479, 1
        %v1481 = vmax.f32 %v1479, %v1480
        %v1482 = vsel %vm858, %v778, -inf
        %v1483 = vrot.slane %v1482, 4
        %v1484 = vmax.f32 %v1482, %v1483
        %v1485 = vrot.slane %v1484, 2
        %v1486 = vmax.f32 %v1484, %v1485
        %v1487 = vrot.slane %v1486, 1
        %v1488 = vmax.f32 %v1486, %v1487
        %v1489 = vsel %vm858, %v779, -inf
        %v1490 = vrot.slane %v1489, 4
        %v1491 = vmax.f32 %v1489, %v1490
        %v1492 = vrot.slane %v1491, 2
        %v1493 = vmax.f32 %v1491, %v1492
        %v1494 = vrot.slane %v1493, 1
        %v1495 = vmax.f32 %v1493, %v1494
        %v1496 = vsel %vm858, %v780, -inf
        %v1497 = vrot.slane %v1496, 4
        %v1498 = vmax.f32 %v1496, %v1497
        %v1499 = vrot.slane %v1498, 2
        %v1500 = vmax.f32 %v1498, %v1499
        %v1501 = vrot.slane %v1500, 1
        %v1502 = vmax.f32 %v1500, %v1501
        %v1503 = vsel %vm858, %v685, -inf
        %v1504 = vrot.slane %v1503, 4
        %v1505 = vmax.f32 %v1503, %v1504
        %v1506 = vrot.slane %v1505, 2
        %v1507 = vmax.f32 %v1505, %v1506
        %v1508 = vrot.slane %v1507, 1
        %v1509 = vmax.f32 %v1507, %v1508
        %v1510 = vsel %vm858, %v781, -inf
        %v1511 = vrot.slane %v1510, 4
        %v1512 = vmax.f32 %v1510, %v1511
        %v1513 = vrot.slane %v1512, 2
        %v1514 = vmax.f32 %v1512, %v1513
        %v1515 = vrot.slane %v1514, 1
        %v1516 = vmax.f32 %v1514, %v1515
        %v1517 = vsel %vm858, %v782, -inf
        %v1518 = vrot.slane %v1517, 4
        %v1519 = vmax.f32 %v1517, %v1518
        %v1520 = vrot.slane %v1519, 2
        %v1521 = vmax.f32 %v1519, %v1520
        %v1522 = vrot.slane %v1521, 1
        %v1523 = vmax.f32 %v1521, %v1522
        %v1524 = vsel %vm858, %v783, -inf
        %v1525 = vrot.slane %v1524, 4
        %v1526 = vmax.f32 %v1524, %v1525
        %v1527 = vrot.slane %v1526, 2
        %v1528 = vmax.f32 %v1526, %v1527
        %v1529 = vrot.slane %v1528, 1
        %v1530 = vmax.f32 %v1528, %v1529
        %v1531 = vsel %vm858, %v686, -inf
        %v1532 = vrot.slane %v1531, 4
        %v1533 = vmax.f32 %v1531, %v1532
        %v1534 = vrot.slane %v1533, 2
        %v1535 = vmax.f32 %v1533, %v1534
        %v1536 = vrot.slane %v1535, 1
        %v1537 = vmax.f32 %v1535, %v1536
        %v1538 = vsel %vm858, %v784, -inf
        %v1539 = vrot.slane %v1538, 4
        %v1540 = vmax.f32 %v1538, %v1539
        %v1541 = vrot.slane %v1540, 2
        %v1542 = vmax.f32 %v1540, %v1541
        %v1543 = vrot.slane %v1542, 1
        %v1544 = vmax.f32 %v1542, %v1543
        %vm1545 = vcmask 523264
        %v1546 = vsel %vm1545, %v865, -inf
        %v1547 = vsel %vm1545, %v914, -inf
        %v1548 = vmax.f32 %v1546, %v1547
        %v1549 = vsel %vm1545, %v872, -inf
        %v1550 = vsel %vm1545, %v921, -inf
        %v1551 = vmax.f32 %v1549, %v1550
        %v1552 = vsel %vm1545, %v879, -inf
        %v1553 = vsel %vm1545, %v928, -inf
        %v1554 = vmax.f32 %v1552, %v1553
        %v1555 = vsel %vm1545, %v886, -inf
        %v1556 = vsel %vm1545, %v935, -inf
        %v1557 = vmax.f32 %v1555, %v1556
        %v1558 = vsel %vm1545, %v893, -inf
        %v1559 = vsel %vm1545, %v942, -inf
        %v1560 = vmax.f32 %v1558, %v1559
        %v1561 = vsel %vm1545, %v900, -inf
        %v1562 = vsel %vm1545, %v949, -inf
        %v1563 = vmax.f32 %v1561, %v1562
        %v1564 = vsel %vm1545, %v907, -inf
        %v1565 = vsel %vm1545, %v956, -inf
        %v1566 = vmax.f32 %v1564, %v1565
        %v1567 = vsel %vm1545, %v963, -inf
        %v1568 = vsel %vm1545, %v1012, -inf
        %v1569 = vmax.f32 %v1567, %v1568
        %v1570 = vsel %vm1545, %v970, -inf
        %v1571 = vsel %vm1545, %v1019, -inf
        %v1572 = vmax.f32 %v1570, %v1571
        %v1573 = vsel %vm1545, %v977, -inf
        %v1574 = vsel %vm1545, %v1026, -inf
        %v1575 = vmax.f32 %v1573, %v1574
        %v1576 = vsel %vm1545, %v984, -inf
        %v1577 = vsel %vm1545, %v1033, -inf
        %v1578 = vmax.f32 %v1576, %v1577
        %v1579 = vsel %vm1545, %v991, -inf
        %v1580 = vsel %vm1545, %v1040, -inf
        %v1581 = vmax.f32 %v1579, %v1580
        %v1582 = vsel %vm1545, %v998, -inf
        %v1583 = vsel %vm1545, %v1047, -inf
        %v1584 = vmax.f32 %v1582, %v1583
        %v1585 = vsel %vm1545, %v1005, -inf
        %v1586 = vsel %vm1545, %v1054, -inf
        %v1587 = vmax.f32 %v1585, %v1586
        %v1588 = vsel %vm1545, %v1061, -inf
        %v1589 = vsel %vm1545, %v1110, -inf
        %v1590 = vmax.f32 %v1588, %v1589
        %v1591 = vsel %vm1545, %v1068, -inf
        %v1592 = vsel %vm1545, %v1117, -inf
        %v1593 = vmax.f32 %v1591, %v1592
        %v1594 = vsel %vm1545, %v1075, -inf
        %v1595 = vsel %vm1545, %v1124, -inf
        %v1596 = vmax.f32 %v1594, %v1595
        %v1597 = vsel %vm1545, %v1082, -inf
        %v1598 = vsel %vm1545, %v1131, -inf
        %v1599 = vmax.f32 %v1597, %v1598
        %v1600 = vsel %vm1545, %v1089, -inf
        %v1601 = vsel %vm1545, %v1138, -inf
        %v1602 = vmax.f32 %v1600, %v1601
        %v1603 = vsel %vm1545, %v1096, -inf
        %v1604 = vsel %vm1545, %v1145, -inf
        %v1605 = vmax.f32 %v1603, %v1604
        %v1606 = vsel %vm1545, %v1103, -inf
        %v1607 = vsel %vm1545, %v1152, -inf
        %v1608 = vmax.f32 %v1606, %v1607
        %v1609 = vsel %vm1545, %v1159, -inf
        %v1610 = vsel %vm1545, %v1208, -inf
        %v1611 = vmax.f32 %v1609, %v1610
        %v1612 = vsel %vm1545, %v1166, -inf
        %v1613 = vsel %vm1545, %v1215, -inf
        %v1614 = vmax.f32 %v1612, %v1613
        %v1615 = vsel %vm1545, %v1173, -inf
        %v1616 = vsel %vm1545, %v1222, -inf
        %v1617 = vmax.f32 %v1615, %v1616
        %v1618 = vsel %vm1545, %v1180, -inf
        %v1619 = vsel %vm1545, %v1229, -inf
        %v1620 = vmax.f32 %v1618, %v1619
        %v1621 = vsel %vm1545, %v1187, -inf
        %v1622 = vsel %vm1545, %v1236, -inf
        %v1623 = vmax.f32 %v1621, %v1622
        %v1624 = vsel %vm1545, %v1194, -inf
        %v1625 = vsel %vm1545, %v1243, -inf
        %v1626 = vmax.f32 %v1624, %v1625
        %v1627 = vsel %vm1545, %v1201, -inf
        %v1628 = vsel %vm1545, %v1250, -inf
        %v1629 = vmax.f32 %v1627, %v1628
        %v1630 = vsel %vm1545, %v1257, -inf
        %v1631 = vsel %vm1545, %v1306, -inf
        %v1632 = vmax.f32 %v1630, %v1631
        %v1633 = vsel %vm1545, %v1264, -inf
        %v1634 = vsel %vm1545, %v1313, -inf
        %v1635 = vmax.f32 %v1633, %v1634
        %v1636 = vsel %vm1545, %v1271, -inf
        %v1637 = vsel %vm1545, %v1320, -inf
        %v1638 = vmax.f32 %v1636, %v1637
        %v1639 = vsel %vm1545, %v1278, -inf
        %v1640 = vsel %vm1545, %v1327, -inf
        %v1641 = vmax.f32 %v1639, %v1640
        %v1642 = vsel %vm1545, %v1285, -inf
        %v1643 = vsel %vm1545, %v1334, -inf
        %v1644 = vmax.f32 %v1642, %v1643
        %v1645 = vsel %vm1545, %v1292, -inf
        %v1646 = vsel %vm1545, %v1341, -inf
        %v1647 = vmax.f32 %v1645, %v1646
        %v1648 = vsel %vm1545, %v1299, -inf
        %v1649 = vsel %vm1545, %v1348, -inf
        %v1650 = vmax.f32 %v1648, %v1649
        %v1651 = vsel %vm1545, %v1355, -inf
        %v1652 = vsel %vm1545, %v1404, -inf
        %v1653 = vmax.f32 %v1651, %v1652
        %v1654 = vsel %vm1545, %v1362, -inf
        %v1655 = vsel %vm1545, %v1411, -inf
        %v1656 = vmax.f32 %v1654, %v1655
        %v1657 = vsel %vm1545, %v1369, -inf
        %v1658 = vsel %vm1545, %v1418, -inf
        %v1659 = vmax.f32 %v1657, %v1658
        %v1660 = vsel %vm1545, %v1376, -inf
        %v1661 = vsel %vm1545, %v1425, -inf
        %v1662 = vmax.f32 %v1660, %v1661
        %v1663 = vsel %vm1545, %v1383, -inf
        %v1664 = vsel %vm1545, %v1432, -inf
        %v1665 = vmax.f32 %v1663, %v1664
        %v1666 = vsel %vm1545, %v1390, -inf
        %v1667 = vsel %vm1545, %v1439, -inf
        %v1668 = vmax.f32 %v1666, %v1667
        %v1669 = vsel %vm1545, %v1397, -inf
        %v1670 = vsel %vm1545, %v1446, -inf
        %v1671 = vmax.f32 %v1669, %v1670
        %v1672 = vsel %vm1545, %v1453, -inf
        %v1673 = vsel %vm1545, %v1502, -inf
        %v1674 = vmax.f32 %v1672, %v1673
        %v1675 = vsel %vm1545, %v1460, -inf
        %v1676 = vsel %vm1545, %v1509, -inf
        %v1677 = vmax.f32 %v1675, %v1676
        %v1678 = vsel %vm1545, %v1467, -inf
        %v1679 = vsel %vm1545, %v1516, -inf
        %v1680 = vmax.f32 %v1678, %v1679
        %v1681 = vsel %vm1545, %v1474, -inf
        %v1682 = vsel %vm1545, %v1523, -inf
        %v1683 = vmax.f32 %v1681, %v1682
        %v1684 = vsel %vm1545, %v1481, -inf
        %v1685 = vsel %vm1545, %v1530, -inf
        %v1686 = vmax.f32 %v1684, %v1685
        %v1687 = vsel %vm1545, %v1488, -inf
        %v1688 = vsel %vm1545, %v1537, -inf
        %v1689 = vmax.f32 %v1687, %v1688
        %v1690 = vsel %vm1545, %v1495, -inf
        %v1691 = vsel %vm1545, %v1544, -inf
        %v1692 = vmax.f32 %v1690, %v1691
        %v1693 = vpack.c.bf16 %v1548, %v1548
        %v1694 = vpack.c.bf16 %v1551, %v1551
        %v1695 = vpack.c.bf16 %v1554, %v1554
        %v1696 = vpack.c.bf16 %v1557, %v1557
        %v1697 = vpack.c.bf16 %v1560, %v1560
        %v1698 = vpack.c.bf16 %v1563, %v1563
        %v1699 = vpack.c.bf16 %v1566, %v1566
        %v1700 = vpack.c.bf16 %v1569, %v1569
        %v1701 = vpack.c.bf16 %v1572, %v1572
        %v1702 = vpack.c.bf16 %v1575, %v1575
        %v1703 = vpack.c.bf16 %v1578, %v1578
        %v1704 = vpack.c.bf16 %v1581, %v1581
        %v1705 = vpack.c.bf16 %v1584, %v1584
        %v1706 = vpack.c.bf16 %v1587, %v1587
        %v1707 = vpack.c.bf16 %v1590, %v1590
        %v1708 = vpack.c.bf16 %v1593, %v1593
        %v1709 = vpack.c.bf16 %v1596, %v1596
        %v1710 = vpack.c.bf16 %v1599, %v1599
        %v1711 = vpack.c.bf16 %v1602, %v1602
        %v1712 = vpack.c.bf16 %v1605, %v1605
        %v1713 = vpack.c.bf16 %v1608, %v1608
        %v1714 = vpack.c.bf16 %v1611, %v1611
        %v1715 = vpack.c.bf16 %v1614, %v1614
        %v1716 = vpack.c.bf16 %v1617, %v1617
        %v1717 = vpack.c.bf16 %v1620, %v1620
        %v1718 = vpack.c.bf16 %v1623, %v1623
        %v1719 = vpack.c.bf16 %v1626, %v1626
        %v1720 = vpack.c.bf16 %v1629, %v1629
        %v1721 = vpack.c.bf16 %v1632, %v1632
        %v1722 = vpack.c.bf16 %v1635, %v1635
        %v1723 = vpack.c.bf16 %v1638, %v1638
        %v1724 = vpack.c.bf16 %v1641, %v1641
        %v1725 = vpack.c.bf16 %v1644, %v1644
        %v1726 = vpack.c.bf16 %v1647, %v1647
        %v1727 = vpack.c.bf16 %v1650, %v1650
        %v1728 = vpack.c.bf16 %v1653, %v1653
        %v1729 = vpack.c.bf16 %v1656, %v1656
        %v1730 = vpack.c.bf16 %v1659, %v1659
        %v1731 = vpack.c.bf16 %v1662, %v1662
        %v1732 = vpack.c.bf16 %v1665, %v1665
        %v1733 = vpack.c.bf16 %v1668, %v1668
        %v1734 = vpack.c.bf16 %v1671, %v1671
        %v1735 = vpack.c.bf16 %v1674, %v1674
        %v1736 = vpack.c.bf16 %v1677, %v1677
        %v1737 = vpack.c.bf16 %v1680, %v1680
        %v1738 = vpack.c.bf16 %v1683, %v1683
        %v1739 = vpack.c.bf16 %v1686, %v1686
        %v1740 = vpack.c.bf16 %v1689, %v1689
        %v1741 = vpack.c.bf16 %v1692, %v1692
        %v1767 = vperm.slane %v1693, 0
        %v1768 = vperm.slane %v1694, 0
        %v1769 = vperm.slane %v1695, 0
        %v1770 = vperm.slane %v1696, 0
        %v1771 = vperm.slane %v1697, 0
        %v1772 = vperm.slane %v1700, 0
        %v1773 = vperm.slane %v1701, 0
        %v1774 = vperm.slane %v1702, 0
        %v1775 = vperm.slane %v1703, 0
        %v1776 = vperm.slane %v1704, 0
        %v1777 = vperm.slane %v1707, 0
        %v1778 = vperm.slane %v1708, 0
        %v1779 = vperm.slane %v1709, 0
        %v1780 = vperm.slane %v1710, 0
        %v1781 = vperm.slane %v1711, 0
        %v1782 = vperm.slane %v1714, 0
        %v1783 = vperm.slane %v1715, 0
        %v1784 = vperm.slane %v1716, 0
        %v1785 = vperm.slane %v1717, 0
        %v1786 = vperm.slane %v1718, 0
        %v1787 = vperm.slane %v1721, 0
        %v1788 = vperm.slane %v1722, 0
        %v1789 = vperm.slane %v1723, 0
        %v1790 = vperm.slane %v1724, 0
        %v1791 = vperm.slane %v1725, 0
        %v1792 = vunpack.c.l.b16 %v1767
        %v1793 = vunpack.c.l.b16 %v1768
        %v1794 = vunpack.c.l.b16 %v1769
        %v1795 = vunpack.c.l.b16 %v1770
        %v1796 = vunpack.c.l.b16 %v1771
        %v1797 = vunpack.c.l.b16 %v1772
        %v1798 = vunpack.c.l.b16 %v1773
        %v1799 = vunpack.c.l.b16 %v1774
        %v1800 = vunpack.c.l.b16 %v1775
        %v1801 = vunpack.c.l.b16 %v1776
        %v1802 = vunpack.c.l.b16 %v1777
        %v1803 = vunpack.c.l.b16 %v1778
        %v1804 = vunpack.c.l.b16 %v1779
        %v1805 = vunpack.c.l.b16 %v1780
        %v1806 = vunpack.c.l.b16 %v1781
        %v1807 = vunpack.c.l.b16 %v1782
        %v1808 = vunpack.c.l.b16 %v1783
        %v1809 = vunpack.c.l.b16 %v1784
        %v1810 = vunpack.c.l.b16 %v1785
        %v1811 = vunpack.c.l.b16 %v1786
        %v1812 = vunpack.c.l.b16 %v1787
        %v1813 = vunpack.c.l.b16 %v1788
        %v1814 = vunpack.c.l.b16 %v1789
        %v1815 = vunpack.c.l.b16 %v1790
        %v1816 = vunpack.c.l.b16 %v1791
        %vm1817 = vcmask 1041409
        %v1818 = vsel %vm1817, %v1793, %v1792
        %vm1819 = vcmask 1042434
        %v1820 = vsel %vm1819, %v1794, %v1818
        %vm1821 = vcmask 1043459
        %v1822 = vsel %vm1821, %v1795, %v1820
        %vm1823 = vcmask 1044484
        %v1824 = vsel %vm1823, %v1796, %v1822
        %v1825 = vsel %vm1817, %v1798, %v1797
        %v1826 = vsel %vm1819, %v1799, %v1825
        %v1827 = vsel %vm1821, %v1800, %v1826
        %v1828 = vsel %vm1823, %v1801, %v1827
        %v1829 = vsel %vm1817, %v1803, %v1802
        %v1830 = vsel %vm1819, %v1804, %v1829
        %v1831 = vsel %vm1821, %v1805, %v1830
        %v1832 = vsel %vm1823, %v1806, %v1831
        %v1833 = vsel %vm1817, %v1808, %v1807
        %v1834 = vsel %vm1819, %v1809, %v1833
        %v1835 = vsel %vm1821, %v1810, %v1834
        %v1836 = vsel %vm1823, %v1811, %v1835
        %v1837 = vsel %vm1817, %v1813, %v1812
        %v1838 = vsel %vm1819, %v1814, %v1837
        %v1839 = vsel %vm1821, %v1815, %v1838
        %v1840 = vsel %vm1823, %v1816, %v1839
        %v1841 = vpack.c.b16 %v1824, %v1824
        %v1842 = vpack.c.b16 %v1828, %v1828
        %v1843 = vpack.c.b16 %v1832, %v1832
        %v1844 = vpack.c.b16 %v1836, %v1836
        %v1845 = vpack.c.b16 %v1840, %v1840
        %v1851 = vperm.slane %v1698, 0
        %v1852 = vperm.slane %v1705, 0
        %v1853 = vperm.slane %v1712, 0
        %v1854 = vperm.slane %v1719, 0
        %v1855 = vperm.slane %v1726, 0
        %v1856 = vunpack.c.l.b16 %v1851
        %v1857 = vunpack.c.l.b16 %v1852
        %v1858 = vunpack.c.l.b16 %v1853
        %v1859 = vunpack.c.l.b16 %v1854
        %v1860 = vunpack.c.l.b16 %v1855
        %v1861 = vsel %vm1817, %v1794, %v1793
        %v1862 = vsel %vm1819, %v1795, %v1861
        %v1863 = vsel %vm1821, %v1796, %v1862
        %v1864 = vsel %vm1823, %v1856, %v1863
        %v1865 = vsel %vm1817, %v1799, %v1798
        %v1866 = vsel %vm1819, %v1800, %v1865
        %v1867 = vsel %vm1821, %v1801, %v1866
        %v1868 = vsel %vm1823, %v1857, %v1867
        %v1869 = vsel %vm1817, %v1804, %v1803
        %v1870 = vsel %vm1819, %v1805, %v1869
        %v1871 = vsel %vm1821, %v1806, %v1870
        %v1872 = vsel %vm1823, %v1858, %v1871
        %v1873 = vsel %vm1817, %v1809, %v1808
        %v1874 = vsel %vm1819, %v1810, %v1873
        %v1875 = vsel %vm1821, %v1811, %v1874
        %v1876 = vsel %vm1823, %v1859, %v1875
        %v1877 = vsel %vm1817, %v1814, %v1813
        %v1878 = vsel %vm1819, %v1815, %v1877
        %v1879 = vsel %vm1821, %v1816, %v1878
        %v1880 = vsel %vm1823, %v1860, %v1879
        %v1881 = vpack.c.b16 %v1864, %v1864
        %v1882 = vpack.c.b16 %v1868, %v1868
        %v1883 = vpack.c.b16 %v1872, %v1872
        %v1884 = vpack.c.b16 %v1876, %v1876
        %v1885 = vpack.c.b16 %v1880, %v1880
        %1886 = vrot.lane.b32.xlu0 %v1881, 64
        %v1887 = vpop.permute.xlu0 %1886
        %1888 = vrot.lane.b32.xlu0 %v1882, 64
        %v1889 = vpop.permute.xlu0 %1888
        %1890 = vrot.lane.b32.xlu0 %v1883, 64
        %v1891 = vpop.permute.xlu0 %1890
        %1892 = vrot.lane.b32.xlu0 %v1884, 64
        %v1893 = vpop.permute.xlu0 %1892
        %1894 = vrot.lane.b32.xlu0 %v1885, 64
        %v1895 = vpop.permute.xlu0 %1894
        %v1901 = vperm.slane %v1699, 0
        %v1902 = vperm.slane %v1706, 0
        %v1903 = vperm.slane %v1713, 0
        %v1904 = vperm.slane %v1720, 0
        %v1905 = vperm.slane %v1727, 0
        %v1906 = vunpack.c.l.b16 %v1901
        %v1907 = vunpack.c.l.b16 %v1902
        %v1908 = vunpack.c.l.b16 %v1903
        %v1909 = vunpack.c.l.b16 %v1904
        %v1910 = vunpack.c.l.b16 %v1905
        %v1911 = vsel %vm1817, %v1795, %v1794
        %v1912 = vsel %vm1819, %v1796, %v1911
        %v1913 = vsel %vm1821, %v1856, %v1912
        %v1914 = vsel %vm1823, %v1906, %v1913
        %v1915 = vsel %vm1817, %v1800, %v1799
        %v1916 = vsel %vm1819, %v1801, %v1915
        %v1917 = vsel %vm1821, %v1857, %v1916
        %v1918 = vsel %vm1823, %v1907, %v1917
        %v1919 = vsel %vm1817, %v1805, %v1804
        %v1920 = vsel %vm1819, %v1806, %v1919
        %v1921 = vsel %vm1821, %v1858, %v1920
        %v1922 = vsel %vm1823, %v1908, %v1921
        %v1923 = vsel %vm1817, %v1810, %v1809
        %v1924 = vsel %vm1819, %v1811, %v1923
        %v1925 = vsel %vm1821, %v1859, %v1924
        %v1926 = vsel %vm1823, %v1909, %v1925
        %v1927 = vsel %vm1817, %v1815, %v1814
        %v1928 = vsel %vm1819, %v1816, %v1927
        %v1929 = vsel %vm1821, %v1860, %v1928
        %v1930 = vsel %vm1823, %v1910, %v1929
        %v1931 = vpack.c.b16 %v1914, %v1914
        %v1932 = vpack.c.b16 %v1918, %v1918
        %v1933 = vpack.c.b16 %v1922, %v1922
        %v1934 = vpack.c.b16 %v1926, %v1926
        %v1935 = vpack.c.b16 %v1930, %v1930
        %v1941 = vperm.slane %v1728, 0
        %v1942 = vperm.slane %v1729, 0
        %v1943 = vperm.slane %v1730, 0
        %v1944 = vperm.slane %v1731, 0
        %v1945 = vperm.slane %v1732, 0
        %v1946 = vunpack.c.l.b16 %v1941
        %v1947 = vunpack.c.l.b16 %v1942
        %v1948 = vunpack.c.l.b16 %v1943
        %v1949 = vunpack.c.l.b16 %v1944
        %v1950 = vunpack.c.l.b16 %v1945
        %v1951 = vsel %vm1817, %v1947, %v1946
        %v1952 = vsel %vm1819, %v1948, %v1951
        %v1953 = vsel %vm1821, %v1949, %v1952
        %v1954 = vsel %vm1823, %v1950, %v1953
        %v1955 = vpack.c.b16 %v1954, %v1954
        %1956 = vrot.lane.b32.xlu0 %v1842, 64
        %v1957 = vpop.permute.xlu0 %1956
        %1958 = vrot.lane.b32.xlu0 %v1843, 64
        %v1959 = vpop.permute.xlu0 %1958
        %1960 = vrot.lane.b32.xlu0 %v1844, 64
        %v1961 = vpop.permute.xlu0 %1960
        %1962 = vrot.lane.b32.xlu0 %v1845, 64
        %v1963 = vpop.permute.xlu0 %1962
        %1964 = vrot.lane.b32.xlu0 %v1955, 64
        %v1965 = vpop.permute.xlu0 %1964
        %v1967 = vperm.slane %v1733, 0
        %v1968 = vunpack.c.l.b16 %v1967
        %v1969 = vsel %vm1817, %v1948, %v1947
        %v1970 = vsel %vm1819, %v1949, %v1969
        %v1971 = vsel %vm1821, %v1950, %v1970
        %v1972 = vsel %vm1823, %v1968, %v1971
        %v1973 = vpack.c.b16 %v1972, %v1972
        %v1975 = vperm.slane %v1734, 0
        %v1976 = vunpack.c.l.b16 %v1975
        %v1977 = vsel %vm1817, %v1949, %v1948
        %v1978 = vsel %vm1819, %v1950, %v1977
        %v1979 = vsel %vm1821, %v1968, %v1978
        %v1980 = vsel %vm1823, %v1976, %v1979
        %v1981 = vpack.c.b16 %v1980, %v1980
        %1982 = vrot.lane.b32.xlu0 %v1932, 64
        %v1983 = vpop.permute.xlu0 %1982
        %1984 = vrot.lane.b32.xlu0 %v1933, 64
        %v1985 = vpop.permute.xlu0 %1984
        %1986 = vrot.lane.b32.xlu0 %v1934, 64
        %v1987 = vpop.permute.xlu0 %1986
        %1988 = vrot.lane.b32.xlu0 %v1935, 64
        %v1989 = vpop.permute.xlu0 %1988
        %1990 = vrot.lane.b32.xlu0 %v1981, 64
        %v1991 = vpop.permute.xlu0 %1990
        %v1997 = vperm.slane %v1735, 0
        %v1998 = vperm.slane %v1736, 0
        %v1999 = vperm.slane %v1737, 0
        %v2000 = vperm.slane %v1738, 0
        %v2001 = vperm.slane %v1739, 0
        %v2002 = vunpack.c.l.b16 %v1997
        %v2003 = vunpack.c.l.b16 %v1998
        %v2004 = vunpack.c.l.b16 %v1999
        %v2005 = vunpack.c.l.b16 %v2000
        %v2006 = vunpack.c.l.b16 %v2001
        %v2007 = vsel %vm1817, %v2003, %v2002
        %v2008 = vsel %vm1819, %v2004, %v2007
        %v2009 = vsel %vm1821, %v2005, %v2008
        %v2010 = vsel %vm1823, %v2006, %v2009
        %v2011 = vpack.c.b16 %v2010, %v2010
        %v2013 = vperm.slane %v1740, 0
        %v2014 = vunpack.c.l.b16 %v2013
        %v2015 = vsel %vm1817, %v2004, %v2003
        %v2016 = vsel %vm1819, %v2005, %v2015
        %v2017 = vsel %vm1821, %v2006, %v2016
        %v2018 = vsel %vm1823, %v2014, %v2017
        %v2019 = vpack.c.b16 %v2018, %v2018
        %2020 = vrot.lane.b32.xlu0 %v1973, 64
        %v2021 = vpop.permute.xlu0 %2020
        %2022 = vrot.lane.b32.xlu0 %v2019, 64
        %v2023 = vpop.permute.xlu0 %2022
        %v2025 = vperm.slane %v1741, 0
        %v2026 = vunpack.c.l.b16 %v2025
        %v2027 = vsel %vm1817, %v2005, %v2004
        %v2028 = vsel %vm1819, %v2006, %v2027
        %v2029 = vsel %vm1821, %v2014, %v2028
        %v2030 = vsel %vm1823, %v2026, %v2029
        %v2031 = vpack.c.b16 %v2030, %v2030
        %v2034 = vsel %vm1545, %v1841, %v1887
        %v2037 = vsel %vm1545, %v1842, %v1889
        %v2040 = vsel %vm1545, %v1843, %v1891
        %v2043 = vsel %vm1545, %v1844, %v1893
        %v2046 = vsel %vm1545, %v1845, %v1895
        %v2049 = vsel %vm1545, %v1931, %v1957
        %v2052 = vsel %vm1545, %v1932, %v1959
        %v2055 = vsel %vm1545, %v1933, %v1961
        %v2058 = vsel %vm1545, %v1934, %v1963
        %v2061 = vsel %vm1545, %v1935, %v1965
        %v2064 = vsel %vm1545, %v1882, %v1983
        %v2067 = vsel %vm1545, %v1883, %v1985
        %v2070 = vsel %vm1545, %v1884, %v1987
        %v2073 = vsel %vm1545, %v1885, %v1989
        %v2076 = vsel %vm1545, %v1973, %v1991
        %v2079 = vsel %vm1545, %v1955, %v2021
        %v2082 = vsel %vm1545, %v2011, %v2023
        %v2098 = vrot.slane %v2049, 7
        %v2099 = vrot.slane %v2064, 6
        %v2100 = vrot.slane %v2040, 5
        %v2101 = vrot.slane %v1933, 4
        %v2102 = vrot.slane %v2052, 7
        %v2103 = vrot.slane %v2067, 6
        %v2104 = vrot.slane %v2043, 5
        %v2105 = vrot.slane %v1934, 4
        %v2106 = vrot.slane %v2055, 7
        %v2107 = vrot.slane %v2070, 6
        %v2108 = vrot.slane %v2046, 5
        %v2109 = vrot.slane %v1935, 4
        %v2110 = vrot.slane %v2058, 7
        %v2111 = vrot.slane %v2073, 6
        %v2112 = vrot.slane %v2079, 5
        %v2113 = vrot.slane %v1981, 4
        %v2114 = vrot.slane %v2061, 7
        %v2115 = vrot.slane %v2076, 6
        %v2116 = vrot.slane %v2082, 5
        %v2117 = vrot.slane %v2031, 4
        %vm2118 = vcmask 1040384
        %v2120 = vsel %vm2118, %v2034, %v2098
        %vm2121 = vcmask 1041408
        %v2123 = vsel %vm2121, %v2120, %v2099
        %v2126 = vsel %vm1821, %v2100, %v2101
        %vm2127 = vcmask 1042432
        %v2128 = vsel %vm2127, %v2123, %v2126
        %v2130 = vsel %vm1817, %v2034, %v2098
        %vm2131 = vcmask 1042433
        %v2132 = vsel %vm2131, %v2130, %v2099
        %v2133 = vsel %vm1823, %v2100, %v2101
        %vm2134 = vcmask 1043457
        %v2135 = vsel %vm2134, %v2132, %v2133
        %v2137 = vrot.slane %v2135, 1
        %v2138 = vsel %vm1819, %v2034, %v2098
        %vm2139 = vcmask 1043458
        %v2140 = vsel %vm2139, %v2138, %v2099
        %vm2141 = vcmask 1045509
        %v2142 = vsel %vm2141, %v2100, %v2101
        %vm2143 = vcmask 1044482
        %v2144 = vsel %vm2143, %v2140, %v2142
        %v2146 = vrot.slane %v2144, 2
        %v2148 = vsel %vm2118, %v2037, %v2102
        %v2150 = vsel %vm2121, %v2148, %v2103
        %v2153 = vsel %vm1821, %v2104, %v2105
        %v2154 = vsel %vm2127, %v2150, %v2153
        %v2156 = vsel %vm1817, %v2037, %v2102
        %v2157 = vsel %vm2131, %v2156, %v2103
        %v2158 = vsel %vm1823, %v2104, %v2105
        %v2159 = vsel %vm2134, %v2157, %v2158
        %v2161 = vrot.slane %v2159, 1
        %v2162 = vsel %vm1819, %v2037, %v2102
        %v2163 = vsel %vm2139, %v2162, %v2103
        %v2164 = vsel %vm2141, %v2104, %v2105
        %v2165 = vsel %vm2143, %v2163, %v2164
        %v2167 = vrot.slane %v2165, 2
        %v2169 = vsel %vm2118, %v2040, %v2106
        %v2171 = vsel %vm2121, %v2169, %v2107
        %v2174 = vsel %vm1821, %v2108, %v2109
        %v2175 = vsel %vm2127, %v2171, %v2174
        %v2177 = vsel %vm1817, %v2040, %v2106
        %v2178 = vsel %vm2131, %v2177, %v2107
        %v2179 = vsel %vm1823, %v2108, %v2109
        %v2180 = vsel %vm2134, %v2178, %v2179
        %v2182 = vrot.slane %v2180, 1
        %v2183 = vsel %vm1819, %v2040, %v2106
        %v2184 = vsel %vm2139, %v2183, %v2107
        %v2185 = vsel %vm2141, %v2108, %v2109
        %v2186 = vsel %vm2143, %v2184, %v2185
        %v2188 = vrot.slane %v2186, 2
        %v2190 = vsel %vm2118, %v2043, %v2110
        %v2192 = vsel %vm2121, %v2190, %v2111
        %v2195 = vsel %vm1821, %v2112, %v2113
        %v2196 = vsel %vm2127, %v2192, %v2195
        %v2198 = vsel %vm1817, %v2043, %v2110
        %v2199 = vsel %vm2131, %v2198, %v2111
        %v2200 = vsel %vm1823, %v2112, %v2113
        %v2201 = vsel %vm2134, %v2199, %v2200
        %v2203 = vrot.slane %v2201, 1
        %v2204 = vsel %vm1819, %v2043, %v2110
        %v2205 = vsel %vm2139, %v2204, %v2111
        %v2206 = vsel %vm2141, %v2112, %v2113
        %v2207 = vsel %vm2143, %v2205, %v2206
        %v2209 = vrot.slane %v2207, 2
        %v2211 = vsel %vm2118, %v2046, %v2114
        %v2213 = vsel %vm2121, %v2211, %v2115
        %v2216 = vsel %vm1821, %v2116, %v2117
        %v2217 = vsel %vm2127, %v2213, %v2216
        %v2219 = vsel %vm1817, %v2046, %v2114
        %v2220 = vsel %vm2131, %v2219, %v2115
        %v2221 = vsel %vm1823, %v2116, %v2117
        %v2222 = vsel %vm2134, %v2220, %v2221
        %v2224 = vrot.slane %v2222, 1
        %v2225 = vsel %vm1819, %v2046, %v2114
        %v2226 = vsel %vm2139, %v2225, %v2115
        %v2227 = vsel %vm2141, %v2116, %v2117
        %v2228 = vsel %vm2143, %v2226, %v2227
        %v2230 = vrot.slane %v2228, 2
        %v2231 = vunpack.i.l.s16 %v2128
        %v2232 = vunpack.i.h.s16 %v2128
        %v2233 = vunpack.i.l.s16 %v2137
        %v2234 = vunpack.i.h.s16 %v2137
        %v2235 = vunpack.i.l.s16 %v2146
        %v2236 = vunpack.i.l.s16 %v2154
        %v2237 = vunpack.i.h.s16 %v2154
        %v2238 = vunpack.i.l.s16 %v2161
        %v2239 = vunpack.i.h.s16 %v2161
        %v2240 = vunpack.i.l.s16 %v2167
        %v2241 = vunpack.i.l.s16 %v2175
        %v2242 = vunpack.i.h.s16 %v2175
        %v2243 = vunpack.i.l.s16 %v2182
        %v2244 = vunpack.i.h.s16 %v2182
        %v2245 = vunpack.i.l.s16 %v2188
        %v2246 = vunpack.i.l.s16 %v2196
        %v2247 = vunpack.i.h.s16 %v2196
        %v2248 = vunpack.i.l.s16 %v2203
        %v2249 = vunpack.i.h.s16 %v2203
        %v2250 = vunpack.i.l.s16 %v2209
        %v2251 = vunpack.i.l.s16 %v2217
        %v2252 = vunpack.i.h.s16 %v2217
        %v2253 = vunpack.i.l.s16 %v2224
        %v2254 = vunpack.i.h.s16 %v2224
        %v2255 = vunpack.i.l.s16 %v2230
        %v2256 = vld [vmem:[%s3] sm:$0xff]
        %v2257 = vld [vmem:[%s3 + $0x8] sm:$0xff]
        %v2258 = vld [vmem:[%s3 + $0x10] sm:$0xff]
        %v2259 = vld [vmem:[%s3 + $0x18] sm:$0xff]
        %v2260 = vld [vmem:[%s3 + $0x20] sm:$0xff]
        %v2261 = vld [vmem:[%s3 + $0x28] sm:$0xff]
        %v2262 = vld [vmem:[%s3 + $0x30] sm:$0xff]
        %v2263 = vld [vmem:[%s3 + $0x38] sm:$0xff]
        %v2264 = vld [vmem:[%s3 + $0x40] sm:$0xff]
        %v2265 = vld [vmem:[%s3 + $0x48] sm:$0xff]
        %v2266 = vld [vmem:[%s3 + $0x50] sm:$0xff]
        %v2267 = vld [vmem:[%s3 + $0x58] sm:$0xff]
        %v2268 = vld [vmem:[%s3 + $0x60] sm:$0xff]
        %v2269 = vld [vmem:[%s3 + $0x68] sm:$0xff]
        %v2270 = vld [vmem:[%s3 + $0x70] sm:$0xff]
        %v2271 = vld [vmem:[%s3 + $0x78] sm:$0xff]
        %v2272 = vld [vmem:[%s3 + $0x80] sm:$0xff]
        %v2273 = vld [vmem:[%s3 + $0x88] sm:$0xff]
        %v2274 = vld [vmem:[%s3 + $0x90] sm:$0xff]
        %v2275 = vld [vmem:[%s3 + $0x98] sm:$0xff]
        %v2276 = vld [vmem:[%s3 + $0xa0] sm:$0xff]
        %v2277 = vld [vmem:[%s3 + $0xa8] sm:$0xff]
        %v2278 = vld [vmem:[%s3 + $0xb0] sm:$0xff]
        %v2279 = vld [vmem:[%s3 + $0xb8] sm:$0xff]
        %v2280 = vld [vmem:[%s3 + $0xc0] sm:$0xff]
        %v2281 = vld [vmem:[%s3 + $0xc8] sm:$0xff]
        %v2282 = vld [vmem:[%s3 + $0xd0] sm:$0xff]
        %v2283 = vld [vmem:[%s3 + $0xd8] sm:$0xff]
        %v2284 = vld [vmem:[%s3 + $0xe0] sm:$0xff]
        %v2285 = vld [vmem:[%s3 + $0xe8] sm:$0xff]
        %v2286 = vld [vmem:[%s3 + $0xf0] sm:$0xff]
        %v2287 = vld [vmem:[%s3 + $0xf8] sm:$0xff]
        %v2288 = vld [vmem:[%s3 + $0x100] sm:$0xff]
        %v2289 = vld [vmem:[%s3 + $0x108] sm:$0xff]
        %v2290 = vld [vmem:[%s3 + $0x110] sm:$0xff]
        %v2291 = vld [vmem:[%s3 + $0x118] sm:$0xff]
        %v2292 = vld [vmem:[%s3 + $0x120] sm:$0xff]
        %v2293 = vld [vmem:[%s3 + $0x128] sm:$0xff]
        %v2294 = vld [vmem:[%s3 + $0x130] sm:$0xff]
        %v2295 = vld [vmem:[%s3 + $0x138] sm:$0xff]
        %v2296 = vld [vmem:[%s3 + $0x140] sm:$0xff]
        %v2297 = vld [vmem:[%s3 + $0x148] sm:$0xff]
        %v2298 = vld [vmem:[%s3 + $0x150] sm:$0xff]
        %v2299 = vld [vmem:[%s3 + $0x158] sm:$0xff]
        %v2300 = vld [vmem:[%s3 + $0x160] sm:$0xff]
        %v2301 = vld [vmem:[%s3 + $0x168] sm:$0xff]
        %v2302 = vld [vmem:[%s3 + $0x170] sm:$0xff]
        %v2303 = vld [vmem:[%s3 + $0x178] sm:$0xff]
        %v2304 = vld [vmem:[%s3 + $0x180] sm:$0xff]
        %v2305 = vld [vmem:[%s3 + $0x188] sm:$0xff]
        %v2306 = vld [vmem:[%s3 + $0x190] sm:$0xff]
        %v2307 = vld [vmem:[%s3 + $0x198] sm:$0xff]
        %v2308 = vld [vmem:[%s3 + $0x1a0] sm:$0xff]
        %v2309 = vld [vmem:[%s3 + $0x1a8] sm:$0xff]
        %v2310 = vld [vmem:[%s3 + $0x1b0] sm:$0xff]
        %v2311 = vld [vmem:[%s3 + $0x1b8] sm:$0xff]
        %v2312 = vld [vmem:[%s3 + $0x1c0] sm:$0xff]
        %v2313 = vld [vmem:[%s3 + $0x1c8] sm:$0xff]
        %v2314 = vld [vmem:[%s3 + $0x1d0] sm:$0xff]
        %v2315 = vld [vmem:[%s3 + $0x1d8] sm:$0xff]
        %v2316 = vld [vmem:[%s3 + $0x1e0] sm:$0xff]
        %v2317 = vld [vmem:[%s3 + $0x1e8] sm:$0xff]
        %v2318 = vld [vmem:[%s3 + $0x1f0] sm:$0xff]
        %v2319 = vld [vmem:[%s3 + $0x1f8] sm:$0xff]
        %v2320 = vld [vmem:[%s3 + $0x200] sm:$0xff]
        %v2321 = vld [vmem:[%s3 + $0x208] sm:$0xff]
        %v2322 = vld [vmem:[%s3 + $0x210] sm:$0xff]
        %v2323 = vld [vmem:[%s3 + $0x218] sm:$0xff]
        %v2324 = vld [vmem:[%s3 + $0x220] sm:$0xff]
        %v2325 = vld [vmem:[%s3 + $0x228] sm:$0xff]
        %v2326 = vld [vmem:[%s3 + $0x230] sm:$0xff]
        %v2327 = vld [vmem:[%s3 + $0x238] sm:$0xff]
        %v2328 = vld [vmem:[%s4] ss:$4 sm:$0x3]
        %v2330 = vperm.slane %v2328, 0
        %v2331 = vperm.slane %v2328, 1
        %v2334 = vpack.i.b16 %v2232, %v2231
        %v2335 = vpack.i.b16 %v2234, %v2233
        %v2336 = vpack.i.b16 %v2236, %v2235
        %v2337 = vpack.i.b16 %v2238, %v2237
        %v2338 = vpack.i.b16 %v2240, %v2239
        %v2339 = vpack.i.b16 %v2242, %v2241
        %v2340 = vpack.i.b16 %v2244, %v2243
        %v2341 = vpack.i.b16 %v2246, %v2245
        %v2342 = vpack.i.b16 %v2248, %v2247
        %v2343 = vpack.i.b16 %v2250, %v2249
        %v2344 = vpack.i.b16 %v2252, %v2251
        %v2345 = vpack.i.b16 %v2254, %v2253
        %2348 = vst [vmem:[#allocation1] ss:$9 sm:$0xff] %v2334
        %s2350 = scalar_lea.vmem [#allocation1], 1
        %2351 = vst [vmem:[%s2350] ss:$9 sm:$0xff] %v2335
        %s2353 = scalar_lea.vmem [#allocation1], 2
        %2354 = vst [vmem:[%s2353] ss:$9 sm:$0xff] %v2336
        %s2356 = scalar_lea.vmem [#allocation1], 3
        %2357 = vst [vmem:[%s2356] ss:$9 sm:$0xff] %v2337
        %s2359 = scalar_lea.vmem [#allocation1], 4
        %2360 = vst [vmem:[%s2359] ss:$9 sm:$0xff] %v2338
        %s2362 = scalar_lea.vmem [#allocation1], 5
        %2363 = vst [vmem:[%s2362] ss:$9 sm:$0xff] %v2339
        %s2365 = scalar_lea.vmem [#allocation1], 6
        %2366 = vst [vmem:[%s2365] ss:$9 sm:$0xff] %v2340
        %s2368 = scalar_lea.vmem [#allocation1], 7
        %2369 = vst [vmem:[%s2368] ss:$9 sm:$0xff] %v2341
        %v2370 = vld [vmem:[#allocation1] sm:$0xff]
        %v2371 = vld [vmem:[#allocation1 + $0x9] sm:$0xff]
        %v2372 = vld [vmem:[#allocation1 + $0x12] sm:$0xff]
        %v2373 = vld [vmem:[#allocation1 + $0x1b] sm:$0xff]
        %v2374 = vld [vmem:[#allocation1 + $0x24] sm:$0xff]
        %2376 = vst [vmem:[#allocation1] ss:$9 sm:$0xff] %v2342
        %2378 = vst [vmem:[%s2350] ss:$9 sm:$0xff] %v2343
        %2380 = vst [vmem:[%s2353] ss:$9 sm:$0xff] %v2344
        %2382 = vst [vmem:[%s2356] ss:$9 sm:$0xff] %v2345
        %2384 = vst [vmem:[%s2359] ss:$9 sm:$0xff] %v2255
        %v2385 = vld [vmem:[#allocation1] sm:$0xff]
        %v2386 = vld [vmem:[#allocation1 + $0x9] sm:$0xff]
        %v2387 = vld [vmem:[#allocation1 + $0x12] sm:$0xff]
        %v2388 = vld [vmem:[#allocation1 + $0x1b] sm:$0xff]
        %v2389 = vld [vmem:[#allocation1 + $0x24] sm:$0xff]
        %v2470 = vunpack.c.l.b16 %v2256
        %v2471 = vunpack.c.h.b16 %v2256
        %v2472 = vunpack.c.l.b16 %v2257
        %v2473 = vunpack.c.h.b16 %v2257
        %v2474 = vunpack.c.l.b16 %v2258
        %v2475 = vunpack.c.h.b16 %v2258
        %v2476 = vunpack.c.l.b16 %v2259
        %v2477 = vunpack.c.h.b16 %v2259
        %v2478 = vunpack.c.l.b16 %v2260
        %v2479 = vunpack.c.h.b16 %v2260
        %v2480 = vunpack.c.l.b16 %v2261
        %v2481 = vunpack.c.h.b16 %v2261
        %v2482 = vunpack.c.l.b16 %v2262
        %v2483 = vunpack.c.h.b16 %v2262
        %v2484 = vunpack.c.l.b16 %v2263
        %v2485 = vunpack.c.h.b16 %v2263
        %v2486 = vunpack.c.l.b16 %v2264
        %v2487 = vunpack.c.h.b16 %v2264
        %v2488 = vunpack.c.l.b16 %v2265
        %v2489 = vunpack.c.h.b16 %v2265
        %v2490 = vunpack.c.l.b16 %v2266
        %v2491 = vunpack.c.h.b16 %v2266
        %v2492 = vunpack.c.l.b16 %v2267
        %v2493 = vunpack.c.h.b16 %v2267
        %v2494 = vunpack.c.l.b16 %v2268
        %v2495 = vunpack.c.h.b16 %v2268
        %v2496 = vunpack.c.l.b16 %v2269
        %v2497 = vunpack.c.h.b16 %v2269
        %v2498 = vunpack.c.l.b16 %v2270
        %v2499 = vunpack.c.h.b16 %v2270
        %v2500 = vunpack.c.l.b16 %v2271
        %v2501 = vunpack.c.h.b16 %v2271
        %v2502 = vunpack.c.l.b16 %v2272
        %v2503 = vunpack.c.h.b16 %v2272
        %v2504 = vunpack.c.l.b16 %v2273
        %v2505 = vunpack.c.h.b16 %v2273
        %v2506 = vunpack.c.l.b16 %v2274
        %v2507 = vunpack.c.h.b16 %v2274
        %v2508 = vunpack.c.l.b16 %v2275
        %v2509 = vunpack.c.h.b16 %v2275
        %v2510 = vunpack.c.l.b16 %v2276
        %v2511 = vunpack.c.h.b16 %v2276
        %v2512 = vunpack.c.l.b16 %v2277
        %v2513 = vunpack.c.h.b16 %v2277
        %v2514 = vunpack.c.l.b16 %v2278
        %v2515 = vunpack.c.h.b16 %v2278
        %v2516 = vunpack.c.l.b16 %v2279
        %v2517 = vunpack.c.h.b16 %v2279
        %v2518 = vunpack.c.l.b16 %v2280
        %v2519 = vunpack.c.h.b16 %v2280
        %v2520 = vunpack.c.l.b16 %v2281
        %v2521 = vunpack.c.h.b16 %v2281
        %v2522 = vunpack.c.l.b16 %v2282
        %v2523 = vunpack.c.h.b16 %v2282
        %v2524 = vunpack.c.l.b16 %v2283
        %v2525 = vunpack.c.h.b16 %v2283
        %v2526 = vunpack.c.l.b16 %v2284
        %v2527 = vunpack.c.h.b16 %v2284
        %v2528 = vunpack.c.l.b16 %v2285
        %v2529 = vunpack.c.h.b16 %v2285
        %v2530 = vunpack.c.l.b16 %v2286
        %v2531 = vunpack.c.h.b16 %v2286
        %v2532 = vunpack.c.l.b16 %v2287
        %v2533 = vunpack.c.h.b16 %v2287
        %v2534 = vunpack.c.l.b16 %v2288
        %v2535 = vunpack.c.h.b16 %v2288
        %v2536 = vunpack.c.l.b16 %v2289
        %v2537 = vunpack.c.h.b16 %v2289
        %v2538 = vunpack.c.l.b16 %v2290
        %v2539 = vunpack.c.h.b16 %v2290
        %v2540 = vunpack.c.l.b16 %v2291
        %v2541 = vunpack.c.h.b16 %v2291
        %v2542 = vunpack.c.l.b16 %v2292
        %v2543 = vunpack.c.h.b16 %v2292
        %v2544 = vunpack.c.l.b16 %v2293
        %v2545 = vunpack.c.h.b16 %v2293
        %v2546 = vunpack.c.l.b16 %v2294
        %v2547 = vunpack.c.h.b16 %v2294
        %v2548 = vunpack.c.l.b16 %v2295
        %v2549 = vunpack.c.h.b16 %v2295
        %v2550 = vunpack.c.l.b16 %v2296
        %v2551 = vunpack.c.h.b16 %v2296
        %v2552 = vunpack.c.l.b16 %v2297
        %v2553 = vunpack.c.h.b16 %v2297
        %v2554 = vunpack.c.l.b16 %v2298
        %v2555 = vunpack.c.h.b16 %v2298
        %v2556 = vunpack.c.l.b16 %v2299
        %v2557 = vunpack.c.h.b16 %v2299
        %v2558 = vunpack.c.l.b16 %v2300
        %v2559 = vunpack.c.h.b16 %v2300
        %v2560 = vunpack.c.l.b16 %v2301
        %v2561 = vunpack.c.h.b16 %v2301
        %v2562 = vunpack.c.l.b16 %v2302
        %v2563 = vunpack.c.h.b16 %v2302
        %v2564 = vunpack.c.l.b16 %v2303
        %v2565 = vunpack.c.h.b16 %v2303
        %v2566 = vunpack.c.l.b16 %v2304
        %v2567 = vunpack.c.h.b16 %v2304
        %v2568 = vunpack.c.l.b16 %v2305
        %v2569 = vunpack.c.h.b16 %v2305
        %v2570 = vunpack.c.l.b16 %v2306
        %v2571 = vunpack.c.h.b16 %v2306
        %v2572 = vunpack.c.l.b16 %v2307
        %v2573 = vunpack.c.h.b16 %v2307
        %v2574 = vunpack.c.l.b16 %v2308
        %v2575 = vunpack.c.h.b16 %v2308
        %v2576 = vunpack.c.l.b16 %v2309
        %v2577 = vunpack.c.h.b16 %v2309
        %v2578 = vunpack.c.l.b16 %v2310
        %v2579 = vunpack.c.h.b16 %v2310
        %v2580 = vunpack.c.l.b16 %v2311
        %v2581 = vunpack.c.h.b16 %v2311
        %v2582 = vunpack.c.l.b16 %v2312
        %v2583 = vunpack.c.h.b16 %v2312
        %v2584 = vunpack.c.l.b16 %v2313
        %v2585 = vunpack.c.h.b16 %v2313
        %v2586 = vunpack.c.l.b16 %v2314
        %v2587 = vunpack.c.h.b16 %v2314
        %v2588 = vunpack.c.l.b16 %v2315
        %v2589 = vunpack.c.h.b16 %v2315
        %v2590 = vunpack.c.l.b16 %v2316
        %v2591 = vunpack.c.h.b16 %v2316
        %v2592 = vunpack.c.l.b16 %v2317
        %v2593 = vunpack.c.h.b16 %v2317
        %v2594 = vunpack.c.l.b16 %v2318
        %v2595 = vunpack.c.h.b16 %v2318
        %v2596 = vunpack.c.l.b16 %v2319
        %v2597 = vunpack.c.h.b16 %v2319
        %v2598 = vunpack.c.l.b16 %v2320
        %v2599 = vunpack.c.h.b16 %v2320
        %v2600 = vunpack.c.l.b16 %v2321
        %v2601 = vunpack.c.h.b16 %v2321
        %v2602 = vunpack.c.l.b16 %v2322
        %v2603 = vunpack.c.h.b16 %v2322
        %v2604 = vunpack.c.l.b16 %v2323
        %v2605 = vunpack.c.h.b16 %v2323
        %v2606 = vunpack.c.l.b16 %v2324
        %v2607 = vunpack.c.h.b16 %v2324
        %v2608 = vunpack.c.l.b16 %v2325
        %v2609 = vunpack.c.h.b16 %v2325
        %v2610 = vunpack.c.l.b16 %v2326
        %v2611 = vunpack.c.h.b16 %v2326
        %v2612 = vunpack.c.l.b16 %v2327
        %v2613 = vunpack.c.h.b16 %v2327
        %v2614 = vpack.c.b16 %v2472, %v2470
        %v2615 = vpack.c.b16 %v2473, %v2471
        %v2616 = vpack.c.b16 %v2476, %v2474
        %v2617 = vpack.c.b16 %v2477, %v2475
        %v2618 = vpack.c.b16 %v2480, %v2478
        %v2619 = vpack.c.b16 %v2481, %v2479
        %v2620 = vpack.c.b16 %v2484, %v2482
        %v2621 = vpack.c.b16 %v2485, %v2483
        %v2622 = vpack.c.b16 %v2488, %v2486
        %v2623 = vpack.c.b16 %v2489, %v2487
        %v2624 = vpack.c.b16 %v2492, %v2490
        %v2625 = vpack.c.b16 %v2493, %v2491
        %v2626 = vpack.c.b16 %v2496, %v2494
        %v2627 = vpack.c.b16 %v2497, %v2495
        %v2628 = vpack.c.b16 %v2500, %v2498
        %v2629 = vpack.c.b16 %v2501, %v2499
        %v2630 = vpack.c.b16 %v2504, %v2502
        %v2631 = vpack.c.b16 %v2505, %v2503
        %v2632 = vpack.c.b16 %v2508, %v2506
        %v2633 = vpack.c.b16 %v2509, %v2507
        %v2634 = vpack.c.b16 %v2512, %v2510
        %v2635 = vpack.c.b16 %v2513, %v2511
        %v2636 = vpack.c.b16 %v2516, %v2514
        %v2637 = vpack.c.b16 %v2517, %v2515
        %v2638 = vpack.c.b16 %v2520, %v2518
        %v2639 = vpack.c.b16 %v2521, %v2519
        %v2640 = vpack.c.b16 %v2524, %v2522
        %v2641 = vpack.c.b16 %v2525, %v2523
        %v2642 = vpack.c.b16 %v2528, %v2526
        %v2643 = vpack.c.b16 %v2529, %v2527
        %v2644 = vpack.c.b16 %v2532, %v2530
        %v2645 = vpack.c.b16 %v2533, %v2531
        %v2646 = vpack.c.b16 %v2536, %v2534
        %v2647 = vpack.c.b16 %v2537, %v2535
        %v2648 = vpack.c.b16 %v2540, %v2538
        %v2649 = vpack.c.b16 %v2541, %v2539
        %v2650 = vpack.c.b16 %v2544, %v2542
        %v2651 = vpack.c.b16 %v2545, %v2543
        %v2652 = vpack.c.b16 %v2548, %v2546
        %v2653 = vpack.c.b16 %v2549, %v2547
        %v2654 = vpack.c.b16 %v2552, %v2550
        %v2655 = vpack.c.b16 %v2553, %v2551
        %v2656 = vpack.c.b16 %v2556, %v2554
        %v2657 = vpack.c.b16 %v2557, %v2555
        %v2658 = vpack.c.b16 %v2560, %v2558
        %v2659 = vpack.c.b16 %v2561, %v2559
        %v2660 = vpack.c.b16 %v2564, %v2562
        %v2661 = vpack.c.b16 %v2565, %v2563
        %v2662 = vpack.c.b16 %v2568, %v2566
        %v2663 = vpack.c.b16 %v2569, %v2567
        %v2664 = vpack.c.b16 %v2572, %v2570
        %v2665 = vpack.c.b16 %v2573, %v2571
        %v2666 = vpack.c.b16 %v2576, %v2574
        %v2667 = vpack.c.b16 %v2577, %v2575
        %v2668 = vpack.c.b16 %v2580, %v2578
        %v2669 = vpack.c.b16 %v2581, %v2579
        %v2670 = vpack.c.b16 %v2584, %v2582
        %v2671 = vpack.c.b16 %v2585, %v2583
        %v2672 = vpack.c.b16 %v2588, %v2586
        %v2673 = vpack.c.b16 %v2589, %v2587
        %v2674 = vpack.c.b16 %v2592, %v2590
        %v2675 = vpack.c.b16 %v2593, %v2591
        %v2676 = vpack.c.b16 %v2596, %v2594
        %v2677 = vpack.c.b16 %v2597, %v2595
        %v2678 = vpack.c.b16 %v2600, %v2598
        %v2679 = vpack.c.b16 %v2601, %v2599
        %v2680 = vpack.c.b16 %v2604, %v2602
        %v2681 = vpack.c.b16 %v2605, %v2603
        %v2682 = vpack.c.b16 %v2608, %v2606
        %v2683 = vpack.c.b16 %v2609, %v2607
        %v2684 = vpack.c.b16 %v2612, %v2610
        %v2685 = vpack.c.b16 %v2613, %v2611
        %v2758 = vsel %vm1545, %v2374, 0
        %v2760 = vsel %vm1545, %v2389, 0
        %2762 = vmatpush.bf16.msra.mxu0 %v2628
        %2763 = vmatpush.bf16.msra.mxu0 %v2626
        %2764 = vmatpush.bf16.msra.mxu0 %v2624
        %2765 = vmatpush.bf16.msra.mxu0 %v2622
        %2766 = vmatpush.bf16.msra.mxu0 %v2620
        %2767 = vmatpush.bf16.msra.mxu0 %v2618
        %2768 = vmatpush.bf16.msra.mxu0 %v2616
        %2769 = vmatpush.bf16.msra.mxu0 %v2614
        %2770 = vmatmul.bf16.gmra.mxu0 %v2370
        %v2771 = vpop.f32.mrf.mxu0
        %v2772 = vadd.f32 %v2330, %v2771
        %v2773 = vpop.f32.mrf.mxu0
        %v2774 = vadd.f32 %v2330, %v2773
        %2775 = vmatmul.bf16.gmra.mxu0 %v2385
        %v2776 = vpop.f32.mrf.mxu0
        %v2777 = vadd.f32 %v2330, %v2776
        %v2778 = vpop.f32.mrf.mxu0
        %2779 = vdwg.mxu0
        %2780 = vmatpush.bf16.msra.mxu0 %v2644
        %2781 = vmatpush.bf16.msra.mxu0 %v2642
        %2782 = vmatpush.bf16.msra.mxu0 %v2640
        %2783 = vmatpush.bf16.msra.mxu0 %v2638
        %2784 = vmatpush.bf16.msra.mxu0 %v2636
        %2785 = vmatpush.bf16.msra.mxu0 %v2634
        %2786 = vmatpush.bf16.msra.mxu0 %v2632
        %2787 = vmatpush.bf16.msra.mxu0 %v2630
        %2788 = vmatmul.bf16.gmra.mxu0 %v2371
        %v2789 = vpop.f32.mrf.mxu0
        %v2790 = vadd.f32 %v2772, %v2789
        %v2791 = vpop.f32.mrf.mxu0
        %v2792 = vadd.f32 %v2774, %v2791
        %2793 = vmatmul.bf16.gmra.mxu0 %v2386
        %v2794 = vpop.f32.mrf.mxu0
        %v2795 = vadd.f32 %v2777, %v2794
        %v2796 = vpop.f32.mrf.mxu0
        %2797 = vdwg.mxu0
        %2798 = vmatpush.bf16.msra.mxu0 %v2660
        %2799 = vmatpush.bf16.msra.mxu0 %v2658
        %2800 = vmatpush.bf16.msra.mxu0 %v2656
        %2801 = vmatpush.bf16.msra.mxu0 %v2654
        %2802 = vmatpush.bf16.msra.mxu0 %v2652
        %2803 = vmatpush.bf16.msra.mxu0 %v2650
        %2804 = vmatpush.bf16.msra.mxu0 %v2648
        %2805 = vmatpush.bf16.msra.mxu0 %v2646
        %2806 = vmatmul.bf16.gmra.mxu0 %v2372
        %v2807 = vpop.f32.mrf.mxu0
        %v2808 = vadd.f32 %v2790, %v2807
        %v2809 = vpop.f32.mrf.mxu0
        %v2810 = vadd.f32 %v2792, %v2809
        %2811 = vmatmul.bf16.gmra.mxu0 %v2387
        %v2812 = vpop.f32.mrf.mxu0
        %v2813 = vadd.f32 %v2795, %v2812
        %v2814 = vpop.f32.mrf.mxu0
        %2815 = vdwg.mxu0
        %2816 = vmatpush.bf16.msra.mxu0 %v2676
        %2817 = vmatpush.bf16.msra.mxu0 %v2674
        %2818 = vmatpush.bf16.msra.mxu0 %v2672
        %2819 = vmatpush.bf16.msra.mxu0 %v2670
        %2820 = vmatpush.bf16.msra.mxu0 %v2668
        %2821 = vmatpush.bf16.msra.mxu0 %v2666
        %2822 = vmatpush.bf16.msra.mxu0 %v2664
        %2823 = vmatpush.bf16.msra.mxu0 %v2662
        %2824 = vmatmul.bf16.gmra.mxu0 %v2373
        %v2825 = vpop.f32.mrf.mxu0
        %v2826 = vadd.f32 %v2808, %v2825
        %v2827 = vpop.f32.mrf.mxu0
        %v2828 = vadd.f32 %v2810, %v2827
        %2829 = vmatmul.bf16.gmra.mxu0 %v2388
        %v2830 = vpop.f32.mrf.mxu0
        %v2831 = vadd.f32 %v2813, %v2830
        %v2832 = vpop.f32.mrf.mxu0
        %2833 = vdwg.mxu0
        %2834 = vmatpush.bf16.msra.mxu0 0
        %2835 = vmatpush.bf16.msra.mxu0 0
        %2836 = vmatpush.bf16.msra.mxu0 0
        %2837 = vmatpush.bf16.msra.mxu0 0
        %2838 = vmatpush.bf16.msra.mxu0 %v2684
        %2839 = vmatpush.bf16.msra.mxu0 %v2682
        %2840 = vmatpush.bf16.msra.mxu0 %v2680
        %2841 = vmatpush.bf16.msra.mxu0 %v2678
        %2842 = vmatmul.bf16.gmra.mxu0 %v2758
        %v2843 = vpop.f32.mrf.mxu0
        %v2844 = vadd.f32 %v2826, %v2843
        %v2845 = vpop.f32.mrf.mxu0
        %v2846 = vadd.f32 %v2828, %v2845
        %2847 = vmatmul.bf16.gmra.mxu0 %v2760
        %v2848 = vpop.f32.mrf.mxu0
        %v2849 = vadd.f32 %v2831, %v2848
        %v2850 = vpop.f32.mrf.mxu0
        %2851 = vdwg.mxu0
        %2852 = vmatpush.bf16.msra.mxu0 %v2629
        %2853 = vmatpush.bf16.msra.mxu0 %v2627
        %2854 = vmatpush.bf16.msra.mxu0 %v2625
        %2855 = vmatpush.bf16.msra.mxu0 %v2623
        %2856 = vmatpush.bf16.msra.mxu0 %v2621
        %2857 = vmatpush.bf16.msra.mxu0 %v2619
        %2858 = vmatpush.bf16.msra.mxu0 %v2617
        %2859 = vmatpush.bf16.msra.mxu0 %v2615
        %2860 = vmatmul.bf16.gmra.mxu0 %v2370
        %v2861 = vpop.f32.mrf.mxu0
        %v2862 = vadd.f32 %v2331, %v2861
        %v2863 = vpop.f32.mrf.mxu0
        %v2864 = vadd.f32 %v2331, %v2863
        %2865 = vmatmul.bf16.gmra.mxu0 %v2385
        %v2866 = vpop.f32.mrf.mxu0
        %v2867 = vadd.f32 %v2331, %v2866
        %v2868 = vpop.f32.mrf.mxu0
        %2869 = vdwg.mxu0
        %2870 = vmatpush.bf16.msra.mxu0 %v2645
        %2871 = vmatpush.bf16.msra.mxu0 %v2643
        %2872 = vmatpush.bf16.msra.mxu0 %v2641
        %2873 = vmatpush.bf16.msra.mxu0 %v2639
        %2874 = vmatpush.bf16.msra.mxu0 %v2637
        %2875 = vmatpush.bf16.msra.mxu0 %v2635
        %2876 = vmatpush.bf16.msra.mxu0 %v2633
        %2877 = vmatpush.bf16.msra.mxu0 %v2631
        %2878 = vmatmul.bf16.gmra.mxu0 %v2371
        %v2879 = vpop.f32.mrf.mxu0
        %v2880 = vadd.f32 %v2862, %v2879
        %v2881 = vpop.f32.mrf.mxu0
        %v2882 = vadd.f32 %v2864, %v2881
        %2883 = vmatmul.bf16.gmra.mxu0 %v2386
        %v2884 = vpop.f32.mrf.mxu0
        %v2885 = vadd.f32 %v2867, %v2884
        %v2886 = vpop.f32.mrf.mxu0
        %2887 = vdwg.mxu0
        %2888 = vmatpush.bf16.msra.mxu0 %v2661
        %2889 = vmatpush.bf16.msra.mxu0 %v2659
        %2890 = vmatpush.bf16.msra.mxu0 %v2657
        %2891 = vmatpush.bf16.msra.mxu0 %v2655
        %2892 = vmatpush.bf16.msra.mxu0 %v2653
        %2893 = vmatpush.bf16.msra.mxu0 %v2651
        %2894 = vmatpush.bf16.msra.mxu0 %v2649
        %2895 = vmatpush.bf16.msra.mxu0 %v2647
        %2896 = vmatmul.bf16.gmra.mxu0 %v2372
        %v2897 = vpop.f32.mrf.mxu0
        %v2898 = vadd.f32 %v2880, %v2897
        %v2899 = vpop.f32.mrf.mxu0
        %v2900 = vadd.f32 %v2882, %v2899
        %2901 = vmatmul.bf16.gmra.mxu0 %v2387
        %v2902 = vpop.f32.mrf.mxu0
        %v2903 = vadd.f32 %v2885, %v2902
        %v2904 = vpop.f32.mrf.mxu0
        %2905 = vdwg.mxu0
        %2906 = vmatpush.bf16.msra.mxu0 %v2677
        %2907 = vmatpush.bf16.msra.mxu0 %v2675
        %2908 = vmatpush.bf16.msra.mxu0 %v2673
        %2909 = vmatpush.bf16.msra.mxu0 %v2671
        %2910 = vmatpush.bf16.msra.mxu0 %v2669
        %2911 = vmatpush.bf16.msra.mxu0 %v2667
        %2912 = vmatpush.bf16.msra.mxu0 %v2665
        %2913 = vmatpush.bf16.msra.mxu0 %v2663
        %2914 = vmatmul.bf16.gmra.mxu0 %v2373
        %v2915 = vpop.f32.mrf.mxu0
        %v2916 = vadd.f32 %v2898, %v2915
        %v2917 = vpop.f32.mrf.mxu0
        %v2918 = vadd.f32 %v2900, %v2917
        %2919 = vmatmul.bf16.gmra.mxu0 %v2388
        %v2920 = vpop.f32.mrf.mxu0
        %v2921 = vadd.f32 %v2903, %v2920
        %v2922 = vpop.f32.mrf.mxu0
        %2923 = vdwg.mxu0
        %2924 = vmatpush.bf16.msra.mxu0 0
        %2925 = vmatpush.bf16.msra.mxu0 0
        %2926 = vmatpush.bf16.msra.mxu0 0
        %2927 = vmatpush.bf16.msra.mxu0 0
        %2928 = vmatpush.bf16.msra.mxu0 %v2685
        %2929 = vmatpush.bf16.msra.mxu0 %v2683
        %2930 = vmatpush.bf16.msra.mxu0 %v2681
        %2931 = vmatpush.bf16.msra.mxu0 %v2679
        %2932 = vmatmul.bf16.gmra.mxu0 %v2758
        %v2933 = vpop.f32.mrf.mxu0
        %v2934 = vadd.f32 %v2916, %v2933
        %v2935 = vpop.f32.mrf.mxu0
        %v2936 = vadd.f32 %v2918, %v2935
        %2937 = vmatmul.bf16.gmra.mxu0 %v2760
        %v2938 = vpop.f32.mrf.mxu0
        %v2939 = vadd.f32 %v2921, %v2938
        %v2940 = vpop.f32.mrf.mxu0
        %2941 = vdwg.mxu0
        %v2942 = vmax.f32 %v2844, 0.0
        %v2943 = vmax.f32 %v2934, 0.0
        %v2944 = vmax.f32 %v2846, 0.0
        %v2945 = vmax.f32 %v2936, 0.0
        %v2946 = vmax.f32 %v2849, 0.0
        %v2947 = vmax.f32 %v2939, 0.0
        %s2948 = scalar_lea.vmem %s4, 1
        %v2949 = vld [vmem:[%s2948] ss:$4 sm:$0x3]
        %v2951 = vperm.slane %v2949, 0
        %v2952 = vperm.slane %v2949, 1
        %v2955 = vmul.f32 %v2942, %v2951
        %v2956 = vmul.f32 %v2943, %v2952
        %v2957 = vmul.f32 %v2944, %v2951
        %v2958 = vmul.f32 %v2945, %v2952
        %v2959 = vmul.f32 %v2946, %v2951
        %v2960 = vmul.f32 %v2947, %v2952
        %s2961 = scalar_lea.vmem %s4, 2
        %v2962 = vld [vmem:[%s2961] ss:$4 sm:$0x3]
        %v2964 = vperm.slane %v2962, 0
        %v2965 = vperm.slane %v2962, 1
        %v2968 = vadd.f32 %v2955, %v2964
        %v2969 = vadd.f32 %v2956, %v2965
        %v2970 = vadd.f32 %v2957, %v2964
        %v2971 = vadd.f32 %v2958, %v2965
        %v2972 = vadd.f32 %v2959, %v2964
        %v2973 = vadd.f32 %v2960, %v2965
        %v2980 = vrot.slane %v2969, 7
        %v2981 = vrot.slane %v2971, 7
        %v2982 = vrot.slane %v2973, 7
        %v2983 = vsel %vm2118, %v2968, %v2980
        %v2984 = vsel %vm1817, %v2968, %v2980
        %v2985 = vrot.slane %v2984, 1
        %v2986 = vsel %vm1819, %v2968, %v2980
        %v2987 = vrot.slane %v2986, 2
        %v2988 = vsel %vm1821, %v2968, %v2980
        %v2989 = vrot.slane %v2988, 3
        %v2990 = vsel %vm2141, %v2968, %v2980
        %v2991 = vrot.slane %v2990, 5
        %vm2992 = vcmask 1046534
        %v2993 = vsel %vm2992, %v2968, %v2980
        %v2994 = vrot.slane %v2993, 6
        %vm2995 = vcmask 1046528
        %v2996 = vsel %vm2995, %v2980, %v2968
        %v2997 = vrot.slane %v2996, 7
        %v2998 = vsel %vm2118, %v2970, %v2981
        %v2999 = vsel %vm1819, %v2970, %v2981
        %v3000 = vrot.slane %v2999, 2
        %v3001 = vsel %vm1821, %v2970, %v2981
        %v3002 = vrot.slane %v3001, 3
        %v3003 = vsel %vm1823, %v2970, %v2981
        %v3004 = vrot.slane %v3003, 4
        %v3005 = vsel %vm2141, %v2970, %v2981
        %v3006 = vrot.slane %v3005, 5
        %v3007 = vsel %vm2995, %v2981, %v2970
        %v3008 = vrot.slane %v3007, 7
        %v3009 = vsel %vm2118, %v2972, %v2982
        %v3010 = vsel %vm1817, %v2972, %v2982
        %v3011 = vrot.slane %v3010, 1
        %v3012 = vsel %vm1819, %v2972, %v2982
        %v3013 = vrot.slane %v3012, 2
        %3014 = vst [vmem:[#allocation1] ss:$9 sm:$0xff] %v2983
        %s3015 = scalar_lea.vmem [#allocation1], 1
        %3016 = vst [vmem:[%s3015] ss:$9 sm:$0xff] %v2985
        %v3017 = vld [vmem:[#allocation1] sm:$0xff]
        %v3018 = vld [vmem:[#allocation1 + $0x9] sm:$0xff]
        %3019 = vst [vmem:[#allocation1] ss:$9 sm:$0xff] %v2987
        %3020 = vst [vmem:[%s3015] ss:$9 sm:$0xff] %v2989
        %v3021 = vld [vmem:[#allocation1] sm:$0xff]
        %v3022 = vld [vmem:[#allocation1 + $0x9] sm:$0xff]
        %3023 = vst [vmem:[#allocation1] ss:$9 sm:$0xff] %v2991
        %3024 = vst [vmem:[%s3015] ss:$9 sm:$0xff] %v2994
        %v3025 = vld [vmem:[#allocation1] sm:$0xff]
        %v3026 = vld [vmem:[#allocation1 + $0x9] sm:$0xff]
        %3027 = vst [vmem:[#allocation1] ss:$9 sm:$0xff] %v2997
        %3028 = vst [vmem:[%s3015] ss:$9 sm:$0xff] %v2998
        %v3029 = vld [vmem:[#allocation1] sm:$0xff]
        %v3030 = vld [vmem:[#allocation1 + $0x9] sm:$0xff]
        %3031 = vst [vmem:[#allocation1] ss:$9 sm:$0xff] %v3000
        %3032 = vst [vmem:[%s3015] ss:$9 sm:$0xff] %v3002
        %v3033 = vld [vmem:[#allocation1] sm:$0xff]
        %v3034 = vld [vmem:[#allocation1 + $0x9] sm:$0xff]
        %3035 = vst [vmem:[#allocation1] ss:$9 sm:$0xff] %v3004
        %3036 = vst [vmem:[%s3015] ss:$9 sm:$0xff] %v3006
        %v3037 = vld [vmem:[#allocation1] sm:$0xff]
        %v3038 = vld [vmem:[#allocation1 + $0x9] sm:$0xff]
        %3039 = vst [vmem:[#allocation1] ss:$9 sm:$0xff] %v3008
        %3040 = vst [vmem:[%s3015] ss:$9 sm:$0xff] %v3009
        %v3041 = vld [vmem:[#allocation1] sm:$0xff]
        %v3042 = vld [vmem:[#allocation1 + $0x9] sm:$0xff]
        %3043 = vst [vmem:[#allocation1] ss:$9 sm:$0xff] %v3011
        %3044 = vst [vmem:[%s3015] ss:$9 sm:$0xff] %v3013
        %v3045 = vld [vmem:[#allocation1] sm:$0xff]
        %v3046 = vld [vmem:[#allocation1 + $0x9] sm:$0xff]
        %v3063 = vsel %vm2121, %v3017, -inf
        %v3064 = vrot.slane %v3063, 4
        %v3065 = vmax.f32 %v3063, %v3064
        %v3066 = vrot.slane %v3065, 2
        %v3067 = vmax.f32 %v3065, %v3066
        %v3068 = vrot.slane %v3067, 1
        %v3069 = vmax.f32 %v3067, %v3068
        %vm3070 = vcmask 222208
        %v3071 = vsel %vm3070, %v3018, -inf
        %v3072 = vrot.slane %v3071, 4
        %v3073 = vmax.f32 %v3071, %v3072
        %v3074 = vrot.slane %v3073, 2
        %v3075 = vmax.f32 %v3073, %v3074
        %v3076 = vrot.slane %v3075, 1
        %v3077 = vmax.f32 %v3075, %v3076
        %v3078 = vsel %vm2121, %v3021, -inf
        %v3079 = vrot.slane %v3078, 4
        %v3080 = vmax.f32 %v3078, %v3079
        %v3081 = vrot.slane %v3080, 2
        %v3082 = vmax.f32 %v3080, %v3081
        %v3083 = vrot.slane %v3082, 1
        %v3084 = vmax.f32 %v3082, %v3083
        %v3085 = vsel %vm3070, %v3022, -inf
        %v3086 = vrot.slane %v3085, 4
        %v3087 = vmax.f32 %v3085, %v3086
        %v3088 = vrot.slane %v3087, 2
        %v3089 = vmax.f32 %v3087, %v3088
        %v3090 = vrot.slane %v3089, 1
        %v3091 = vmax.f32 %v3089, %v3090
        %v3092 = vsel %vm2121, %v3025, -inf
        %v3093 = vrot.slane %v3092, 4
        %v3094 = vmax.f32 %v3092, %v3093
        %v3095 = vrot.slane %v3094, 2
        %v3096 = vmax.f32 %v3094, %v3095
        %v3097 = vrot.slane %v3096, 1
        %v3098 = vmax.f32 %v3096, %v3097
        %v3099 = vsel %vm3070, %v3026, -inf
        %v3100 = vrot.slane %v3099, 4
        %v3101 = vmax.f32 %v3099, %v3100
        %v3102 = vrot.slane %v3101, 2
        %v3103 = vmax.f32 %v3101, %v3102
        %v3104 = vrot.slane %v3103, 1
        %v3105 = vmax.f32 %v3103, %v3104
        %v3106 = vsel %vm2121, %v3029, -inf
        %v3107 = vrot.slane %v3106, 4
        %v3108 = vmax.f32 %v3106, %v3107
        %v3109 = vrot.slane %v3108, 2
        %v3110 = vmax.f32 %v3108, %v3109
        %v3111 = vrot.slane %v3110, 1
        %v3112 = vmax.f32 %v3110, %v3111
        %v3113 = vsel %vm3070, %v3030, -inf
        %v3114 = vrot.slane %v3113, 4
        %v3115 = vmax.f32 %v3113, %v3114
        %v3116 = vrot.slane %v3115, 2
        %v3117 = vmax.f32 %v3115, %v3116
        %v3118 = vrot.slane %v3117, 1
        %v3119 = vmax.f32 %v3117, %v3118
        %v3120 = vsel %vm2121, %v3033, -inf
        %v3121 = vrot.slane %v3120, 4
        %v3122 = vmax.f32 %v3120, %v3121
        %v3123 = vrot.slane %v3122, 2
        %v3124 = vmax.f32 %v3122, %v3123
        %v3125 = vrot.slane %v3124, 1
        %v3126 = vmax.f32 %v3124, %v3125
        %v3127 = vsel %vm3070, %v3034, -inf
        %v3128 = vrot.slane %v3127, 4
        %v3129 = vmax.f32 %v3127, %v3128
        %v3130 = vrot.slane %v3129, 2
        %v3131 = vmax.f32 %v3129, %v3130
        %v3132 = vrot.slane %v3131, 1
        %v3133 = vmax.f32 %v3131, %v3132
        %v3134 = vsel %vm2121, %v3037, -inf
        %v3135 = vrot.slane %v3134, 4
        %v3136 = vmax.f32 %v3134, %v3135
        %v3137 = vrot.slane %v3136, 2
        %v3138 = vmax.f32 %v3136, %v3137
        %v3139 = vrot.slane %v3138, 1
        %v3140 = vmax.f32 %v3138, %v3139
        %v3141 = vsel %vm3070, %v3038, -inf
        %v3142 = vrot.slane %v3141, 4
        %v3143 = vmax.f32 %v3141, %v3142
        %v3144 = vrot.slane %v3143, 2
        %v3145 = vmax.f32 %v3143, %v3144
        %v3146 = vrot.slane %v3145, 1
        %v3147 = vmax.f32 %v3145, %v3146
        %v3148 = vsel %vm2121, %v3041, -inf
        %v3149 = vrot.slane %v3148, 4
        %v3150 = vmax.f32 %v3148, %v3149
        %v3151 = vrot.slane %v3150, 2
        %v3152 = vmax.f32 %v3150, %v3151
        %v3153 = vrot.slane %v3152, 1
        %v3154 = vmax.f32 %v3152, %v3153
        %v3155 = vsel %vm3070, %v3042, -inf
        %v3156 = vrot.slane %v3155, 4
        %v3157 = vmax.f32 %v3155, %v3156
        %v3158 = vrot.slane %v3157, 2
        %v3159 = vmax.f32 %v3157, %v3158
        %v3160 = vrot.slane %v3159, 1
        %v3161 = vmax.f32 %v3159, %v3160
        %v3162 = vsel %vm2121, %v3045, -inf
        %v3163 = vrot.slane %v3162, 4
        %v3164 = vmax.f32 %v3162, %v3163
        %v3165 = vrot.slane %v3164, 2
        %v3166 = vmax.f32 %v3164, %v3165
        %v3167 = vrot.slane %v3166, 1
        %v3168 = vmax.f32 %v3166, %v3167
        %v3169 = vsel %vm3070, %v3046, -inf
        %v3170 = vrot.slane %v3169, 4
        %v3171 = vmax.f32 %v3169, %v3170
        %v3172 = vrot.slane %v3171, 2
        %v3173 = vmax.f32 %v3171, %v3172
        %v3174 = vrot.slane %v3173, 1
        %v3175 = vmax.f32 %v3173, %v3174
        %v3176 = vmax.f32 %v3069, %v3098
        %vm3177 = vcmask 228352
        %v3178 = vsel %vm3177, %v3077, -inf
        %v3179 = vsel %vm3177, %v3105, -inf
        %v3180 = vmax.f32 %v3178, %v3179
        %v3181 = vmax.f32 %v3084, %v3112
        %v3182 = vsel %vm3177, %v3091, -inf
        %v3183 = vsel %vm3177, %v3119, -inf
        %v3184 = vmax.f32 %v3182, %v3183
        %v3185 = vmax.f32 %v3126, %v3154
        %v3186 = vsel %vm3177, %v3133, -inf
        %v3187 = vsel %vm3177, %v3161, -inf
        %v3188 = vmax.f32 %v3186, %v3187
        %v3189 = vmax.f32 %v3140, %v3168
        %v3190 = vsel %vm3177, %v3147, -inf
        %v3191 = vsel %vm3177, %v3175, -inf
        %v3192 = vmax.f32 %v3190, %v3191
        %3195 = vrot.lane.b32.xlu0 %v3181, 28
        %v3196 = vpop.permute.xlu0 %3195
        %3197 = vrot.lane.b32.xlu0 %v3184, 28
        %v3198 = vpop.permute.xlu0 %3197
        %v3199 = vsel %vm3177, %v3196, %v3198
        %3204 = vrot.lane.b32.xlu0 %v3185, 56
        %v3205 = vpop.permute.xlu0 %3204
        %3206 = vrot.lane.b32.xlu0 %v3188, 56
        %v3207 = vpop.permute.xlu0 %3206
        %vm3208 = vcmask 457728
        %v3209 = vsel %vm3208, %v3205, %v3207
        %3214 = vrot.lane.b32.xlu0 %v3189, 84
        %v3215 = vpop.permute.xlu0 %3214
        %3216 = vrot.lane.b32.xlu0 %v3192, 84
        %v3217 = vpop.permute.xlu0 %3216
        %vm3218 = vcmask 687104
        %v3219 = vsel %vm3218, %v3215, %v3217
        %v3222 = vsel %vm3177, %v3180, %v3196
        %v3223 = vsel %vm3208, %v3199, %v3205
        %v3224 = vsel %vm3218, %v3209, %v3215
        %v3225 = vpack.c.bf16 %v3176, %v3176
        %v3226 = vpack.c.bf16 %v3222, %v3222
        %v3227 = vpack.c.bf16 %v3223, %v3223
        %v3228 = vpack.c.bf16 %v3224, %v3224
        %v3229 = vpack.c.bf16 %v3219, %v3219
        %v3230 = vld [vmem:[%s5] sm:$0xf]
        %v3231 = vld [vmem:[%s5 + $0x4] sm:$0xf]
        %v3232 = vld [vmem:[%s5 + $0x8] sm:$0xf]
        %v3233 = vld [vmem:[%s5 + $0xc] sm:$0xf]
        %v3234 = vld [vmem:[%s5 + $0x10] sm:$0xf]
        %v3235 = vld [vmem:[%s5 + $0x14] sm:$0xf]
        %v3236 = vld [vmem:[%s5 + $0x18] sm:$0xf]
        %v3237 = vld [vmem:[%s5 + $0x1c] sm:$0xf]
        %v3238 = vld [vmem:[%s5 + $0x20] sm:$0xf]
        %v3239 = vld [vmem:[%s5 + $0x24] sm:$0xf]
        %v3240 = vld [vmem:[%s5 + $0x28] sm:$0xf]
        %v3241 = vld [vmem:[%s5 + $0x2c] sm:$0xf]
        %v3242 = vld [vmem:[%s5 + $0x30] sm:$0xf]
        %v3243 = vld [vmem:[%s5 + $0x34] sm:$0xf]
        %v3244 = vld [vmem:[%s5 + $0x38] sm:$0xf]
        %v3245 = vld [vmem:[%s5 + $0x3c] sm:$0xf]
        %v3246 = vld [vmem:[%s5 + $0x40] sm:$0xf]
        %v3247 = vld [vmem:[%s5 + $0x44] sm:$0xf]
        %v3248 = vld [vmem:[%s5 + $0x48] sm:$0xf]
        %v3249 = vld [vmem:[%s5 + $0x4c] sm:$0xf]
        %v3250 = vld [vmem:[%s5 + $0x50] sm:$0xf]
        %v3251 = vld [vmem:[%s5 + $0x54] sm:$0xf]
        %v3252 = vld [vmem:[%s5 + $0x58] sm:$0xf]
        %v3253 = vld [vmem:[%s5 + $0x5c] sm:$0xf]
        %v3254 = vld [vmem:[%s5 + $0x60] sm:$0xf]
        %v3255 = vld [vmem:[%s5 + $0x64] sm:$0xf]
        %v3256 = vld [vmem:[%s5 + $0x68] sm:$0xf]
        %v3257 = vld [vmem:[%s5 + $0x6c] sm:$0xf]
        %v3258 = vld [vmem:[%s5 + $0x70] sm:$0xf]
        %v3259 = vld [vmem:[%s5 + $0x74] sm:$0xf]
        %v3260 = vld [vmem:[%s5 + $0x78] sm:$0xf]
        %v3261 = vld [vmem:[%s5 + $0x7c] sm:$0xf]
        %v3262 = vld [vmem:[%s5 + $0x80] sm:$0xf]
        %v3263 = vld [vmem:[%s5 + $0x84] sm:$0xf]
        %v3264 = vld [vmem:[%s5 + $0x88] sm:$0xf]
        %v3265 = vld [vmem:[%s5 + $0x8c] sm:$0xf]
        %v3266 = vld [vmem:[%s5 + $0x90] sm:$0xf]
        %v3267 = vld [vmem:[%s5 + $0x94] sm:$0xf]
        %v3268 = vld [vmem:[%s5 + $0x98] sm:$0xf]
        %v3269 = vld [vmem:[%s5 + $0x9c] sm:$0xf]
        %v3270 = vld [vmem:[%s5 + $0xa0] sm:$0xf]
        %v3271 = vld [vmem:[%s5 + $0xa4] sm:$0xf]
        %v3272 = vld [vmem:[%s5 + $0xa8] sm:$0xf]
        %v3273 = vld [vmem:[%s5 + $0xac] sm:$0xf]
        %v3274 = vld [vmem:[%s5 + $0xb0] sm:$0xf]
        %v3275 = vld [vmem:[%s5 + $0xb4] sm:$0xf]
        %v3276 = vld [vmem:[%s5 + $0xb8] sm:$0xf]
        %v3277 = vld [vmem:[%s5 + $0xbc] sm:$0xf]
        %v3278 = vld [vmem:[%s5 + $0xc0] sm:$0xf]
        %v3279 = vld [vmem:[%s5 + $0xc4] sm:$0xf]
        %v3280 = vld [vmem:[%s5 + $0xc8] sm:$0xf]
        %v3281 = vld [vmem:[%s5 + $0xcc] sm:$0xf]
        %v3282 = vld [vmem:[%s5 + $0xd0] sm:$0xf]
        %v3283 = vld [vmem:[%s5 + $0xd4] sm:$0xf]
        %v3284 = vld [vmem:[%s5 + $0xd8] sm:$0xf]
        %v3285 = vld [vmem:[%s5 + $0xdc] sm:$0xf]
        %v3286 = vld [vmem:[%s5 + $0xe0] sm:$0xf]
        %v3287 = vld [vmem:[%s5 + $0xe4] sm:$0xf]
        %v3288 = vld [vmem:[%s5 + $0xe8] sm:$0xf]
        %v3289 = vld [vmem:[%s5 + $0xec] sm:$0xf]
        %v3290 = vld [vmem:[%s5 + $0xf0] sm:$0xf]
        %v3291 = vld [vmem:[%s5 + $0xf4] sm:$0xf]
        %v3292 = vld [vmem:[%s5 + $0xf8] sm:$0xf]
        %v3293 = vld [vmem:[%s5 + $0xfc] sm:$0xf]
        %v3294 = vld [vmem:[%s5 + $0x100] sm:$0xf]
        %v3295 = vld [vmem:[%s5 + $0x104] sm:$0xf]
        %v3296 = vld [vmem:[%s5 + $0x108] sm:$0xf]
        %v3297 = vld [vmem:[%s5 + $0x10c] sm:$0xf]
        %v3298 = vld [vmem:[%s5 + $0x110] sm:$0xf]
        %v3299 = vld [vmem:[%s5 + $0x114] sm:$0xf]
        %v3300 = vld [vmem:[%s5 + $0x118] sm:$0xf]
        %v3301 = vld [vmem:[%s5 + $0x11c] sm:$0xf]
        %v3302 = vld [vmem:[%s5 + $0x120] sm:$0xf]
        %v3303 = vld [vmem:[%s5 + $0x124] sm:$0xf]
        %v3304 = vld [vmem:[%s5 + $0x128] sm:$0xf]
        %v3305 = vld [vmem:[%s5 + $0x12c] sm:$0xf]
        %v3306 = vld [vmem:[%s5 + $0x130] sm:$0xf]
        %v3307 = vld [vmem:[%s5 + $0x134] sm:$0xf]
        %v3308 = vld [vmem:[%s6] sm:$0x1]
        %v3387 = vunpack.c.l.b16 %v3230
        %v3388 = vunpack.c.l.b16 %v3231
        %v3389 = vunpack.c.l.b16 %v3232
        %v3390 = vunpack.c.l.b16 %v3233
        %v3391 = vunpack.c.l.b16 %v3234
        %v3392 = vunpack.c.l.b16 %v3235
        %v3393 = vunpack.c.l.b16 %v3236
        %v3394 = vunpack.c.l.b16 %v3237
        %v3395 = vunpack.c.l.b16 %v3238
        %v3396 = vunpack.c.l.b16 %v3239
        %v3397 = vunpack.c.l.b16 %v3240
        %v3398 = vunpack.c.l.b16 %v3241
        %v3399 = vunpack.c.l.b16 %v3242
        %v3400 = vunpack.c.l.b16 %v3243
        %v3401 = vunpack.c.l.b16 %v3244
        %v3402 = vunpack.c.l.b16 %v3245
        %v3403 = vunpack.c.l.b16 %v3246
        %v3404 = vunpack.c.l.b16 %v3247
        %v3405 = vunpack.c.l.b16 %v3248
        %v3406 = vunpack.c.l.b16 %v3249
        %v3407 = vunpack.c.l.b16 %v3250
        %v3408 = vunpack.c.l.b16 %v3251
        %v3409 = vunpack.c.l.b16 %v3252
        %v3410 = vunpack.c.l.b16 %v3253
        %v3411 = vunpack.c.l.b16 %v3254
        %v3412 = vunpack.c.l.b16 %v3255
        %v3413 = vunpack.c.l.b16 %v3256
        %v3414 = vunpack.c.l.b16 %v3257
        %v3415 = vunpack.c.l.b16 %v3258
        %v3416 = vunpack.c.l.b16 %v3259
        %v3417 = vunpack.c.l.b16 %v3260
        %v3418 = vunpack.c.l.b16 %v3261
        %v3419 = vunpack.c.l.b16 %v3262
        %v3420 = vunpack.c.l.b16 %v3263
        %v3421 = vunpack.c.l.b16 %v3264
        %v3422 = vunpack.c.l.b16 %v3265
        %v3423 = vunpack.c.l.b16 %v3266
        %v3424 = vunpack.c.l.b16 %v3267
        %v3425 = vunpack.c.l.b16 %v3268
        %v3426 = vunpack.c.l.b16 %v3269
        %v3427 = vunpack.c.l.b16 %v3270
        %v3428 = vunpack.c.l.b16 %v3271
        %v3429 = vunpack.c.l.b16 %v3272
        %v3430 = vunpack.c.l.b16 %v3273
        %v3431 = vunpack.c.l.b16 %v3274
        %v3432 = vunpack.c.l.b16 %v3275
        %v3433 = vunpack.c.l.b16 %v3276
        %v3434 = vunpack.c.l.b16 %v3277
        %v3435 = vunpack.c.l.b16 %v3278
        %v3436 = vunpack.c.l.b16 %v3279
        %v3437 = vunpack.c.l.b16 %v3280
        %v3438 = vunpack.c.l.b16 %v3281
        %v3439 = vunpack.c.l.b16 %v3282
        %v3440 = vunpack.c.l.b16 %v3283
        %v3441 = vunpack.c.l.b16 %v3284
        %v3442 = vunpack.c.l.b16 %v3285
        %v3443 = vunpack.c.l.b16 %v3286
        %v3444 = vunpack.c.l.b16 %v3287
        %v3445 = vunpack.c.l.b16 %v3288
        %v3446 = vunpack.c.l.b16 %v3289
        %v3447 = vunpack.c.l.b16 %v3290
        %v3448 = vunpack.c.l.b16 %v3291
        %v3449 = vunpack.c.l.b16 %v3292
        %v3450 = vunpack.c.l.b16 %v3293
        %v3451 = vunpack.c.l.b16 %v3294
        %v3452 = vunpack.c.l.b16 %v3295
        %v3453 = vunpack.c.l.b16 %v3296
        %v3454 = vunpack.c.l.b16 %v3297
        %v3455 = vunpack.c.l.b16 %v3298
        %v3456 = vunpack.c.l.b16 %v3299
        %v3457 = vunpack.c.l.b16 %v3300
        %v3458 = vunpack.c.l.b16 %v3301
        %v3459 = vunpack.c.l.b16 %v3302
        %v3460 = vunpack.c.l.b16 %v3303
        %v3461 = vunpack.c.l.b16 %v3304
        %v3462 = vunpack.c.l.b16 %v3305
        %v3463 = vunpack.c.l.b16 %v3306
        %v3464 = vunpack.c.l.b16 %v3307
        %v3465 = vpack.c.b16 %v3388, %v3387
        %v3466 = vpack.c.b16 %v3390, %v3389
        %v3467 = vpack.c.b16 %v3392, %v3391
        %v3468 = vpack.c.b16 %v3394, %v3393
        %v3469 = vpack.c.b16 %v3396, %v3395
        %v3470 = vpack.c.b16 %v3398, %v3397
        %v3471 = vpack.c.b16 %v3400, %v3399
        %v3472 = vpack.c.b16 %v3402, %v3401
        %v3473 = vpack.c.b16 %v3404, %v3403
        %v3474 = vpack.c.b16 %v3406, %v3405
        %v3475 = vpack.c.b16 %v3408, %v3407
        %v3476 = vpack.c.b16 %v3410, %v3409
        %v3477 = vpack.c.b16 %v3412, %v3411
        %v3478 = vpack.c.b16 %v3414, %v3413
        %v3479 = vpack.c.b16 %v3416, %v3415
        %v3480 = vpack.c.b16 %v3418, %v3417
        %v3481 = vpack.c.b16 %v3420, %v3419
        %v3482 = vpack.c.b16 %v3422, %v3421
        %v3483 = vpack.c.b16 %v3424, %v3423
        %v3484 = vpack.c.b16 %v3426, %v3425
        %v3485 = vpack.c.b16 %v3428, %v3427
        %v3486 = vpack.c.b16 %v3430, %v3429
        %v3487 = vpack.c.b16 %v3432, %v3431
        %v3488 = vpack.c.b16 %v3434, %v3433
        %v3489 = vpack.c.b16 %v3436, %v3435
        %v3490 = vpack.c.b16 %v3438, %v3437
        %v3491 = vpack.c.b16 %v3440, %v3439
        %v3492 = vpack.c.b16 %v3442, %v3441
        %v3493 = vpack.c.b16 %v3444, %v3443
        %v3494 = vpack.c.b16 %v3446, %v3445
        %v3495 = vpack.c.b16 %v3448, %v3447
        %v3496 = vpack.c.b16 %v3450, %v3449
        %v3497 = vpack.c.b16 %v3452, %v3451
        %v3498 = vpack.c.b16 %v3454, %v3453
        %v3499 = vpack.c.b16 %v3456, %v3455
        %v3500 = vpack.c.b16 %v3458, %v3457
        %v3501 = vpack.c.b16 %v3460, %v3459
        %v3502 = vpack.c.b16 %v3462, %v3461
        %v3503 = vpack.c.b16 %v3464, %v3463
        %vm3543 = vcmask 916480
        %v3545 = vsel %vm3543, %v3229, 0
        %3547 = vmatpush.bf16.msra.mxu0 %v3472
        %3548 = vmatpush.bf16.msra.mxu0 %v3471
        %3549 = vmatpush.bf16.msra.mxu0 %v3470
        %3550 = vmatpush.bf16.msra.mxu0 %v3469
        %3551 = vmatpush.bf16.msra.mxu0 %v3468
        %3552 = vmatpush.bf16.msra.mxu0 %v3467
        %3553 = vmatpush.bf16.msra.mxu0 %v3466
        %3554 = vmatpush.bf16.msra.mxu0 %v3465
        %3555 = vmatmul.bf16.gmra.mxu0 %v3225
        %v3556 = vpop.f32.mrf.mxu0
        %v3557 = vadd.f32 %v3308, %v3556
        %v3558 = vpop.f32.mrf.mxu0
        %3559 = vdwg.mxu0
        %3560 = vmatpush.bf16.msra.mxu0 %v3480
        %3561 = vmatpush.bf16.msra.mxu0 %v3479
        %3562 = vmatpush.bf16.msra.mxu0 %v3478
        %3563 = vmatpush.bf16.msra.mxu0 %v3477
        %3564 = vmatpush.bf16.msra.mxu0 %v3476
        %3565 = vmatpush.bf16.msra.mxu0 %v3475
        %3566 = vmatpush.bf16.msra.mxu0 %v3474
        %3567 = vmatpush.bf16.msra.mxu0 %v3473
        %3568 = vmatmul.bf16.gmra.mxu0 %v3226
        %v3569 = vpop.f32.mrf.mxu0
        %v3570 = vadd.f32 %v3557, %v3569
        %v3571 = vpop.f32.mrf.mxu0
        %3572 = vdwg.mxu0
        %3573 = vmatpush.bf16.msra.mxu0 %v3488
        %3574 = vmatpush.bf16.msra.mxu0 %v3487
        %3575 = vmatpush.bf16.msra.mxu0 %v3486
        %3576 = vmatpush.bf16.msra.mxu0 %v3485
        %3577 = vmatpush.bf16.msra.mxu0 %v3484
        %3578 = vmatpush.bf16.msra.mxu0 %v3483
        %3579 = vmatpush.bf16.msra.mxu0 %v3482
        %3580 = vmatpush.bf16.msra.mxu0 %v3481
        %3581 = vmatmul.bf16.gmra.mxu0 %v3227
        %v3582 = vpop.f32.mrf.mxu0
        %v3583 = vadd.f32 %v3570, %v3582
        %v3584 = vpop.f32.mrf.mxu0
        %3585 = vdwg.mxu0
        %3586 = vmatpush.bf16.msra.mxu0 %v3496
        %3587 = vmatpush.bf16.msra.mxu0 %v3495
        %3588 = vmatpush.bf16.msra.mxu0 %v3494
        %3589 = vmatpush.bf16.msra.mxu0 %v3493
        %3590 = vmatpush.bf16.msra.mxu0 %v3492
        %3591 = vmatpush.bf16.msra.mxu0 %v3491
        %3592 = vmatpush.bf16.msra.mxu0 %v3490
        %3593 = vmatpush.bf16.msra.mxu0 %v3489
        %3594 = vmatmul.bf16.gmra.mxu0 %v3228
        %v3595 = vpop.f32.mrf.mxu0
        %v3596 = vadd.f32 %v3583, %v3595
        %v3597 = vpop.f32.mrf.mxu0
        %3598 = vdwg.mxu0
        %3599 = vmatpush.bf16.msra.mxu0 0
        %3600 = vmatpush.bf16.msra.mxu0 %v3503
        %3601 = vmatpush.bf16.msra.mxu0 %v3502
        %3602 = vmatpush.bf16.msra.mxu0 %v3501
        %3603 = vmatpush.bf16.msra.mxu0 %v3500
        %3604 = vmatpush.bf16.msra.mxu0 %v3499
        %3605 = vmatpush.bf16.msra.mxu0 %v3498
        %3606 = vmatpush.bf16.msra.mxu0 %v3497
        %3607 = vmatmul.bf16.gmra.mxu0 %v3545
        %v3608 = vpop.f32.mrf.mxu0
        %v3609 = vadd.f32 %v3596, %v3608
        %v3610 = vpop.f32.mrf.mxu0
        %3611 = vdwg.mxu0
        %v3612 = vld [vmem:[%s7] sm:$0xff]
        %v3613 = vld [vmem:[%s7 + $0x8] sm:$0xff]
        %v3614 = vld [vmem:[%s8] sm:$0x1]
        %vm3615 = vcmask 130048
        %v3617 = vsel %vm3615, %v3609, 0
        %3619 = vmatpush.msra.mxu0 0.0
        %3620 = vmatpush.msra.mxu0 0.0
        %3621 = vmatpush.msra.mxu0 0.0
        %3622 = vmatpush.msra.mxu0 0.0
        %3623 = vmatpush.msra.mxu0 0.0
        %3624 = vmatpush.msra.mxu0 0.0
        %3625 = vmatpush.msra.mxu0 0.0
        %3626 = vmatpush.msra.mxu0 0.0
        %3627 = vmatpush.msra.mxu0 0.0
        %3628 = vmatpush.msra.mxu0 0.0
        %3629 = vmatpush.msra.mxu0 0.0
        %3630 = vmatpush.msra.mxu0 0.0
        %3631 = vmatpush.msra.mxu0 0.0
        %3632 = vmatpush.msra.mxu0 0.0
        %3633 = vmatpush.msra.mxu0 %v3613
        %3634 = vmatpush.msra.mxu0 %v3612
        %3635 = vmatmul.f32.gmra.mxu0 %v3617
        %v3636 = vpop.f32.mrf.mxu0
        %v3637 = vadd.f32 %v3614, %v3636
        %3638 = vdwg.mxu0
        %vm3639 = vcmask 8192
        %3640 = vst.msk [vmem:[%s355] sm:$0x1] %vm3639, %v3637
        %vm3641 = vcmask 122880
        %3642 = vst.msk [vmem:[%s361] sm:$0x1] %vm3641, %v3609
        %s3643 = sand.u32 %s230, 1
        %s3644 = scalar_lea.sflag [#allocation3], %s3643
        %s3645 = sand.u32 %s230, 1
        %s3646 = scalar_lea.vmem [#allocation2], %s3645
        %s3647 = sand.u32 %s256, 1
        %s3648 = scalar_lea.sflag [#allocation5], %s3647
        %s3649 = sand.u32 %s256, 1
        %s3650 = scalar_lea.vmem [#allocation4], %s3649
        // Predicated region
        $region57: #{cnn_s_forward.1} parent=55 // pred_check
          %p3651 = pneg %p240
        $region58: #{cnn_s_forward.1} parent=55 // pred_check_branch
          %3653 = sbr.rel (%p3651) target = $region60
        $region59: #{cnn_s_forward.1} parent=55 // pred_region
          %3655 = vsyncadd %s3644, 0
          %s3656 = scalar_lea.hbm %s9, %s28
          %s3658 = sshll.u32 %s3646, 4
          %s3659 = int_to_ptr.vmem [resolvable:$true] %s3658
          %s3660 = sshll.u32 %s3656, 4
          %s3661 = int_to_ptr.hbm [resolvable:$true] %s3660
          %3663 = dma.vmem_to_hbm [thread:$0]  %s3659, 16, %s3661, %s3644
        $region60: #{cnn_s_forward.1} parent=55 // pred_fallthru
          _
        // Predicated region
        $region61: #{cnn_s_forward.1} parent=55 // pred_check
          %p3664 = pneg %p266
        $region62: #{cnn_s_forward.1} parent=55 // pred_check_branch
          %3666 = sbr.rel (%p3664) target = $region64
        $region63: #{cnn_s_forward.1} parent=55 // pred_region
          %3668 = vsyncadd %s3648, 0
          %s3669 = scalar_lea.hbm %s10, %s28
          %s3671 = sshll.u32 %s3650, 4
          %s3672 = int_to_ptr.vmem [resolvable:$true] %s3671
          %s3673 = sshll.u32 %s3669, 4
          %s3674 = int_to_ptr.hbm [resolvable:$true] %s3673
          %3676 = dma.vmem_to_hbm [thread:$0]  %s3672, 16, %s3674, %s3648
        $region64: #{cnn_s_forward.1} parent=55 // pred_fallthru
          _
      $region56: #{cnn_s_forward.1} parent=5 // pred_fallthru
        _
      %p3677 = scmp.le.s32.totalorder 2, %s23
      // Predicated region
      $region65: #{cnn_s_forward.1} parent=5 // pred_check
        %p3678 = pneg %p3677
      $region66: #{cnn_s_forward.1} parent=5 // pred_check_branch
        %3680 = sbr.rel (%p3678) target = $region68
      $region67: #{cnn_s_forward.1} parent=5 // pred_region
        %s3681 = ssub.s32 %s23, 2
        // Predicated region
        $region69: #{cnn_s_forward.1} parent=67 // pred_check
          %p3682 = pneg %p246
        $region70: #{cnn_s_forward.1} parent=67 // pred_check_branch
          %3684 = sbr.rel (%p3682) target = $region72
        $region71: #{cnn_s_forward.1} parent=67 // pred_region
          %s3685 = sand.u32 %s231, 1
          %s3686 = scalar_lea.sflag [#allocation3], %s3685
          %s3687 = sand.u32 %s231, 1
          %s3688 = scalar_lea.vmem [#allocation2], %s3687
          %3690 = dma.done %s3686, 16
        $region72: #{cnn_s_forward.1} parent=67 // pred_fallthru
          _
        // Predicated region
        $region73: #{cnn_s_forward.1} parent=67 // pred_check
          %p3691 = pneg %p272
        $region74: #{cnn_s_forward.1} parent=67 // pred_check_branch
          %3693 = sbr.rel (%p3691) target = $region76
        $region75: #{cnn_s_forward.1} parent=67 // pred_region
          %s3694 = sand.u32 %s257, 1
          %s3695 = scalar_lea.sflag [#allocation5], %s3694
          %s3696 = sand.u32 %s257, 1
          %s3697 = scalar_lea.vmem [#allocation4], %s3696
          %3699 = dma.done %s3695, 16
        $region76: #{cnn_s_forward.1} parent=67 // pred_fallthru
          _
      $region68: #{cnn_s_forward.1} parent=5 // pred_fallthru
        _
    $region6: #{cnn_s_forward.1} parent=1 // loop_footer
      %s27 = sadd.s32 1, %s23
    $region7: #{cnn_s_forward.1} parent=1 // loop_footer_branch
      %22 = sbr.rel target = $region3
    $region8: #{cnn_s_forward.1} parent=1 // loop_exit
      _
    %3700 = vsyncpa [#allocation3], 1
    %s3701 = scalar_lea.sflag [#allocation3], 1
    %3702 = vsyncpa %s3701, 1
    %3703 = vsyncpa [#allocation5], 1
    %s3704 = scalar_lea.sflag [#allocation5], 1
    %3705 = vsyncpa %s3704, 1

</llo_original>
